<compile_context>
chip_gen: v7x
topology: tpu7x:2x2x1
jax: 0.10.0
libtpu: 0.0.40
codegen_flags: <defaults>
</compile_context>

<pallas_src>
import jax
import jax.numpy as jnp
from jax.experimental import pallas as pl
from jax.experimental.pallas import tpu as pltpu

_EPS = 1e-5  # PyTorch InstanceNorm2d default eps


# ------------------------------ Pallas kernel ------------------------------ #
def _down_in_kernel(x_ref, w1_ref, w2_ref, g1_ref, b1_ref, g2_ref, b2_ref,
                    o_ref, xpad_ref, ypad_ref):
    """Fused conv3x3 -> InstanceNorm -> ReLU -> conv3x3 -> InstanceNorm -> ReLU
    for one image (grid runs over the batch).

      x_ref    : (1, HP, WP, Cin)   pooled input tile (NHWC)
      w1_ref   : (9, Cin, Cmid)     conv1 weight, one (Cin, Cmid) matrix per tap
      w2_ref   : (9, Cmid, Cout)    conv2 weight
      g*/b*    : (1, C)             InstanceNorm affine params
      o_ref    : (1, Cout, HP*WP)   lane-dense NC(HW) output tile
      xpad_ref : (HP+2, WP+2, Cin)  VMEM scratch: zero-padded conv1 input
      ypad_ref : (HP+2, WP+2, Cmid) VMEM scratch: zero-padded conv2 input
    """
    hp, wp, cin = x_ref.shape[1], x_ref.shape[2], x_ref.shape[3]
    cmid = w1_ref.shape[2]
    cout = w2_ref.shape[2]
    hw = hp * wp

    # ---------------- conv1: 3x3, padding=1, bias=False --------------------
    xpad_ref[...] = jnp.zeros_like(xpad_ref)
    xpad_ref[1:hp + 1, 1:wp + 1, :] = x_ref[0].astype(jnp.float32)

    acc1 = jnp.zeros((hw, cmid), jnp.float32)
    for kh in range(3):
        for kw in range(3):
            tap = xpad_ref[kh:kh + hp, kw:kw + wp, :].reshape(hw, cin)
            acc1 = acc1 + jnp.dot(tap, w1_ref[kh * 3 + kw],
                                  preferred_element_type=jnp.float32)

    # ---------------- InstanceNorm (per channel over H*W) + ReLU -----------
    m1 = jnp.mean(acc1, axis=0, keepdims=True)                     # (1, Cmid)
    v1 = jnp.mean(jnp.square(acc1 - m1), axis=0, keepdims=True)    # biased var
    y1 = (acc1 - m1) * jax.lax.rsqrt(v1 + _EPS)
    y1 = jnp.maximum(y1 * g1_ref[...] + b1_ref[...], 0.0)          # (HW, Cmid)

    # ---------------- conv2: 3x3, padding=1, bias=False --------------------
    ypad_ref[...] = jnp.zeros_like(ypad_ref)
    ypad_ref[1:hp + 1, 1:wp + 1, :] = y1.reshape(hp, wp, cmid)

    acc2 = jnp.zeros((hw, cout), jnp.float32)
    for kh in range(3):
        for kw in range(3):
            tap = ypad_ref[kh:kh + hp, kw:kw + wp, :].reshape(hw, cmid)
            acc2 = acc2 + jnp.dot(tap, w2_ref[kh * 3 + kw],
                                  preferred_element_type=jnp.float32)

    # ---------------- InstanceNorm + ReLU ----------------------------------
    m2 = jnp.mean(acc2, axis=0, keepdims=True)
    v2 = jnp.mean(jnp.square(acc2 - m2), axis=0, keepdims=True)
    y2 = (acc2 - m2) * jax.lax.rsqrt(v2 + _EPS)
    y2 = jnp.maximum(y2 * g2_ref[...] + b2_ref[...], 0.0)          # (HW, Cout)

    # Lane-dense store: spatial axis (HW) on the 128-lane dimension -> NCHW free.
    o_ref[0] = y2.T.astype(o_ref.dtype)


# ------------------------------ forward wrapper ----------------------------- #
@jax.jit
def down_in_forward(x_nchw, w1, gamma1, beta1, w2, gamma2, beta2):
    """Matches DownIN(in_channels, out_channels).forward (mid_channels == out).

    x_nchw : (N, Cin, H, W)
    w1     : (Cmid, Cin, 3, 3)   first Conv2d weight (PyTorch OIHW, bias=False)
    gamma1 : (Cmid,)  beta1 : (Cmid,)
    w2     : (Cout, Cmid, 3, 3)  second Conv2d weight
    gamma2 : (Cout,)  beta2 : (Cout,)
    returns: (N, Cout, H//2, W//2)
    """
    n, c_in, h, w = x_nchw.shape
    c_mid = w1.shape[0]
    c_out = w2.shape[0]
    hp, wp = h // 2, w // 2

    # --- glue: MaxPool2d(2) + NHWC layout (4x data reduction before the kernel)
    # TODO(synk): the 2x2 max-pool could also be folded into the kernel with
    #             strided pl.ds loads; kept as cheap XLA glue for robustness.
    x_nhwc = jnp.transpose(x_nchw, (0, 2, 3, 1))
    pooled = x_nhwc.reshape(n, hp, 2, wp, 2, c_in).max(axis=(2, 4))  # (N,HP,WP,Cin)

    # --- glue: conv weights -> one (Cin, Cout) matrix per 3x3 tap (tiny) ---
    w1_taps = jnp.transpose(w1, (2, 3, 1, 0)).reshape(9, c_in, c_mid)
    w2_taps = jnp.transpose(w2, (2, 3, 1, 0)).reshape(9, c_mid, c_out)

    out_nc_hw = pl.pallas_call(
        _down_in_kernel,
        out_shape=jax.ShapeDtypeStruct((n, c_out, hp * wp), x_nchw.dtype),
        grid_spec=pltpu.PrefetchScalarGridSpec(
            num_scalar_prefetch=0,
            grid=(n,),
            in_specs=[
                pl.BlockSpec((1, hp, wp, c_in), lambda i: (i, 0, 0, 0)),
                pl.BlockSpec((9, c_in, c_mid), lambda i: (0, 0, 0)),
                pl.BlockSpec((9, c_mid, c_out), lambda i: (0, 0, 0)),
                pl.BlockSpec((1, c_mid), lambda i: (0, 0)),
                pl.BlockSpec((1, c_mid), lambda i: (0, 0)),
                pl.BlockSpec((1, c_out), lambda i: (0, 0)),
                pl.BlockSpec((1, c_out), lambda i: (0, 0)),
            ],
            out_specs=pl.BlockSpec((1, c_out, hp * wp), lambda i: (i, 0, 0)),
            scratch_shapes=[
                pltpu.VMEM((hp + 2, wp + 2, c_in), jnp.float32),
                pltpu.VMEM((hp + 2, wp + 2, c_mid), jnp.float32),
            ],
        ),
        compiler_params=pltpu.CompilerParams(
            dimension_semantics=("parallel",),
        ),
    )(pooled, w1_taps, w2_taps,
      gamma1.reshape(1, c_mid), beta1.reshape(1, c_mid),
      gamma2.reshape(1, c_out), beta2.reshape(1, c_out))

    # Free metadata reshape: (N, Cout, HP*WP) -> (N, Cout, HP, WP)  (NCHW).
    return out_nc_hw.reshape(n, c_out, hp, wp)


# --------------------- pure-JAX reference (correctness) --------------------- #
def _instance_norm_ref(y, gamma, beta, eps=_EPS):
    mean = y.mean(axis=(2, 3), keepdims=True)
    var = ((y - mean) ** 2).mean(axis=(2, 3), keepdims=True)   # biased, as PyTorch
    yn = (y - mean) / jnp.sqrt(var + eps)
    return yn * gamma[None, :, None, None] + beta[None, :, None, None]


def down_in_reference(x, w1, g1, b1, w2, g2, b2):
    n, c, h, w = x.shape
    pooled = x.reshape(n, c, h // 2, 2, w // 2, 2).max(axis=(3, 5))
    y = jax.lax.conv_general_dilated(
        pooled, w1, window_strides=(1, 1), padding=[(1, 1), (1, 1)],
        dimension_numbers=("NCHW", "OIHW", "NCHW"))
    y = jax.nn.relu(_instance_norm_ref(y, g1, b1))
    y = jax.lax.conv_general_dilated(
        y, w2, window_strides=(1, 1), padding=[(1, 1), (1, 1)],
        dimension_numbers=("NCHW", "OIHW", "NCHW"))
    y = jax.nn.relu(_instance_norm_ref(y, g2, b2))
    return y


if __name__ == "__main__":
    # DownIN(in_channels=4, out_channels=8)  ->  mid_channels = out_channels = 8
    N, C_IN, C_OUT, H, W = 2, 4, 8, 16, 16
    C_MID = C_OUT

    key = jax.random.PRNGKey(0)
    kx, kw1, kw2, kg1, kb1, kg2, kb2 = jax.random.split(key, 7)
    x = jax.random.normal(kx, (N, C_IN, H, W), jnp.float32)

    bound1 = 1.0 / jnp.sqrt(jnp.float32(C_IN * 9))
    w1 = jax.random.uniform(kw1, (C_MID, C_IN, 3, 3), jnp.float32, -bound1, bound1)
    bound2 = 1.0 / jnp.sqrt(jnp.float32(C_MID * 9))
    w2 = jax.random.uniform(kw2, (C_OUT, C_MID, 3, 3), jnp.float32, -bound2, bound2)

    gamma1 = 1.0 + 0.1 * jax.random.normal(kg1, (C_MID,), jnp.float32)
    beta1 = 0.1 * jax.random.normal(kb1, (C_MID,), jnp.float32)
    gamma2 = 1.0 + 0.1 * jax.random.normal(kg2, (C_OUT,), jnp.float32)
    beta2 = 0.1 * jax.random.normal(kb2, (C_OUT,), jnp.float32)

    out = down_in_forward(x, w1, gamma1, beta1, w2, gamma2, beta2)
    jax.block_until_ready(out)
    assert out.shape == (N, C_OUT, H // 2, W // 2), out.shape

    ref = down_in_reference(x, w1, gamma1, beta1, w2, gamma2, beta2)
    jax.block_until_ready(ref)
    if not jnp.allclose(out, ref, atol=1e-3, rtol=1e-3):
        max_err = jnp.max(jnp.abs(out - ref))
        raise AssertionError(f"Pallas DownIN does not match reference (max err {max_err})")

    print("KERNEL_OK")
</pallas_src>

<mosaic_0001>
module attributes {stable_mosaic.version = 11 : i64} {
  func.func @_down_in_kernel(%arg0: i32, %arg1: memref<1x8x8x4xf32, #tpu.memory_space<vmem>>, %arg2: memref<9x4x8xf32, #tpu.memory_space<vmem>>, %arg3: memref<9x8x8xf32, #tpu.memory_space<vmem>>, %arg4: memref<1x8xf32, #tpu.memory_space<vmem>>, %arg5: memref<1x8xf32, #tpu.memory_space<vmem>>, %arg6: memref<1x8xf32, #tpu.memory_space<vmem>>, %arg7: memref<1x8xf32, #tpu.memory_space<vmem>>, %arg8: memref<1x8x64xf32, #tpu.memory_space<vmem>>, %arg9: memref<10x10x4xf32, #tpu.memory_space<vmem>>, %arg10: memref<10x10x8xf32, #tpu.memory_space<vmem>>) attributes {dimension_semantics = [#tpu.dimension_semantics<parallel>], iteration_bounds = array<i64: 2>, scalar_prefetch = 0 : i64, scratch_operands = 2 : i64, tpu.core_type = #tpu.core_type<tc>, window_params = [{transform_indices = @transform_0, window_bounds = array<i64: 1, 8, 8, 4>}, {pipeline_mode = #tpu.pipeline_mode<synchronous>, transform_indices = @transform_1, window_bounds = array<i64: 9, 4, 8>}, {pipeline_mode = #tpu.pipeline_mode<synchronous>, transform_indices = @transform_2, window_bounds = array<i64: 9, 8, 8>}, {pipeline_mode = #tpu.pipeline_mode<synchronous>, transform_indices = @transform_3, window_bounds = array<i64: 1, 8>}, {pipeline_mode = #tpu.pipeline_mode<synchronous>, transform_indices = @transform_4, window_bounds = array<i64: 1, 8>}, {pipeline_mode = #tpu.pipeline_mode<synchronous>, transform_indices = @transform_5, window_bounds = array<i64: 1, 8>}, {pipeline_mode = #tpu.pipeline_mode<synchronous>, transform_indices = @transform_6, window_bounds = array<i64: 1, 8>}, {transform_indices = @transform_7, window_bounds = array<i64: 1, 8, 64>}]} {
    %cst = arith.constant 0.000000e+00 : f32
    %0 = vector.broadcast %cst : f32 to vector<10x10x4xf32>
    %c0 = arith.constant 0 : index
    %c0_0 = arith.constant 0 : index
    %c0_1 = arith.constant 0 : index
    %1 = vector.load %arg9[%c0, %c0_0, %c0_1] : memref<10x10x4xf32, #tpu.memory_space<vmem>>, vector<10x10x4xf32>
    tpu.vector_store %arg9[%c0, %c0_0, %c0_1], %0 {strides = array<i32>} : memref<10x10x4xf32, #tpu.memory_space<vmem>>, vector<10x10x4xf32>,
    %c0_2 = arith.constant 0 : index
    %c0_3 = arith.constant 0 : index
    %c0_4 = arith.constant 0 : index
    %c0_5 = arith.constant 0 : index
    %2 = vector.load %arg1[%c0_2, %c0_3, %c0_4, %c0_5] : memref<1x8x8x4xf32, #tpu.memory_space<vmem>>, vector<1x8x8x4xf32>
    %3 = vector.shape_cast %2 : vector<1x8x8x4xf32> to vector<8x8x4xf32>
    %c1 = arith.constant 1 : index
    %c1_6 = arith.constant 1 : index
    %c0_7 = arith.constant 0 : index
    %4 = vector.load %arg9[%c1, %c1_6, %c0_7] : memref<10x10x4xf32, #tpu.memory_space<vmem>>, vector<8x8x4xf32>
    tpu.vector_store %arg9[%c1, %c1_6, %c0_7], %3 {strides = array<i32>} : memref<10x10x4xf32, #tpu.memory_space<vmem>>, vector<8x8x4xf32>,
    %cst_8 = arith.constant 0.000000e+00 : f32
    %5 = vector.broadcast %cst_8 : f32 to vector<64x8xf32>
    %c0_9 = arith.constant 0 : index
    %c0_10 = arith.constant 0 : index
    %c0_11 = arith.constant 0 : index
    %6 = vector.load %arg9[%c0_9, %c0_10, %c0_11] : memref<10x10x4xf32, #tpu.memory_space<vmem>>, vector<8x8x4xf32>
    %7 = vector.shape_cast %6 : vector<8x8x4xf32> to vector<64x4xf32>
    %c0_12 = arith.constant 0 : index
    %c0_13 = arith.constant 0 : index
    %c0_14 = arith.constant 0 : index
    %8 = vector.load %arg2[%c0_12, %c0_13, %c0_14] : memref<9x4x8xf32, #tpu.memory_space<vmem>>, vector<1x4x8xf32>
    %9 = vector.shape_cast %8 : vector<1x4x8xf32> to vector<4x8xf32>
    %cst_15 = arith.constant dense<0.000000e+00> : vector<64x8xf32>
    %10 = tpu.matmul %7, %9, %cst_15 {dimension_numbers = #tpu.dot_dimension_numbers<[1], [0], [0], [1], [0, 0, 1, 1], [], []>} : vector<64x4xf32>, vector<4x8xf32>, vector<64x8xf32> -> vector<64x8xf32>
    %11 = arith.addf %5, %10 : vector<64x8xf32>
    %c0_16 = arith.constant 0 : index
    %c1_17 = arith.constant 1 : index
    %c0_18 = arith.constant 0 : index
    %12 = vector.load %arg9[%c0_16, %c1_17, %c0_18] : memref<10x10x4xf32, #tpu.memory_space<vmem>>, vector<8x8x4xf32>
    %13 = vector.shape_cast %12 : vector<8x8x4xf32> to vector<64x4xf32>
    %c1_19 = arith.constant 1 : index
    %c0_20 = arith.constant 0 : index
    %c0_21 = arith.constant 0 : index
    %14 = vector.load %arg2[%c1_19, %c0_20, %c0_21] : memref<9x4x8xf32, #tpu.memory_space<vmem>>, vector<1x4x8xf32>
    %15 = vector.shape_cast %14 : vector<1x4x8xf32> to vector<4x8xf32>
    %cst_22 = arith.constant dense<0.000000e+00> : vector<64x8xf32>
    %16 = tpu.matmul %13, %15, %cst_22 {dimension_numbers = #tpu.dot_dimension_numbers<[1], [0], [0], [1], [0, 0, 1, 1], [], []>} : vector<64x4xf32>, vector<4x8xf32>, vector<64x8xf32> -> vector<64x8xf32>
    %17 = arith.addf %11, %16 : vector<64x8xf32>
    %c0_23 = arith.constant 0 : index
    %c2 = arith.constant 2 : index
    %c0_24 = arith.constant 0 : index
    %18 = vector.load %arg9[%c0_23, %c2, %c0_24] : memref<10x10x4xf32, #tpu.memory_space<vmem>>, vector<8x8x4xf32>
    %19 = vector.shape_cast %18 : vector<8x8x4xf32> to vector<64x4xf32>
    %c2_25 = arith.constant 2 : index
    %c0_26 = arith.constant 0 : index
    %c0_27 = arith.constant 0 : index
    %20 = vector.load %arg2[%c2_25, %c0_26, %c0_27] : memref<9x4x8xf32, #tpu.memory_space<vmem>>, vector<1x4x8xf32>
    %21 = vector.shape_cast %20 : vector<1x4x8xf32> to vector<4x8xf32>
    %cst_28 = arith.constant dense<0.000000e+00> : vector<64x8xf32>
    %22 = tpu.matmul %19, %21, %cst_28 {dimension_numbers = #tpu.dot_dimension_numbers<[1], [0], [0], [1], [0, 0, 1, 1], [], []>} : vector<64x4xf32>, vector<4x8xf32>, vector<64x8xf32> -> vector<64x8xf32>
    %23 = arith.addf %17, %22 : vector<64x8xf32>
    %c1_29 = arith.constant 1 : index
    %c0_30 = arith.constant 0 : index
    %c0_31 = arith.constant 0 : index
    %24 = vector.load %arg9[%c1_29, %c0_30, %c0_31] : memref<10x10x4xf32, #tpu.memory_space<vmem>>, vector<8x8x4xf32>
    %25 = vector.shape_cast %24 : vector<8x8x4xf32> to vector<64x4xf32>
    %c3 = arith.constant 3 : index
    %c0_32 = arith.constant 0 : index
    %c0_33 = arith.constant 0 : index
    %26 = vector.load %arg2[%c3, %c0_32, %c0_33] : memref<9x4x8xf32, #tpu.memory_space<vmem>>, vector<1x4x8xf32>
    %27 = vector.shape_cast %26 : vector<1x4x8xf32> to vector<4x8xf32>
    %cst_34 = arith.constant dense<0.000000e+00> : vector<64x8xf32>
    %28 = tpu.matmul %25, %27, %cst_34 {dimension_numbers = #tpu.dot_dimension_numbers<[1], [0], [0], [1], [0, 0, 1, 1], [], []>} : vector<64x4xf32>, vector<4x8xf32>, vector<64x8xf32> -> vector<64x8xf32>
    %29 = arith.addf %23, %28 : vector<64x8xf32>
    %c1_35 = arith.constant 1 : index
    %c1_36 = arith.constant 1 : index
    %c0_37 = arith.constant 0 : index
    %30 = vector.load %arg9[%c1_35, %c1_36, %c0_37] : memref<10x10x4xf32, #tpu.memory_space<vmem>>, vector<8x8x4xf32>
    %31 = vector.shape_cast %30 : vector<8x8x4xf32> to vector<64x4xf32>
    %c4 = arith.constant 4 : index
    %c0_38 = arith.constant 0 : index
    %c0_39 = arith.constant 0 : index
    %32 = vector.load %arg2[%c4, %c0_38, %c0_39] : memref<9x4x8xf32, #tpu.memory_space<vmem>>, vector<1x4x8xf32>
    %33 = vector.shape_cast %32 : vector<1x4x8xf32> to vector<4x8xf32>
    %cst_40 = arith.constant dense<0.000000e+00> : vector<64x8xf32>
    %34 = tpu.matmul %31, %33, %cst_40 {dimension_numbers = #tpu.dot_dimension_numbers<[1], [0], [0], [1], [0, 0, 1, 1], [], []>} : vector<64x4xf32>, vector<4x8xf32>, vector<64x8xf32> -> vector<64x8xf32>
    %35 = arith.addf %29, %34 : vector<64x8xf32>
    %c1_41 = arith.constant 1 : index
    %c2_42 = arith.constant 2 : index
    %c0_43 = arith.constant 0 : index
    %36 = vector.load %arg9[%c1_41, %c2_42, %c0_43] : memref<10x10x4xf32, #tpu.memory_space<vmem>>, vector<8x8x4xf32>
    %37 = vector.shape_cast %36 : vector<8x8x4xf32> to vector<64x4xf32>
    %c5 = arith.constant 5 : index
    %c0_44 = arith.constant 0 : index
    %c0_45 = arith.constant 0 : index
    %38 = vector.load %arg2[%c5, %c0_44, %c0_45] : memref<9x4x8xf32, #tpu.memory_space<vmem>>, vector<1x4x8xf32>
    %39 = vector.shape_cast %38 : vector<1x4x8xf32> to vector<4x8xf32>
    %cst_46 = arith.constant dense<0.000000e+00> : vector<64x8xf32>
    %40 = tpu.matmul %37, %39, %cst_46 {dimension_numbers = #tpu.dot_dimension_numbers<[1], [0], [0], [1], [0, 0, 1, 1], [], []>} : vector<64x4xf32>, vector<4x8xf32>, vector<64x8xf32> -> vector<64x8xf32>
    %41 = arith.addf %35, %40 : vector<64x8xf32>
    %c2_47 = arith.constant 2 : index
    %c0_48 = arith.constant 0 : index
    %c0_49 = arith.constant 0 : index
    %42 = vector.load %arg9[%c2_47, %c0_48, %c0_49] : memref<10x10x4xf32, #tpu.memory_space<vmem>>, vector<8x8x4xf32>
    %43 = vector.shape_cast %42 : vector<8x8x4xf32> to vector<64x4xf32>
    %c6 = arith.constant 6 : index
    %c0_50 = arith.constant 0 : index
    %c0_51 = arith.constant 0 : index
    %44 = vector.load %arg2[%c6, %c0_50, %c0_51] : memref<9x4x8xf32, #tpu.memory_space<vmem>>, vector<1x4x8xf32>
    %45 = vector.shape_cast %44 : vector<1x4x8xf32> to vector<4x8xf32>
    %cst_52 = arith.constant dense<0.000000e+00> : vector<64x8xf32>
    %46 = tpu.matmul %43, %45, %cst_52 {dimension_numbers = #tpu.dot_dimension_numbers<[1], [0], [0], [1], [0, 0, 1, 1], [], []>} : vector<64x4xf32>, vector<4x8xf32>, vector<64x8xf32> -> vector<64x8xf32>
    %47 = arith.addf %41, %46 : vector<64x8xf32>
    %c2_53 = arith.constant 2 : index
    %c1_54 = arith.constant 1 : index
    %c0_55 = arith.constant 0 : index
    %48 = vector.load %arg9[%c2_53, %c1_54, %c0_55] : memref<10x10x4xf32, #tpu.memory_space<vmem>>, vector<8x8x4xf32>
    %49 = vector.shape_cast %48 : vector<8x8x4xf32> to vector<64x4xf32>
    %c7 = arith.constant 7 : index
    %c0_56 = arith.constant 0 : index
    %c0_57 = arith.constant 0 : index
    %50 = vector.load %arg2[%c7, %c0_56, %c0_57] : memref<9x4x8xf32, #tpu.memory_space<vmem>>, vector<1x4x8xf32>
    %51 = vector.shape_cast %50 : vector<1x4x8xf32> to vector<4x8xf32>
    %cst_58 = arith.constant dense<0.000000e+00> : vector<64x8xf32>
    %52 = tpu.matmul %49, %51, %cst_58 {dimension_numbers = #tpu.dot_dimension_numbers<[1], [0], [0], [1], [0, 0, 1, 1], [], []>} : vector<64x4xf32>, vector<4x8xf32>, vector<64x8xf32> -> vector<64x8xf32>
    %53 = arith.addf %47, %52 : vector<64x8xf32>
    %c2_59 = arith.constant 2 : index
    %c2_60 = arith.constant 2 : index
    %c0_61 = arith.constant 0 : index
    %54 = vector.load %arg9[%c2_59, %c2_60, %c0_61] : memref<10x10x4xf32, #tpu.memory_space<vmem>>, vector<8x8x4xf32>
    %55 = vector.shape_cast %54 : vector<8x8x4xf32> to vector<64x4xf32>
    %c8 = arith.constant 8 : index
    %c0_62 = arith.constant 0 : index
    %c0_63 = arith.constant 0 : index
    %56 = vector.load %arg2[%c8, %c0_62, %c0_63] : memref<9x4x8xf32, #tpu.memory_space<vmem>>, vector<1x4x8xf32>
    %57 = vector.shape_cast %56 : vector<1x4x8xf32> to vector<4x8xf32>
    %cst_64 = arith.constant dense<0.000000e+00> : vector<64x8xf32>
    %58 = tpu.matmul %55, %57, %cst_64 {dimension_numbers = #tpu.dot_dimension_numbers<[1], [0], [0], [1], [0, 0, 1, 1], [], []>} : vector<64x4xf32>, vector<4x8xf32>, vector<64x8xf32> -> vector<64x8xf32>
    %59 = arith.addf %53, %58 : vector<64x8xf32>
    %cst_65 = arith.constant dense<0.000000e+00> : vector<8xf32>
    %60 = vector.multi_reduction <add>, %59, %cst_65 [0] : vector<64x8xf32> to vector<8xf32>
    %61 = vector.shape_cast %60 : vector<8xf32> to vector<1x8xf32>
    %cst_66 = arith.constant 6.400000e+01 : f32
    %62 = vector.broadcast %cst_66 : f32 to vector<1x8xf32>
    %63 = arith.divf %61, %62 : vector<1x8xf32>
    %64 = vector.broadcast %63 : vector<1x8xf32> to vector<64x8xf32>
    %65 = arith.subf %59, %64 : vector<64x8xf32>
    %66 = arith.mulf %65, %65 : vector<64x8xf32>
    %cst_67 = arith.constant dense<0.000000e+00> : vector<8xf32>
    %67 = vector.multi_reduction <add>, %66, %cst_67 [0] : vector<64x8xf32> to vector<8xf32>
    %68 = vector.shape_cast %67 : vector<8xf32> to vector<1x8xf32>
    %cst_68 = arith.constant 6.400000e+01 : f32
    %69 = vector.broadcast %cst_68 : f32 to vector<1x8xf32>
    %70 = arith.divf %68, %69 : vector<1x8xf32>
    %71 = vector.broadcast %63 : vector<1x8xf32> to vector<64x8xf32>
    %72 = arith.subf %59, %71 : vector<64x8xf32>
    %cst_69 = arith.constant 9.99999974E-6 : f32
    %73 = vector.broadcast %cst_69 : f32 to vector<1x8xf32>
    %74 = arith.addf %70, %73 : vector<1x8xf32>
    %75 = math.rsqrt %74 : vector<1x8xf32>
    %76 = vector.broadcast %75 : vector<1x8xf32> to vector<64x8xf32>
    %77 = arith.mulf %72, %76 : vector<64x8xf32>
    %c0_70 = arith.constant 0 : index
    %c0_71 = arith.constant 0 : index
    %78 = vector.load %arg4[%c0_70, %c0_71] : memref<1x8xf32, #tpu.memory_space<vmem>>, vector<1x8xf32>
    %79 = vector.broadcast %78 : vector<1x8xf32> to vector<64x8xf32>
    %80 = arith.mulf %77, %79 : vector<64x8xf32>
    %c0_72 = arith.constant 0 : index
    %c0_73 = arith.constant 0 : index
    %81 = vector.load %arg5[%c0_72, %c0_73] : memref<1x8xf32, #tpu.memory_space<vmem>>, vector<1x8xf32>
    %82 = vector.broadcast %81 : vector<1x8xf32> to vector<64x8xf32>
    %83 = arith.addf %80, %82 : vector<64x8xf32>
    %cst_74 = arith.constant 0.000000e+00 : f32
    %84 = vector.broadcast %cst_74 : f32 to vector<64x8xf32>
    %85 = arith.maximumf %83, %84 : vector<64x8xf32>
    %cst_75 = arith.constant 0.000000e+00 : f32
    %86 = vector.broadcast %cst_75 : f32 to vector<10x10x8xf32>
    %c0_76 = arith.constant 0 : index
    %c0_77 = arith.constant 0 : index
    %c0_78 = arith.constant 0 : index
    %87 = vector.load %arg10[%c0_76, %c0_77, %c0_78] : memref<10x10x8xf32, #tpu.memory_space<vmem>>, vector<10x10x8xf32>
    tpu.vector_store %arg10[%c0_76, %c0_77, %c0_78], %86 {strides = array<i32>} : memref<10x10x8xf32, #tpu.memory_space<vmem>>, vector<10x10x8xf32>,
    %88 = vector.shape_cast %85 : vector<64x8xf32> to vector<8x8x8xf32>
    %c1_79 = arith.constant 1 : index
    %c1_80 = arith.constant 1 : index
    %c0_81 = arith.constant 0 : index
    %89 = vector.load %arg10[%c1_79, %c1_80, %c0_81] : memref<10x10x8xf32, #tpu.memory_space<vmem>>, vector<8x8x8xf32>
    tpu.vector_store %arg10[%c1_79, %c1_80, %c0_81], %88 {strides = array<i32>} : memref<10x10x8xf32, #tpu.memory_space<vmem>>, vector<8x8x8xf32>,
    %cst_82 = arith.constant 0.000000e+00 : f32
    %90 = vector.broadcast %cst_82 : f32 to vector<64x8xf32>
    %c0_83 = arith.constant 0 : index
    %c0_84 = arith.constant 0 : index
    %c0_85 = arith.constant 0 : index
    %91 = vector.load %arg10[%c0_83, %c0_84, %c0_85] : memref<10x10x8xf32, #tpu.memory_space<vmem>>, vector<8x8x8xf32>
    %92 = vector.shape_cast %91 : vector<8x8x8xf32> to vector<64x8xf32>
    %c0_86 = arith.constant 0 : index
    %c0_87 = arith.constant 0 : index
    %c0_88 = arith.constant 0 : index
    %93 = vector.load %arg3[%c0_86, %c0_87, %c0_88] : memref<9x8x8xf32, #tpu.memory_space<vmem>>, vector<1x8x8xf32>
    %94 = vector.shape_cast %93 : vector<1x8x8xf32> to vector<8x8xf32>
    %cst_89 = arith.constant dense<0.000000e+00> : vector<64x8xf32>
    %95 = tpu.matmul %92, %94, %cst_89 {dimension_numbers = #tpu.dot_dimension_numbers<[1], [0], [0], [1], [0, 0, 1, 1], [], []>} : vector<64x8xf32>, vector<8x8xf32>, vector<64x8xf32> -> vector<64x8xf32>
    %96 = arith.addf %90, %95 : vector<64x8xf32>
    %c0_90 = arith.constant 0 : index
    %c1_91 = arith.constant 1 : index
    %c0_92 = arith.constant 0 : index
    %97 = vector.load %arg10[%c0_90, %c1_91, %c0_92] : memref<10x10x8xf32, #tpu.memory_space<vmem>>, vector<8x8x8xf32>
    %98 = vector.shape_cast %97 : vector<8x8x8xf32> to vector<64x8xf32>
    %c1_93 = arith.constant 1 : index
    %c0_94 = arith.constant 0 : index
    %c0_95 = arith.constant 0 : index
    %99 = vector.load %arg3[%c1_93, %c0_94, %c0_95] : memref<9x8x8xf32, #tpu.memory_space<vmem>>, vector<1x8x8xf32>
    %100 = vector.shape_cast %99 : vector<1x8x8xf32> to vector<8x8xf32>
    %cst_96 = arith.constant dense<0.000000e+00> : vector<64x8xf32>
    %101 = tpu.matmul %98, %100, %cst_96 {dimension_numbers = #tpu.dot_dimension_numbers<[1], [0], [0], [1], [0, 0, 1, 1], [], []>} : vector<64x8xf32>, vector<8x8xf32>, vector<64x8xf32> -> vector<64x8xf32>
    %102 = arith.addf %96, %101 : vector<64x8xf32>
    %c0_97 = arith.constant 0 : index
    %c2_98 = arith.constant 2 : index
    %c0_99 = arith.constant 0 : index
    %103 = vector.load %arg10[%c0_97, %c2_98, %c0_99] : memref<10x10x8xf32, #tpu.memory_space<vmem>>, vector<8x8x8xf32>
    %104 = vector.shape_cast %103 : vector<8x8x8xf32> to vector<64x8xf32>
    %c2_100 = arith.constant 2 : index
    %c0_101 = arith.constant 0 : index
    %c0_102 = arith.constant 0 : index
    %105 = vector.load %arg3[%c2_100, %c0_101, %c0_102] : memref<9x8x8xf32, #tpu.memory_space<vmem>>, vector<1x8x8xf32>
    %106 = vector.shape_cast %105 : vector<1x8x8xf32> to vector<8x8xf32>
    %cst_103 = arith.constant dense<0.000000e+00> : vector<64x8xf32>
    %107 = tpu.matmul %104, %106, %cst_103 {dimension_numbers = #tpu.dot_dimension_numbers<[1], [0], [0], [1], [0, 0, 1, 1], [], []>} : vector<64x8xf32>, vector<8x8xf32>, vector<64x8xf32> -> vector<64x8xf32>
    %108 = arith.addf %102, %107 : vector<64x8xf32>
    %c1_104 = arith.constant 1 : index
    %c0_105 = arith.constant 0 : index
    %c0_106 = arith.constant 0 : index
    %109 = vector.load %arg10[%c1_104, %c0_105, %c0_106] : memref<10x10x8xf32, #tpu.memory_space<vmem>>, vector<8x8x8xf32>
    %110 = vector.shape_cast %109 : vector<8x8x8xf32> to vector<64x8xf32>
    %c3_107 = arith.constant 3 : index
    %c0_108 = arith.constant 0 : index
    %c0_109 = arith.constant 0 : index
    %111 = vector.load %arg3[%c3_107, %c0_108, %c0_109] : memref<9x8x8xf32, #tpu.memory_space<vmem>>, vector<1x8x8xf32>
    %112 = vector.shape_cast %111 : vector<1x8x8xf32> to vector<8x8xf32>
    %cst_110 = arith.constant dense<0.000000e+00> : vector<64x8xf32>
    %113 = tpu.matmul %110, %112, %cst_110 {dimension_numbers = #tpu.dot_dimension_numbers<[1], [0], [0], [1], [0, 0, 1, 1], [], []>} : vector<64x8xf32>, vector<8x8xf32>, vector<64x8xf32> -> vector<64x8xf32>
    %114 = arith.addf %108, %113 : vector<64x8xf32>
    %c1_111 = arith.constant 1 : index
    %c1_112 = arith.constant 1 : index
    %c0_113 = arith.constant 0 : index
    %115 = vector.load %arg10[%c1_111, %c1_112, %c0_113] : memref<10x10x8xf32, #tpu.memory_space<vmem>>, vector<8x8x8xf32>
    %116 = vector.shape_cast %115 : vector<8x8x8xf32> to vector<64x8xf32>
    %c4_114 = arith.constant 4 : index
    %c0_115 = arith.constant 0 : index
    %c0_116 = arith.constant 0 : index
    %117 = vector.load %arg3[%c4_114, %c0_115, %c0_116] : memref<9x8x8xf32, #tpu.memory_space<vmem>>, vector<1x8x8xf32>
    %118 = vector.shape_cast %117 : vector<1x8x8xf32> to vector<8x8xf32>
    %cst_117 = arith.constant dense<0.000000e+00> : vector<64x8xf32>
    %119 = tpu.matmul %116, %118, %cst_117 {dimension_numbers = #tpu.dot_dimension_numbers<[1], [0], [0], [1], [0, 0, 1, 1], [], []>} : vector<64x8xf32>, vector<8x8xf32>, vector<64x8xf32> -> vector<64x8xf32>
    %120 = arith.addf %114, %119 : vector<64x8xf32>
    %c1_118 = arith.constant 1 : index
    %c2_119 = arith.constant 2 : index
    %c0_120 = arith.constant 0 : index
    %121 = vector.load %arg10[%c1_118, %c2_119, %c0_120] : memref<10x10x8xf32, #tpu.memory_space<vmem>>, vector<8x8x8xf32>
    %122 = vector.shape_cast %121 : vector<8x8x8xf32> to vector<64x8xf32>
    %c5_121 = arith.constant 5 : index
    %c0_122 = arith.constant 0 : index
    %c0_123 = arith.constant 0 : index
    %123 = vector.load %arg3[%c5_121, %c0_122, %c0_123] : memref<9x8x8xf32, #tpu.memory_space<vmem>>, vector<1x8x8xf32>
    %124 = vector.shape_cast %123 : vector<1x8x8xf32> to vector<8x8xf32>
    %cst_124 = arith.constant dense<0.000000e+00> : vector<64x8xf32>
    %125 = tpu.matmul %122, %124, %cst_124 {dimension_numbers = #tpu.dot_dimension_numbers<[1], [0], [0], [1], [0, 0, 1, 1], [], []>} : vector<64x8xf32>, vector<8x8xf32>, vector<64x8xf32> -> vector<64x8xf32>
    %126 = arith.addf %120, %125 : vector<64x8xf32>
    %c2_125 = arith.constant 2 : index
    %c0_126 = arith.constant 0 : index
    %c0_127 = arith.constant 0 : index
    %127 = vector.load %arg10[%c2_125, %c0_126, %c0_127] : memref<10x10x8xf32, #tpu.memory_space<vmem>>, vector<8x8x8xf32>
    %128 = vector.shape_cast %127 : vector<8x8x8xf32> to vector<64x8xf32>
    %c6_128 = arith.constant 6 : index
    %c0_129 = arith.constant 0 : index
    %c0_130 = arith.constant 0 : index
    %129 = vector.load %arg3[%c6_128, %c0_129, %c0_130] : memref<9x8x8xf32, #tpu.memory_space<vmem>>, vector<1x8x8xf32>
    %130 = vector.shape_cast %129 : vector<1x8x8xf32> to vector<8x8xf32>
    %cst_131 = arith.constant dense<0.000000e+00> : vector<64x8xf32>
    %131 = tpu.matmul %128, %130, %cst_131 {dimension_numbers = #tpu.dot_dimension_numbers<[1], [0], [0], [1], [0, 0, 1, 1], [], []>} : vector<64x8xf32>, vector<8x8xf32>, vector<64x8xf32> -> vector<64x8xf32>
    %132 = arith.addf %126, %131 : vector<64x8xf32>
    %c2_132 = arith.constant 2 : index
    %c1_133 = arith.constant 1 : index
    %c0_134 = arith.constant 0 : index
    %133 = vector.load %arg10[%c2_132, %c1_133, %c0_134] : memref<10x10x8xf32, #tpu.memory_space<vmem>>, vector<8x8x8xf32>
    %134 = vector.shape_cast %133 : vector<8x8x8xf32> to vector<64x8xf32>
    %c7_135 = arith.constant 7 : index
    %c0_136 = arith.constant 0 : index
    %c0_137 = arith.constant 0 : index
    %135 = vector.load %arg3[%c7_135, %c0_136, %c0_137] : memref<9x8x8xf32, #tpu.memory_space<vmem>>, vector<1x8x8xf32>
    %136 = vector.shape_cast %135 : vector<1x8x8xf32> to vector<8x8xf32>
    %cst_138 = arith.constant dense<0.000000e+00> : vector<64x8xf32>
    %137 = tpu.matmul %134, %136, %cst_138 {dimension_numbers = #tpu.dot_dimension_numbers<[1], [0], [0], [1], [0, 0, 1, 1], [], []>} : vector<64x8xf32>, vector<8x8xf32>, vector<64x8xf32> -> vector<64x8xf32>
    %138 = arith.addf %132, %137 : vector<64x8xf32>
    %c2_139 = arith.constant 2 : index
    %c2_140 = arith.constant 2 : index
    %c0_141 = arith.constant 0 : index
    %139 = vector.load %arg10[%c2_139, %c2_140, %c0_141] : memref<10x10x8xf32, #tpu.memory_space<vmem>>, vector<8x8x8xf32>
    %140 = vector.shape_cast %139 : vector<8x8x8xf32> to vector<64x8xf32>
    %c8_142 = arith.constant 8 : index
    %c0_143 = arith.constant 0 : index
    %c0_144 = arith.constant 0 : index
    %141 = vector.load %arg3[%c8_142, %c0_143, %c0_144] : memref<9x8x8xf32, #tpu.memory_space<vmem>>, vector<1x8x8xf32>
    %142 = vector.shape_cast %141 : vector<1x8x8xf32> to vector<8x8xf32>
    %cst_145 = arith.constant dense<0.000000e+00> : vector<64x8xf32>
    %143 = tpu.matmul %140, %142, %cst_145 {dimension_numbers = #tpu.dot_dimension_numbers<[1], [0], [0], [1], [0, 0, 1, 1], [], []>} : vector<64x8xf32>, vector<8x8xf32>, vector<64x8xf32> -> vector<64x8xf32>
    %144 = arith.addf %138, %143 : vector<64x8xf32>
    %cst_146 = arith.constant dense<0.000000e+00> : vector<8xf32>
    %145 = vector.multi_reduction <add>, %144, %cst_146 [0] : vector<64x8xf32> to vector<8xf32>
    %146 = vector.shape_cast %145 : vector<8xf32> to vector<1x8xf32>
    %cst_147 = arith.constant 6.400000e+01 : f32
    %147 = vector.broadcast %cst_147 : f32 to vector<1x8xf32>
    %148 = arith.divf %146, %147 : vector<1x8xf32>
    %149 = vector.broadcast %148 : vector<1x8xf32> to vector<64x8xf32>
    %150 = arith.subf %144, %149 : vector<64x8xf32>
    %151 = arith.mulf %150, %150 : vector<64x8xf32>
    %cst_148 = arith.constant dense<0.000000e+00> : vector<8xf32>
    %152 = vector.multi_reduction <add>, %151, %cst_148 [0] : vector<64x8xf32> to vector<8xf32>
    %153 = vector.shape_cast %152 : vector<8xf32> to vector<1x8xf32>
    %cst_149 = arith.constant 6.400000e+01 : f32
    %154 = vector.broadcast %cst_149 : f32 to vector<1x8xf32>
    %155 = arith.divf %153, %154 : vector<1x8xf32>
    %156 = vector.broadcast %148 : vector<1x8xf32> to vector<64x8xf32>
    %157 = arith.subf %144, %156 : vector<64x8xf32>
    %cst_150 = arith.constant 9.99999974E-6 : f32
    %158 = vector.broadcast %cst_150 : f32 to vector<1x8xf32>
    %159 = arith.addf %155, %158 : vector<1x8xf32>
    %160 = math.rsqrt %159 : vector<1x8xf32>
    %161 = vector.broadcast %160 : vector<1x8xf32> to vector<64x8xf32>
    %162 = arith.mulf %157, %161 : vector<64x8xf32>
    %c0_151 = arith.constant 0 : index
    %c0_152 = arith.constant 0 : index
    %163 = vector.load %arg6[%c0_151, %c0_152] : memref<1x8xf32, #tpu.memory_space<vmem>>, vector<1x8xf32>
    %164 = vector.broadcast %163 : vector<1x8xf32> to vector<64x8xf32>
    %165 = arith.mulf %162, %164 : vector<64x8xf32>
    %c0_153 = arith.constant 0 : index
    %c0_154 = arith.constant 0 : index
    %166 = vector.load %arg7[%c0_153, %c0_154] : memref<1x8xf32, #tpu.memory_space<vmem>>, vector<1x8xf32>
    %167 = vector.broadcast %166 : vector<1x8xf32> to vector<64x8xf32>
    %168 = arith.addf %165, %167 : vector<64x8xf32>
    %cst_155 = arith.constant 0.000000e+00 : f32
    %169 = vector.broadcast %cst_155 : f32 to vector<64x8xf32>
    %170 = arith.maximumf %168, %169 : vector<64x8xf32>
    %171 = tpu.transpose %170, [1, 0] : vector<64x8xf32> -> vector<8x64xf32>
    %c0_156 = arith.constant 0 : index
    %c0_157 = arith.constant 0 : index
    %c0_158 = arith.constant 0 : index
    %172 = vector.load %arg8[%c0_156, %c0_157, %c0_158] : memref<1x8x64xf32, #tpu.memory_space<vmem>>, vector<1x8x64xf32>
    %173 = vector.shape_cast %172 : vector<1x8x64xf32> to vector<8x64xf32>
    %174 = vector.shape_cast %171 : vector<8x64xf32> to vector<1x8x64xf32>
    tpu.vector_store %arg8[%c0_156, %c0_157, %c0_158], %174 {strides = array<i32>} : memref<1x8x64xf32, #tpu.memory_space<vmem>>, vector<1x8x64xf32>,
    return
  }
  func.func @transform_0(%arg0: i32) -> (i32, i32, i32, i32) {
    %c0_i32 = arith.constant 0 : i32
    %c0_i32_0 = arith.constant 0 : i32
    %c0_i32_1 = arith.constant 0 : i32
    %c0_i32_2 = arith.constant 0 : i32
    return %arg0, %c0_i32, %c0_i32_0, %c0_i32_1 : i32, i32, i32, i32
  }
  func.func @transform_1(%arg0: i32) -> (i32, i32, i32) {
    %c0_i32 = arith.constant 0 : i32
    %c0_i32_0 = arith.constant 0 : i32
    %c0_i32_1 = arith.constant 0 : i32
    %c0_i32_2 = arith.constant 0 : i32
    return %c0_i32, %c0_i32_0, %c0_i32_1 : i32, i32, i32
  }
  func.func @transform_2(%arg0: i32) -> (i32, i32, i32) {
    %c0_i32 = arith.constant 0 : i32
    %c0_i32_0 = arith.constant 0 : i32
    %c0_i32_1 = arith.constant 0 : i32
    %c0_i32_2 = arith.constant 0 : i32
    return %c0_i32, %c0_i32_0, %c0_i32_1 : i32, i32, i32
  }
  func.func @transform_3(%arg0: i32) -> (i32, i32) {
    %c0_i32 = arith.constant 0 : i32
    %c0_i32_0 = arith.constant 0 : i32
    %c0_i32_1 = arith.constant 0 : i32
    return %c0_i32, %c0_i32_0 : i32, i32
  }
  func.func @transform_4(%arg0: i32) -> (i32, i32) {
    %c0_i32 = arith.constant 0 : i32
    %c0_i32_0 = arith.constant 0 : i32
    %c0_i32_1 = arith.constant 0 : i32
    return %c0_i32, %c0_i32_0 : i32, i32
  }
  func.func @transform_5(%arg0: i32) -> (i32, i32) {
    %c0_i32 = arith.constant 0 : i32
    %c0_i32_0 = arith.constant 0 : i32
    %c0_i32_1 = arith.constant 0 : i32
    return %c0_i32, %c0_i32_0 : i32, i32
  }
  func.func @transform_6(%arg0: i32) -> (i32, i32) {
    %c0_i32 = arith.constant 0 : i32
    %c0_i32_0 = arith.constant 0 : i32
    %c0_i32_1 = arith.constant 0 : i32
    return %c0_i32, %c0_i32_0 : i32, i32
  }
  func.func @transform_7(%arg0: i32) -> (i32, i32, i32) {
    %c0_i32 = arith.constant 0 : i32
    %c0_i32_0 = arith.constant 0 : i32
    %c0_i32_1 = arith.constant 0 : i32
    return %arg0, %c0_i32, %c0_i32_0 : i32, i32, i32
  }
}

</mosaic_0001>

<llo_original>
// kernel: down_in_forward.1
$region0: #{down_in_forward.1}
  #allocation0 [shape = 'u32[]', space=smem, size = 0x4, offset = 0x4, fixed_abs, tag = 'smem constant byte address 0x4 - core index']
  #allocation1 [shape = 'u32[144,128]{1,0:T(1,128)}', space=vmem, size = 0x12000, scoped, tag = 'internal scratch']
  #allocation2 [shape = 'f32[10,10,4]{2,1,0:T(8,128)}', space=vmem, size = 0x14000, scoped, tag = 'scratch operand']
  #allocation3 [shape = 'f32[10,10,8]{2,1,0:T(8,128)}', space=vmem, size = 0x14000, scoped, tag = 'scratch operand']
  %s0 = inlined_call_operand.vmem [shape: f32[2,8,8,4], index: 0, kind: input, shape index: {}]
  %s1 = inlined_call_operand.vmem [shape: f32[9,4,8], index: 1, kind: input, shape index: {}]
  %s2 = inlined_call_operand.vmem [shape: f32[9,8,8], index: 2, kind: input, shape index: {}]
  %s3 = inlined_call_operand.vmem [shape: f32[1,8], index: 3, kind: input, shape index: {}]
  %s4 = inlined_call_operand.vmem [shape: f32[1,8], index: 4, kind: input, shape index: {}]
  %s5 = inlined_call_operand.vmem [shape: f32[1,8], index: 5, kind: input, shape index: {}]
  %s6 = inlined_call_operand.vmem [shape: f32[1,8], index: 6, kind: input, shape index: {}]
  %s7 = inlined_call_operand.vmem [shape: f32[2,8,64], index: 7, kind: output, shape index: {}]
  %s8 = sld [smem:[#allocation0]]
  $region61: #{down_in_forward.1} parent=0
    _
  %s10 = ssub.s32 1, %s8
  %s11 = scalar_select 0, %s10, %s8
  loop: start=0, step=1, limit=4
  $region2: #{down_in_forward.1} parent=0 // loop_pre_header
    _
  $region3: #{down_in_forward.1} parent=0 // loop_header
    %s13 = sphi 0, %s17
    %p14 = scmp.ge.s32.totalorder %s13, 4
    %s23 = sphi 0, %s25
    %s26 = sphi 0, %s23
    %s27 = sphi 0, %s26
    %s43 = sphi 0, %s27
    %s47 = sphi 0, %s47
    %s49 = sphi 0, %s47
    %s50 = sphi 0, %s49
    %s64 = sphi 0, %s50
    %s68 = sphi 0, %s68
    %s70 = sphi 0, %s68
    %s71 = sphi 0, %s70
    %s85 = sphi 0, %s71
    %s89 = sphi 0, %s89
    %s91 = sphi 0, %s89
    %s92 = sphi 0, %s91
    %s106 = sphi 0, %s92
    %s110 = sphi 0, %s110
    %s112 = sphi 0, %s110
    %s113 = sphi 0, %s112
    %s127 = sphi 0, %s113
    %s131 = sphi 0, %s131
    %s133 = sphi 0, %s131
    %s134 = sphi 0, %s133
    %s148 = sphi 0, %s134
    %s152 = sphi 0, %s152
    %s154 = sphi 0, %s152
    %s155 = sphi 0, %s154
    %s169 = sphi 0, %s155
    %s175 = sphi 0, %s177
    %s178 = sphi 0, %s175
    %s179 = sphi 0, %s178
    %s195 = sphi 0, %s179
  $region4: #{down_in_forward.1} parent=0 // loop_header_branch
    %16 = sbr.rel (%p14) target = $region8
  $region5: #{down_in_forward.1} parent=0 // loop_body
    %s18 = ssub.s32 %s13, 1
    %s19 = ssub.s32 %s13, 2
    %s20 = sadd.s32 %s13, 1
    %s21 = ssub.s32 %s13, %s20
    %p22 = scmp.eq.s32.totalorder %s21, 0
    %s24 = sadd.s32 %s23, 1
    %s25 = scalar_select %p22, %s23, %s24
    %p28 = pneg %p22
    %p29 = scmp.eq.s32.totalorder %s13, 1
    %p30 = por %p28, %p29
    %p31 = scmp.ne.s32.totalorder %s23, %s26
    %p32 = scmp.eq.s32.totalorder %s13, 0
    %p33 = por %p31, %p32
    %p34 = scmp.ne.s32.totalorder %s23, %s26
    %p35 = scmp.eq.s32.totalorder %s18, 1
    %p36 = por %p34, %p35
    %p37 = scmp.ne.s32.totalorder %s26, %s27
    %p38 = scmp.eq.s32.totalorder %s18, 0
    %p39 = por %p37, %p38
    %p40 = scmp.ne.s32.totalorder %s26, %s27
    %p41 = scmp.eq.s32.totalorder %s19, 1
    %p42 = por %p40, %p41
    %p44 = scmp.ne.s32.totalorder %s27, %s43
    %p45 = scmp.eq.s32.totalorder %s19, 0
    %p46 = por %p44, %p45
    %s48 = sadd.s32 %s47, 1
    %p51 = scmp.eq.s32.totalorder %s13, 1
    %p52 = scmp.ne.s32.totalorder %s47, %s49
    %p53 = scmp.eq.s32.totalorder %s13, 0
    %p54 = por %p52, %p53
    %p55 = scmp.ne.s32.totalorder %s47, %s49
    %p56 = scmp.eq.s32.totalorder %s18, 1
    %p57 = por %p55, %p56
    %p58 = scmp.ne.s32.totalorder %s49, %s50
    %p59 = scmp.eq.s32.totalorder %s18, 0
    %p60 = por %p58, %p59
    %p61 = scmp.ne.s32.totalorder %s49, %s50
    %p62 = scmp.eq.s32.totalorder %s19, 1
    %p63 = por %p61, %p62
    %p65 = scmp.ne.s32.totalorder %s50, %s64
    %p66 = scmp.eq.s32.totalorder %s19, 0
    %p67 = por %p65, %p66
    %s69 = sadd.s32 %s68, 1
    %p72 = scmp.eq.s32.totalorder %s13, 1
    %p73 = scmp.ne.s32.totalorder %s68, %s70
    %p74 = scmp.eq.s32.totalorder %s13, 0
    %p75 = por %p73, %p74
    %p76 = scmp.ne.s32.totalorder %s68, %s70
    %p77 = scmp.eq.s32.totalorder %s18, 1
    %p78 = por %p76, %p77
    %p79 = scmp.ne.s32.totalorder %s70, %s71
    %p80 = scmp.eq.s32.totalorder %s18, 0
    %p81 = por %p79, %p80
    %p82 = scmp.ne.s32.totalorder %s70, %s71
    %p83 = scmp.eq.s32.totalorder %s19, 1
    %p84 = por %p82, %p83
    %p86 = scmp.ne.s32.totalorder %s71, %s85
    %p87 = scmp.eq.s32.totalorder %s19, 0
    %p88 = por %p86, %p87
    %s90 = sadd.s32 %s89, 1
    %p93 = scmp.eq.s32.totalorder %s13, 1
    %p94 = scmp.ne.s32.totalorder %s89, %s91
    %p95 = scmp.eq.s32.totalorder %s13, 0
    %p96 = por %p94, %p95
    %p97 = scmp.ne.s32.totalorder %s89, %s91
    %p98 = scmp.eq.s32.totalorder %s18, 1
    %p99 = por %p97, %p98
    %p100 = scmp.ne.s32.totalorder %s91, %s92
    %p101 = scmp.eq.s32.totalorder %s18, 0
    %p102 = por %p100, %p101
    %p103 = scmp.ne.s32.totalorder %s91, %s92
    %p104 = scmp.eq.s32.totalorder %s19, 1
    %p105 = por %p103, %p104
    %p107 = scmp.ne.s32.totalorder %s92, %s106
    %p108 = scmp.eq.s32.totalorder %s19, 0
    %p109 = por %p107, %p108
    %s111 = sadd.s32 %s110, 1
    %p114 = scmp.eq.s32.totalorder %s13, 1
    %p115 = scmp.ne.s32.totalorder %s110, %s112
    %p116 = scmp.eq.s32.totalorder %s13, 0
    %p117 = por %p115, %p116
    %p118 = scmp.ne.s32.totalorder %s110, %s112
    %p119 = scmp.eq.s32.totalorder %s18, 1
    %p120 = por %p118, %p119
    %p121 = scmp.ne.s32.totalorder %s112, %s113
    %p122 = scmp.eq.s32.totalorder %s18, 0
    %p123 = por %p121, %p122
    %p124 = scmp.ne.s32.totalorder %s112, %s113
    %p125 = scmp.eq.s32.totalorder %s19, 1
    %p126 = por %p124, %p125
    %p128 = scmp.ne.s32.totalorder %s113, %s127
    %p129 = scmp.eq.s32.totalorder %s19, 0
    %p130 = por %p128, %p129
    %s132 = sadd.s32 %s131, 1
    %p135 = scmp.eq.s32.totalorder %s13, 1
    %p136 = scmp.ne.s32.totalorder %s131, %s133
    %p137 = scmp.eq.s32.totalorder %s13, 0
    %p138 = por %p136, %p137
    %p139 = scmp.ne.s32.totalorder %s131, %s133
    %p140 = scmp.eq.s32.totalorder %s18, 1
    %p141 = por %p139, %p140
    %p142 = scmp.ne.s32.totalorder %s133, %s134
    %p143 = scmp.eq.s32.totalorder %s18, 0
    %p144 = por %p142, %p143
    %p145 = scmp.ne.s32.totalorder %s133, %s134
    %p146 = scmp.eq.s32.totalorder %s19, 1
    %p147 = por %p145, %p146
    %p149 = scmp.ne.s32.totalorder %s134, %s148
    %p150 = scmp.eq.s32.totalorder %s19, 0
    %p151 = por %p149, %p150
    %s153 = sadd.s32 %s152, 1
    %p156 = scmp.eq.s32.totalorder %s13, 1
    %p157 = scmp.ne.s32.totalorder %s152, %s154
    %p158 = scmp.eq.s32.totalorder %s13, 0
    %p159 = por %p157, %p158
    %p160 = scmp.ne.s32.totalorder %s152, %s154
    %p161 = scmp.eq.s32.totalorder %s18, 1
    %p162 = por %p160, %p161
    %p163 = scmp.ne.s32.totalorder %s154, %s155
    %p164 = scmp.eq.s32.totalorder %s18, 0
    %p165 = por %p163, %p164
    %p166 = scmp.ne.s32.totalorder %s154, %s155
    %p167 = scmp.eq.s32.totalorder %s19, 1
    %p168 = por %p166, %p167
    %p170 = scmp.ne.s32.totalorder %s155, %s169
    %p171 = scmp.eq.s32.totalorder %s19, 0
    %p172 = por %p170, %p171
    %s173 = ssub.s32 %s13, %s20
    %p174 = scmp.eq.s32.totalorder %s173, 0
    %s176 = sadd.s32 %s175, 1
    %s177 = scalar_select %p174, %s175, %s176
    %p180 = pneg %p174
    %p181 = scmp.eq.s32.totalorder %s13, 1
    %p182 = por %p180, %p181
    %p183 = scmp.ne.s32.totalorder %s175, %s178
    %p184 = scmp.eq.s32.totalorder %s13, 0
    %p185 = por %p183, %p184
    %p186 = scmp.ne.s32.totalorder %s175, %s178
    %p187 = scmp.eq.s32.totalorder %s18, 1
    %p188 = por %p186, %p187
    %p189 = scmp.ne.s32.totalorder %s178, %s179
    %p190 = scmp.eq.s32.totalorder %s18, 0
    %p191 = por %p189, %p190
    %p192 = scmp.ne.s32.totalorder %s178, %s179
    %p193 = scmp.eq.s32.totalorder %s19, 1
    %p194 = por %p192, %p193
    %p196 = scmp.ne.s32.totalorder %s179, %s195
    %p197 = scmp.eq.s32.totalorder %s19, 0
    %p198 = por %p196, %p197
    %p199 = scmp.le.s32.totalorder 1, %s13
    %p200 = scmp.lt.s32.totalorder %s13, 3
    %p201 = pnand %p199, %p200
    %p202 = pneg %p201
    // Predicated region
    $region9: #{down_in_forward.1} parent=5 // pred_check
      _
    $region10: #{down_in_forward.1} parent=5 // pred_check_branch
      %204 = sbr.rel (%p201) target = $region12
    $region11: #{down_in_forward.1} parent=5 // pred_region
      %s205 = ssub.s32 %s13, 1
      // Predicated region
      $region13: #{down_in_forward.1} parent=11 // pred_check
        %p206 = pneg %p60
      $region14: #{down_in_forward.1} parent=11 // pred_check_branch
        %208 = sbr.rel (%p206) target = $region16
      $region15: #{down_in_forward.1} parent=11 // pred_region
        _
      $region16: #{down_in_forward.1} parent=11 // pred_fallthru
        _
      // Predicated region
      $region17: #{down_in_forward.1} parent=11 // pred_check
        %p209 = pneg %p81
      $region18: #{down_in_forward.1} parent=11 // pred_check_branch
        %211 = sbr.rel (%p209) target = $region20
      $region19: #{down_in_forward.1} parent=11 // pred_region
        _
      $region20: #{down_in_forward.1} parent=11 // pred_fallthru
        _
      // Predicated region
      $region21: #{down_in_forward.1} parent=11 // pred_check
        %p212 = pneg %p102
      $region22: #{down_in_forward.1} parent=11 // pred_check_branch
        %214 = sbr.rel (%p212) target = $region24
      $region23: #{down_in_forward.1} parent=11 // pred_region
        _
      $region24: #{down_in_forward.1} parent=11 // pred_fallthru
        _
      // Predicated region
      $region25: #{down_in_forward.1} parent=11 // pred_check
        %p215 = pneg %p123
      $region26: #{down_in_forward.1} parent=11 // pred_check_branch
        %217 = sbr.rel (%p215) target = $region28
      $region27: #{down_in_forward.1} parent=11 // pred_region
        _
      $region28: #{down_in_forward.1} parent=11 // pred_fallthru
        _
      // Predicated region
      $region29: #{down_in_forward.1} parent=11 // pred_check
        %p218 = pneg %p144
      $region30: #{down_in_forward.1} parent=11 // pred_check_branch
        %220 = sbr.rel (%p218) target = $region32
      $region31: #{down_in_forward.1} parent=11 // pred_region
        _
      $region32: #{down_in_forward.1} parent=11 // pred_fallthru
        _
      // Predicated region
      $region33: #{down_in_forward.1} parent=11 // pred_check
        %p221 = pneg %p165
      $region34: #{down_in_forward.1} parent=11 // pred_check_branch
        %223 = sbr.rel (%p221) target = $region36
      $region35: #{down_in_forward.1} parent=11 // pred_region
        _
      $region36: #{down_in_forward.1} parent=11 // pred_fallthru
        _
    $region12: #{down_in_forward.1} parent=5 // pred_fallthru
      _
    %p224 = scmp.lt.s32.totalorder %s13, 2
    // Predicated region
    $region37: #{down_in_forward.1} parent=5 // pred_check
      %p225 = pneg %p224
    $region38: #{down_in_forward.1} parent=5 // pred_check_branch
      %227 = sbr.rel (%p225) target = $region40
    $region39: #{down_in_forward.1} parent=5 // pred_region
      // Predicated region
      $region41: #{down_in_forward.1} parent=39 // pred_check
        %p228 = pneg %p33
      $region42: #{down_in_forward.1} parent=39 // pred_check_branch
        %230 = sbr.rel (%p228) target = $region44
      $region43: #{down_in_forward.1} parent=39 // pred_region
        %p231 = scmp.lt.s32.totalorder %s13, 1
        %s232 = scalar_select %p231, %s13, 1
        %s233 = smul.addr %s232, 8
        %s234 = smul.addr %s233, 8
        %s235 = scalar_lea.vmem %s0, %s234
      $region44: #{down_in_forward.1} parent=39 // pred_fallthru
        _
    $region40: #{down_in_forward.1} parent=5 // pred_fallthru
      _
    %p236 = scmp.le.s32.totalorder 1, %s13
    %p237 = scmp.lt.s32.totalorder %s13, 3
    %p238 = pnand %p236, %p237
    %p239 = pneg %p238
    // Predicated region
    $region45: #{down_in_forward.1} parent=5 // pred_check
      _
    $region46: #{down_in_forward.1} parent=5 // pred_check_branch
      %241 = sbr.rel (%p238) target = $region48
    $region47: #{down_in_forward.1} parent=5 // pred_region
      %s242 = ssub.s32 %s13, 1
      %p243 = scmp.lt.s32.totalorder %s18, 1
      %s244 = scalar_select %p243, %s18, 1
      %s245 = smul.addr %s244, 8
      %s246 = smul.addr %s245, 8
      %s247 = scalar_lea.vmem %s0, %s246
      %p248 = pneg %p39
      %p249 = pneg %p36
      %p250 = pneg %p60
      %p251 = pneg %p57
      %p252 = pneg %p81
      %p253 = pneg %p78
      %p254 = pneg %p102
      %p255 = pneg %p99
      %p256 = pneg %p123
      %p257 = pneg %p120
      %p258 = pneg %p144
      %p259 = pneg %p141
      %p260 = pneg %p165
      %p261 = pneg %p162
      %p262 = pneg %p191
      %p263 = pneg %p188
      %p264 = scmp.lt.s32.totalorder %s18, 1
      %s265 = scalar_select %p264, %s18, 1
      %s266 = smul.addr %s265, 8
      %s267 = scalar_lea.vmem %s7, %s266
      %p268 = scmp.lt.s32.totalorder %s18, 1
      %s269 = scalar_select %p268, %s18, 1
      %s270 = smul.addr %s269, 8
      %s271 = smul.addr %s270, 8
      %s272 = scalar_lea.vmem %s0, %s271
      %p273 = scmp.lt.s32.totalorder %s18, 1
      %s274 = scalar_select %p273, %s18, 1
      %s275 = smul.addr %s274, 8
      %s276 = scalar_lea.vmem %s7, %s275
      %vm277 = vcmask 31744
      %278 = vst.msk [vmem:[#allocation2] sm:$0xff] %vm277, 0.0
      %vm279 = vcmask 25600
      %280 = vst.msk [vmem:[#allocation2 + $0x8] sm:$0x3] %vm279, 0.0
      %281 = vst.msk [vmem:[#allocation2 + $0x10] sm:$0xff] %vm277, 0.0
      %282 = vst.msk [vmem:[#allocation2 + $0x18] sm:$0x3] %vm279, 0.0
      %283 = vst.msk [vmem:[#allocation2 + $0x20] sm:$0xff] %vm277, 0.0
      %284 = vst.msk [vmem:[#allocation2 + $0x28] sm:$0x3] %vm279, 0.0
      %285 = vst.msk [vmem:[#allocation2 + $0x30] sm:$0xff] %vm277, 0.0
      %286 = vst.msk [vmem:[#allocation2 + $0x38] sm:$0x3] %vm279, 0.0
      %287 = vst.msk [vmem:[#allocation2 + $0x40] sm:$0xff] %vm277, 0.0
      %288 = vst.msk [vmem:[#allocation2 + $0x48] sm:$0x3] %vm279, 0.0
      %289 = vst.msk [vmem:[#allocation2 + $0x50] sm:$0xff] %vm277, 0.0
      %290 = vst.msk [vmem:[#allocation2 + $0x58] sm:$0x3] %vm279, 0.0
      %291 = vst.msk [vmem:[#allocation2 + $0x60] sm:$0xff] %vm277, 0.0
      %292 = vst.msk [vmem:[#allocation2 + $0x68] sm:$0x3] %vm279, 0.0
      %293 = vst.msk [vmem:[#allocation2 + $0x70] sm:$0xff] %vm277, 0.0
      %294 = vst.msk [vmem:[#allocation2 + $0x78] sm:$0x3] %vm279, 0.0
      %295 = vst.msk [vmem:[#allocation2 + $0x80] sm:$0xff] %vm277, 0.0
      %296 = vst.msk [vmem:[#allocation2 + $0x88] sm:$0x3] %vm279, 0.0
      %297 = vst.msk [vmem:[#allocation2 + $0x90] sm:$0xff] %vm277, 0.0
      %298 = vst.msk [vmem:[#allocation2 + $0x98] sm:$0x3] %vm279, 0.0
      %v299 = vld [vmem:[%s272] sm:$0xff]
      %v300 = vld [vmem:[%s272 + $0x8] sm:$0xff]
      %v301 = vld [vmem:[%s272 + $0x10] sm:$0xff]
      %v302 = vld [vmem:[%s272 + $0x18] sm:$0xff]
      %v303 = vld [vmem:[%s272 + $0x20] sm:$0xff]
      %v304 = vld [vmem:[%s272 + $0x28] sm:$0xff]
      %v305 = vld [vmem:[%s272 + $0x30] sm:$0xff]
      %v306 = vld [vmem:[%s272 + $0x38] sm:$0xff]
      %s307 = scalar_lea.vmem [#allocation2], 16
      %308 = vst.msk [vmem:[%s307 + $0x1] sm:$0xff] %vm277, %v299
      %309 = vst.msk [vmem:[%s307 + $0x11] sm:$0xff] %vm277, %v300
      %310 = vst.msk [vmem:[%s307 + $0x21] sm:$0xff] %vm277, %v301
      %311 = vst.msk [vmem:[%s307 + $0x31] sm:$0xff] %vm277, %v302
      %312 = vst.msk [vmem:[%s307 + $0x41] sm:$0xff] %vm277, %v303
      %313 = vst.msk [vmem:[%s307 + $0x51] sm:$0xff] %vm277, %v304
      %314 = vst.msk [vmem:[%s307 + $0x61] sm:$0xff] %vm277, %v305
      %315 = vst.msk [vmem:[%s307 + $0x71] sm:$0xff] %vm277, %v306
      %v316 = vld [vmem:[#allocation2] sm:$0xff]
      %v317 = vld [vmem:[#allocation2 + $0x10] sm:$0xff]
      %v318 = vld [vmem:[#allocation2 + $0x20] sm:$0xff]
      %v319 = vld [vmem:[#allocation2 + $0x30] sm:$0xff]
      %v320 = vld [vmem:[#allocation2 + $0x40] sm:$0xff]
      %v321 = vld [vmem:[#allocation2 + $0x50] sm:$0xff]
      %v322 = vld [vmem:[#allocation2 + $0x60] sm:$0xff]
      %v323 = vld [vmem:[#allocation2 + $0x70] sm:$0xff]
      %v324 = vld [vmem:[%s1] sm:$0xf]
      %v325 = vld [vmem:[#allocation2 + $0x1] sm:$0xff]
      %v326 = vld [vmem:[#allocation2 + $0x11] sm:$0xff]
      %v327 = vld [vmem:[#allocation2 + $0x21] sm:$0xff]
      %v328 = vld [vmem:[#allocation2 + $0x31] sm:$0xff]
      %v329 = vld [vmem:[#allocation2 + $0x41] sm:$0xff]
      %v330 = vld [vmem:[#allocation2 + $0x51] sm:$0xff]
      %v331 = vld [vmem:[#allocation2 + $0x61] sm:$0xff]
      %v332 = vld [vmem:[#allocation2 + $0x71] sm:$0xff]
      %s333 = scalar_lea.vmem %s1, 4
      %v334 = vld [vmem:[%s333] sm:$0xf]
      %v336 = vsel %vm277, %v325, 0
      %v339 = vsel %vm277, %v326, 0
      %v342 = vsel %vm277, %v327, 0
      %v345 = vsel %vm277, %v328, 0
      %v348 = vsel %vm277, %v329, 0
      %v351 = vsel %vm277, %v330, 0
      %v354 = vsel %vm277, %v331, 0
      %v357 = vsel %vm277, %v332, 0
      %vm359 = vcmask 1043456
      %v361 = vsel %vm359, %v334, 0
      %363 = vmatprep.subr.mxu0 0.0
      %364 = vmatpush1.msra.mxu0 %v361
      %365 = vmatprep.subr.mxu0 0.0
      %366 = vmatpush1.msra.mxu0 0.0
      %367 = vmatprep.subr.mxu0 0.0
      %368 = vmatpush1.msra.mxu0 0.0
      %369 = vmatprep.subr.mxu0 0.0
      %370 = vmatpush1.msra.mxu0 0.0
      %371 = vmatprep.subr.mxu0 0.0
      %372 = vmatpush1.msra.mxu0 0.0
      %373 = vmatprep.subr.mxu0 0.0
      %374 = vmatpush1.msra.mxu0 0.0
      %375 = vmatprep.subr.mxu0 0.0
      %376 = vmatpush1.msra.mxu0 0.0
      %377 = vmatprep.subr.mxu0 0.0
      %378 = vmatpush1.msra.mxu0 0.0
      %379 = vmatprep.subr.mxu0 0.0
      %380 = vmatpush1.msra.mxu0 0.0
      %381 = vmatprep.subr.mxu0 0.0
      %382 = vmatpush1.msra.mxu0 0.0
      %383 = vmatprep.subr.mxu0 0.0
      %384 = vmatpush1.msra.mxu0 0.0
      %385 = vmatprep.subr.mxu0 0.0
      %386 = vmatpush1.msra.mxu0 0.0
      %387 = vmatprep.subr.mxu0 0.0
      %388 = vmatpush1.msra.mxu0 0.0
      %389 = vmatprep.subr.mxu0 0.0
      %390 = vmatpush1.msra.mxu0 0.0
      %391 = vmatprep.subr.mxu0 0.0
      %392 = vmatpush1.msra.mxu0 0.0
      %393 = vmatprep.subr.mxu0 0.0
      %394 = vmatpush1.msra.mxu0 0.0
      %395 = vmatprep.subr.mxu0 0.0
      %396 = vmatpush1.msra.mxu0 0.0
      %397 = vmatprep.subr.mxu0 0.0
      %398 = vmatpush1.msra.mxu0 0.0
      %399 = vmatprep.subr.mxu0 0.0
      %400 = vmatpush1.msra.mxu0 0.0
      %401 = vmatprep.subr.mxu0 0.0
      %402 = vmatpush1.msra.mxu0 0.0
      %403 = vmatprep.subr.mxu0 0.0
      %404 = vmatpush1.msra.mxu0 0.0
      %405 = vmatprep.subr.mxu0 0.0
      %406 = vmatpush1.msra.mxu0 0.0
      %407 = vmatprep.subr.mxu0 0.0
      %408 = vmatpush1.msra.mxu0 0.0
      %409 = vmatprep.subr.mxu0 0.0
      %410 = vmatpush1.msra.mxu0 0.0
      %411 = vmatprep.subr.mxu0 0.0
      %412 = vmatpush1.msra.mxu0 0.0
      %413 = vmatprep.subr.mxu0 0.0
      %414 = vmatpush1.msra.mxu0 0.0
      %415 = vmatprep.subr.mxu0 0.0
      %416 = vmatpush1.msra.mxu0 0.0
      %417 = vmatprep.subr.mxu0 0.0
      %418 = vmatpush1.msra.mxu0 0.0
      %419 = vmatprep.subr.mxu0 0.0
      %420 = vmatpush1.msra.mxu0 0.0
      %421 = vmatprep.subr.mxu0 0.0
      %422 = vmatpush1.msra.mxu0 0.0
      %423 = vmatprep.subr.mxu0 0.0
      %424 = vmatpush1.msra.mxu0 0.0
      %425 = vmatprep.subr.mxu0 0.0
      %426 = vmatpush1.msra.mxu0 0.0
      %427 = vmatprep.mubr.f32.mxu0 0.0
      %428 = vmatmul.mubr.f32.gmra.mrb[0].mxu0 %v336
      %v429 = vpop.f32.mrb[0].mxu0
      %v430 = vadd.f32 0.0, %v429
      %v431 = vpop.f32.mrb[0].mxu0
      %432 = vmatprep.mubr.f32.mxu0 0.0
      %433 = vmatmul.mubr.f32.gmra.mrb[0].mxu0 %v339
      %v434 = vpop.f32.mrb[0].mxu0
      %v435 = vadd.f32 0.0, %v434
      %v436 = vpop.f32.mrb[0].mxu0
      %437 = vmatprep.mubr.f32.mxu0 0.0
      %438 = vmatmul.mubr.f32.gmra.mrb[0].mxu0 %v342
      %v439 = vpop.f32.mrb[0].mxu0
      %v440 = vadd.f32 0.0, %v439
      %v441 = vpop.f32.mrb[0].mxu0
      %442 = vmatprep.mubr.f32.mxu0 0.0
      %443 = vmatmul.mubr.f32.gmra.mrb[0].mxu0 %v345
      %v444 = vpop.f32.mrb[0].mxu0
      %v445 = vadd.f32 0.0, %v444
      %v446 = vpop.f32.mrb[0].mxu0
      %447 = vmatprep.mubr.f32.mxu0 0.0
      %448 = vmatmul.mubr.f32.gmra.mrb[0].mxu0 %v348
      %v449 = vpop.f32.mrb[0].mxu0
      %v450 = vadd.f32 0.0, %v449
      %v451 = vpop.f32.mrb[0].mxu0
      %452 = vmatprep.mubr.f32.mxu0 0.0
      %453 = vmatmul.mubr.f32.gmra.mrb[0].mxu0 %v351
      %v454 = vpop.f32.mrb[0].mxu0
      %v455 = vadd.f32 0.0, %v454
      %v456 = vpop.f32.mrb[0].mxu0
      %457 = vmatprep.mubr.f32.mxu0 0.0
      %458 = vmatmul.mubr.f32.gmra.mrb[0].mxu0 %v354
      %v459 = vpop.f32.mrb[0].mxu0
      %v460 = vadd.f32 0.0, %v459
      %v461 = vpop.f32.mrb[0].mxu0
      %462 = vmatprep.mubr.f32.mxu0 0.0
      %463 = vmatmul.mubr.f32.gmra.mrb[0].mxu0 %v357
      %v464 = vpop.f32.mrb[0].mxu0
      %v465 = vadd.f32 0.0, %v464
      %v466 = vpop.f32.mrb[0].mxu0
      %467 = vdwg.mxu0
      %v469 = vsel %vm277, %v316, 0
      %v472 = vsel %vm277, %v317, 0
      %v475 = vsel %vm277, %v318, 0
      %v478 = vsel %vm277, %v319, 0
      %v481 = vsel %vm277, %v320, 0
      %v484 = vsel %vm277, %v321, 0
      %v487 = vsel %vm277, %v322, 0
      %v490 = vsel %vm277, %v323, 0
      %v493 = vsel %vm359, %v324, 0
      %495 = vmatprep.subr.mxu0 0.0
      %496 = vmatpush1.msra.mxu0 %v493
      %497 = vmatprep.subr.mxu0 0.0
      %498 = vmatpush1.msra.mxu0 0.0
      %499 = vmatprep.subr.mxu0 0.0
      %500 = vmatpush1.msra.mxu0 0.0
      %501 = vmatprep.subr.mxu0 0.0
      %502 = vmatpush1.msra.mxu0 0.0
      %503 = vmatprep.subr.mxu0 0.0
      %504 = vmatpush1.msra.mxu0 0.0
      %505 = vmatprep.subr.mxu0 0.0
      %506 = vmatpush1.msra.mxu0 0.0
      %507 = vmatprep.subr.mxu0 0.0
      %508 = vmatpush1.msra.mxu0 0.0
      %509 = vmatprep.subr.mxu0 0.0
      %510 = vmatpush1.msra.mxu0 0.0
      %511 = vmatprep.subr.mxu0 0.0
      %512 = vmatpush1.msra.mxu0 0.0
      %513 = vmatprep.subr.mxu0 0.0
      %514 = vmatpush1.msra.mxu0 0.0
      %515 = vmatprep.subr.mxu0 0.0
      %516 = vmatpush1.msra.mxu0 0.0
      %517 = vmatprep.subr.mxu0 0.0
      %518 = vmatpush1.msra.mxu0 0.0
      %519 = vmatprep.subr.mxu0 0.0
      %520 = vmatpush1.msra.mxu0 0.0
      %521 = vmatprep.subr.mxu0 0.0
      %522 = vmatpush1.msra.mxu0 0.0
      %523 = vmatprep.subr.mxu0 0.0
      %524 = vmatpush1.msra.mxu0 0.0
      %525 = vmatprep.subr.mxu0 0.0
      %526 = vmatpush1.msra.mxu0 0.0
      %527 = vmatprep.subr.mxu0 0.0
      %528 = vmatpush1.msra.mxu0 0.0
      %529 = vmatprep.subr.mxu0 0.0
      %530 = vmatpush1.msra.mxu0 0.0
      %531 = vmatprep.subr.mxu0 0.0
      %532 = vmatpush1.msra.mxu0 0.0
      %533 = vmatprep.subr.mxu0 0.0
      %534 = vmatpush1.msra.mxu0 0.0
      %535 = vmatprep.subr.mxu0 0.0
      %536 = vmatpush1.msra.mxu0 0.0
      %537 = vmatprep.subr.mxu0 0.0
      %538 = vmatpush1.msra.mxu0 0.0
      %539 = vmatprep.subr.mxu0 0.0
      %540 = vmatpush1.msra.mxu0 0.0
      %541 = vmatprep.subr.mxu0 0.0
      %542 = vmatpush1.msra.mxu0 0.0
      %543 = vmatprep.subr.mxu0 0.0
      %544 = vmatpush1.msra.mxu0 0.0
      %545 = vmatprep.subr.mxu0 0.0
      %546 = vmatpush1.msra.mxu0 0.0
      %547 = vmatprep.subr.mxu0 0.0
      %548 = vmatpush1.msra.mxu0 0.0
      %549 = vmatprep.subr.mxu0 0.0
      %550 = vmatpush1.msra.mxu0 0.0
      %551 = vmatprep.subr.mxu0 0.0
      %552 = vmatpush1.msra.mxu0 0.0
      %553 = vmatprep.subr.mxu0 0.0
      %554 = vmatpush1.msra.mxu0 0.0
      %555 = vmatprep.subr.mxu0 0.0
      %556 = vmatpush1.msra.mxu0 0.0
      %557 = vmatprep.subr.mxu0 0.0
      %558 = vmatpush1.msra.mxu0 0.0
      %559 = vmatprep.mubr.f32.mxu0 0.0
      %560 = vmatmul.mubr.f32.gmra.mrb[0].mxu0 %v469
      %v561 = vpop.f32.mrb[0].mxu0
      %v562 = vadd.f32 %v430, %v561
      %v563 = vpop.f32.mrb[0].mxu0
      %564 = vmatprep.mubr.f32.mxu0 0.0
      %565 = vmatmul.mubr.f32.gmra.mrb[0].mxu0 %v472
      %v566 = vpop.f32.mrb[0].mxu0
      %v567 = vadd.f32 %v435, %v566
      %v568 = vpop.f32.mrb[0].mxu0
      %569 = vmatprep.mubr.f32.mxu0 0.0
      %570 = vmatmul.mubr.f32.gmra.mrb[0].mxu0 %v475
      %v571 = vpop.f32.mrb[0].mxu0
      %v572 = vadd.f32 %v440, %v571
      %v573 = vpop.f32.mrb[0].mxu0
      %574 = vmatprep.mubr.f32.mxu0 0.0
      %575 = vmatmul.mubr.f32.gmra.mrb[0].mxu0 %v478
      %v576 = vpop.f32.mrb[0].mxu0
      %v577 = vadd.f32 %v445, %v576
      %v578 = vpop.f32.mrb[0].mxu0
      %579 = vmatprep.mubr.f32.mxu0 0.0
      %580 = vmatmul.mubr.f32.gmra.mrb[0].mxu0 %v481
      %v581 = vpop.f32.mrb[0].mxu0
      %v582 = vadd.f32 %v450, %v581
      %v583 = vpop.f32.mrb[0].mxu0
      %584 = vmatprep.mubr.f32.mxu0 0.0
      %585 = vmatmul.mubr.f32.gmra.mrb[0].mxu0 %v484
      %v586 = vpop.f32.mrb[0].mxu0
      %v587 = vadd.f32 %v455, %v586
      %v588 = vpop.f32.mrb[0].mxu0
      %589 = vmatprep.mubr.f32.mxu0 0.0
      %590 = vmatmul.mubr.f32.gmra.mrb[0].mxu0 %v487
      %v591 = vpop.f32.mrb[0].mxu0
      %v592 = vadd.f32 %v460, %v591
      %v593 = vpop.f32.mrb[0].mxu0
      %594 = vmatprep.mubr.f32.mxu0 0.0
      %595 = vmatmul.mubr.f32.gmra.mrb[0].mxu0 %v490
      %v596 = vpop.f32.mrb[0].mxu0
      %v597 = vadd.f32 %v465, %v596
      %v598 = vpop.f32.mrb[0].mxu0
      %599 = vdwg.mxu0
      %v600 = vld [vmem:[#allocation2 + $0x2] sm:$0xff]
      %v601 = vld [vmem:[#allocation2 + $0x12] sm:$0xff]
      %v602 = vld [vmem:[#allocation2 + $0x22] sm:$0xff]
      %v603 = vld [vmem:[#allocation2 + $0x32] sm:$0xff]
      %v604 = vld [vmem:[#allocation2 + $0x42] sm:$0xff]
      %v605 = vld [vmem:[#allocation2 + $0x52] sm:$0xff]
      %v606 = vld [vmem:[#allocation2 + $0x62] sm:$0xff]
      %v607 = vld [vmem:[#allocation2 + $0x72] sm:$0xff]
      %s608 = scalar_lea.vmem %s1, 8
      %v609 = vld [vmem:[%s608] sm:$0xf]
      %v611 = vsel %vm277, %v600, 0
      %v614 = vsel %vm277, %v601, 0
      %v617 = vsel %vm277, %v602, 0
      %v620 = vsel %vm277, %v603, 0
      %v623 = vsel %vm277, %v604, 0
      %v626 = vsel %vm277, %v605, 0
      %v629 = vsel %vm277, %v606, 0
      %v632 = vsel %vm277, %v607, 0
      %v635 = vsel %vm359, %v609, 0
      %637 = vmatprep.subr.mxu0 0.0
      %638 = vmatpush1.msra.mxu0 %v635
      %639 = vmatprep.subr.mxu0 0.0
      %640 = vmatpush1.msra.mxu0 0.0
      %641 = vmatprep.subr.mxu0 0.0
      %642 = vmatpush1.msra.mxu0 0.0
      %643 = vmatprep.subr.mxu0 0.0
      %644 = vmatpush1.msra.mxu0 0.0
      %645 = vmatprep.subr.mxu0 0.0
      %646 = vmatpush1.msra.mxu0 0.0
      %647 = vmatprep.subr.mxu0 0.0
      %648 = vmatpush1.msra.mxu0 0.0
      %649 = vmatprep.subr.mxu0 0.0
      %650 = vmatpush1.msra.mxu0 0.0
      %651 = vmatprep.subr.mxu0 0.0
      %652 = vmatpush1.msra.mxu0 0.0
      %653 = vmatprep.subr.mxu0 0.0
      %654 = vmatpush1.msra.mxu0 0.0
      %655 = vmatprep.subr.mxu0 0.0
      %656 = vmatpush1.msra.mxu0 0.0
      %657 = vmatprep.subr.mxu0 0.0
      %658 = vmatpush1.msra.mxu0 0.0
      %659 = vmatprep.subr.mxu0 0.0
      %660 = vmatpush1.msra.mxu0 0.0
      %661 = vmatprep.subr.mxu0 0.0
      %662 = vmatpush1.msra.mxu0 0.0
      %663 = vmatprep.subr.mxu0 0.0
      %664 = vmatpush1.msra.mxu0 0.0
      %665 = vmatprep.subr.mxu0 0.0
      %666 = vmatpush1.msra.mxu0 0.0
      %667 = vmatprep.subr.mxu0 0.0
      %668 = vmatpush1.msra.mxu0 0.0
      %669 = vmatprep.subr.mxu0 0.0
      %670 = vmatpush1.msra.mxu0 0.0
      %671 = vmatprep.subr.mxu0 0.0
      %672 = vmatpush1.msra.mxu0 0.0
      %673 = vmatprep.subr.mxu0 0.0
      %674 = vmatpush1.msra.mxu0 0.0
      %675 = vmatprep.subr.mxu0 0.0
      %676 = vmatpush1.msra.mxu0 0.0
      %677 = vmatprep.subr.mxu0 0.0
      %678 = vmatpush1.msra.mxu0 0.0
      %679 = vmatprep.subr.mxu0 0.0
      %680 = vmatpush1.msra.mxu0 0.0
      %681 = vmatprep.subr.mxu0 0.0
      %682 = vmatpush1.msra.mxu0 0.0
      %683 = vmatprep.subr.mxu0 0.0
      %684 = vmatpush1.msra.mxu0 0.0
      %685 = vmatprep.subr.mxu0 0.0
      %686 = vmatpush1.msra.mxu0 0.0
      %687 = vmatprep.subr.mxu0 0.0
      %688 = vmatpush1.msra.mxu0 0.0
      %689 = vmatprep.subr.mxu0 0.0
      %690 = vmatpush1.msra.mxu0 0.0
      %691 = vmatprep.subr.mxu0 0.0
      %692 = vmatpush1.msra.mxu0 0.0
      %693 = vmatprep.subr.mxu0 0.0
      %694 = vmatpush1.msra.mxu0 0.0
      %695 = vmatprep.subr.mxu0 0.0
      %696 = vmatpush1.msra.mxu0 0.0
      %697 = vmatprep.subr.mxu0 0.0
      %698 = vmatpush1.msra.mxu0 0.0
      %699 = vmatprep.subr.mxu0 0.0
      %700 = vmatpush1.msra.mxu0 0.0
      %701 = vmatprep.mubr.f32.mxu0 0.0
      %702 = vmatmul.mubr.f32.gmra.mrb[0].mxu0 %v611
      %v703 = vpop.f32.mrb[0].mxu0
      %v704 = vadd.f32 0.0, %v703
      %v705 = vpop.f32.mrb[0].mxu0
      %706 = vmatprep.mubr.f32.mxu0 0.0
      %707 = vmatmul.mubr.f32.gmra.mrb[0].mxu0 %v614
      %v708 = vpop.f32.mrb[0].mxu0
      %v709 = vadd.f32 0.0, %v708
      %v710 = vpop.f32.mrb[0].mxu0
      %711 = vmatprep.mubr.f32.mxu0 0.0
      %712 = vmatmul.mubr.f32.gmra.mrb[0].mxu0 %v617
      %v713 = vpop.f32.mrb[0].mxu0
      %v714 = vadd.f32 0.0, %v713
      %v715 = vpop.f32.mrb[0].mxu0
      %716 = vmatprep.mubr.f32.mxu0 0.0
      %717 = vmatmul.mubr.f32.gmra.mrb[0].mxu0 %v620
      %v718 = vpop.f32.mrb[0].mxu0
      %v719 = vadd.f32 0.0, %v718
      %v720 = vpop.f32.mrb[0].mxu0
      %721 = vmatprep.mubr.f32.mxu0 0.0
      %722 = vmatmul.mubr.f32.gmra.mrb[0].mxu0 %v623
      %v723 = vpop.f32.mrb[0].mxu0
      %v724 = vadd.f32 0.0, %v723
      %v725 = vpop.f32.mrb[0].mxu0
      %726 = vmatprep.mubr.f32.mxu0 0.0
      %727 = vmatmul.mubr.f32.gmra.mrb[0].mxu0 %v626
      %v728 = vpop.f32.mrb[0].mxu0
      %v729 = vadd.f32 0.0, %v728
      %v730 = vpop.f32.mrb[0].mxu0
      %731 = vmatprep.mubr.f32.mxu0 0.0
      %732 = vmatmul.mubr.f32.gmra.mrb[0].mxu0 %v629
      %v733 = vpop.f32.mrb[0].mxu0
      %v734 = vadd.f32 0.0, %v733
      %v735 = vpop.f32.mrb[0].mxu0
      %736 = vmatprep.mubr.f32.mxu0 0.0
      %737 = vmatmul.mubr.f32.gmra.mrb[0].mxu0 %v632
      %v738 = vpop.f32.mrb[0].mxu0
      %v739 = vadd.f32 0.0, %v738
      %v740 = vpop.f32.mrb[0].mxu0
      %741 = vdwg.mxu0
      %v742 = vadd.f32 %v562, %v704
      %v743 = vadd.f32 %v567, %v709
      %v744 = vadd.f32 %v572, %v714
      %v745 = vadd.f32 %v577, %v719
      %v746 = vadd.f32 %v582, %v724
      %v747 = vadd.f32 %v587, %v729
      %v748 = vadd.f32 %v592, %v734
      %v749 = vadd.f32 %v597, %v739
      %v750 = vld [vmem:[%s307] sm:$0xff]
      %v751 = vld [vmem:[%s307 + $0x10] sm:$0xff]
      %v752 = vld [vmem:[%s307 + $0x20] sm:$0xff]
      %v753 = vld [vmem:[%s307 + $0x30] sm:$0xff]
      %v754 = vld [vmem:[%s307 + $0x40] sm:$0xff]
      %v755 = vld [vmem:[%s307 + $0x50] sm:$0xff]
      %v756 = vld [vmem:[%s307 + $0x60] sm:$0xff]
      %v757 = vld [vmem:[%s307 + $0x70] sm:$0xff]
      %s758 = scalar_lea.vmem %s1, 12
      %v759 = vld [vmem:[%s758] sm:$0xf]
      %v761 = vsel %vm277, %v750, 0
      %v764 = vsel %vm277, %v751, 0
      %v767 = vsel %vm277, %v752, 0
      %v770 = vsel %vm277, %v753, 0
      %v773 = vsel %vm277, %v754, 0
      %v776 = vsel %vm277, %v755, 0
      %v779 = vsel %vm277, %v756, 0
      %v782 = vsel %vm277, %v757, 0
      %v785 = vsel %vm359, %v759, 0
      %787 = vmatprep.subr.mxu0 0.0
      %788 = vmatpush1.msra.mxu0 %v785
      %789 = vmatprep.subr.mxu0 0.0
      %790 = vmatpush1.msra.mxu0 0.0
      %791 = vmatprep.subr.mxu0 0.0
      %792 = vmatpush1.msra.mxu0 0.0
      %793 = vmatprep.subr.mxu0 0.0
      %794 = vmatpush1.msra.mxu0 0.0
      %795 = vmatprep.subr.mxu0 0.0
      %796 = vmatpush1.msra.mxu0 0.0
      %797 = vmatprep.subr.mxu0 0.0
      %798 = vmatpush1.msra.mxu0 0.0
      %799 = vmatprep.subr.mxu0 0.0
      %800 = vmatpush1.msra.mxu0 0.0
      %801 = vmatprep.subr.mxu0 0.0
      %802 = vmatpush1.msra.mxu0 0.0
      %803 = vmatprep.subr.mxu0 0.0
      %804 = vmatpush1.msra.mxu0 0.0
      %805 = vmatprep.subr.mxu0 0.0
      %806 = vmatpush1.msra.mxu0 0.0
      %807 = vmatprep.subr.mxu0 0.0
      %808 = vmatpush1.msra.mxu0 0.0
      %809 = vmatprep.subr.mxu0 0.0
      %810 = vmatpush1.msra.mxu0 0.0
      %811 = vmatprep.subr.mxu0 0.0
      %812 = vmatpush1.msra.mxu0 0.0
      %813 = vmatprep.subr.mxu0 0.0
      %814 = vmatpush1.msra.mxu0 0.0
      %815 = vmatprep.subr.mxu0 0.0
      %816 = vmatpush1.msra.mxu0 0.0
      %817 = vmatprep.subr.mxu0 0.0
      %818 = vmatpush1.msra.mxu0 0.0
      %819 = vmatprep.subr.mxu0 0.0
      %820 = vmatpush1.msra.mxu0 0.0
      %821 = vmatprep.subr.mxu0 0.0
      %822 = vmatpush1.msra.mxu0 0.0
      %823 = vmatprep.subr.mxu0 0.0
      %824 = vmatpush1.msra.mxu0 0.0
      %825 = vmatprep.subr.mxu0 0.0
      %826 = vmatpush1.msra.mxu0 0.0
      %827 = vmatprep.subr.mxu0 0.0
      %828 = vmatpush1.msra.mxu0 0.0
      %829 = vmatprep.subr.mxu0 0.0
      %830 = vmatpush1.msra.mxu0 0.0
      %831 = vmatprep.subr.mxu0 0.0
      %832 = vmatpush1.msra.mxu0 0.0
      %833 = vmatprep.subr.mxu0 0.0
      %834 = vmatpush1.msra.mxu0 0.0
      %835 = vmatprep.subr.mxu0 0.0
      %836 = vmatpush1.msra.mxu0 0.0
      %837 = vmatprep.subr.mxu0 0.0
      %838 = vmatpush1.msra.mxu0 0.0
      %839 = vmatprep.subr.mxu0 0.0
      %840 = vmatpush1.msra.mxu0 0.0
      %841 = vmatprep.subr.mxu0 0.0
      %842 = vmatpush1.msra.mxu0 0.0
      %843 = vmatprep.subr.mxu0 0.0
      %844 = vmatpush1.msra.mxu0 0.0
      %845 = vmatprep.subr.mxu0 0.0
      %846 = vmatpush1.msra.mxu0 0.0
      %847 = vmatprep.subr.mxu0 0.0
      %848 = vmatpush1.msra.mxu0 0.0
      %849 = vmatprep.subr.mxu0 0.0
      %850 = vmatpush1.msra.mxu0 0.0
      %851 = vmatprep.mubr.f32.mxu0 0.0
      %852 = vmatmul.mubr.f32.gmra.mrb[0].mxu0 %v761
      %v853 = vpop.f32.mrb[0].mxu0
      %v854 = vadd.f32 0.0, %v853
      %v855 = vpop.f32.mrb[0].mxu0
      %856 = vmatprep.mubr.f32.mxu0 0.0
      %857 = vmatmul.mubr.f32.gmra.mrb[0].mxu0 %v764
      %v858 = vpop.f32.mrb[0].mxu0
      %v859 = vadd.f32 0.0, %v858
      %v860 = vpop.f32.mrb[0].mxu0
      %861 = vmatprep.mubr.f32.mxu0 0.0
      %862 = vmatmul.mubr.f32.gmra.mrb[0].mxu0 %v767
      %v863 = vpop.f32.mrb[0].mxu0
      %v864 = vadd.f32 0.0, %v863
      %v865 = vpop.f32.mrb[0].mxu0
      %866 = vmatprep.mubr.f32.mxu0 0.0
      %867 = vmatmul.mubr.f32.gmra.mrb[0].mxu0 %v770
      %v868 = vpop.f32.mrb[0].mxu0
      %v869 = vadd.f32 0.0, %v868
      %v870 = vpop.f32.mrb[0].mxu0
      %871 = vmatprep.mubr.f32.mxu0 0.0
      %872 = vmatmul.mubr.f32.gmra.mrb[0].mxu0 %v773
      %v873 = vpop.f32.mrb[0].mxu0
      %v874 = vadd.f32 0.0, %v873
      %v875 = vpop.f32.mrb[0].mxu0
      %876 = vmatprep.mubr.f32.mxu0 0.0
      %877 = vmatmul.mubr.f32.gmra.mrb[0].mxu0 %v776
      %v878 = vpop.f32.mrb[0].mxu0
      %v879 = vadd.f32 0.0, %v878
      %v880 = vpop.f32.mrb[0].mxu0
      %881 = vmatprep.mubr.f32.mxu0 0.0
      %882 = vmatmul.mubr.f32.gmra.mrb[0].mxu0 %v779
      %v883 = vpop.f32.mrb[0].mxu0
      %v884 = vadd.f32 0.0, %v883
      %v885 = vpop.f32.mrb[0].mxu0
      %886 = vmatprep.mubr.f32.mxu0 0.0
      %887 = vmatmul.mubr.f32.gmra.mrb[0].mxu0 %v782
      %v888 = vpop.f32.mrb[0].mxu0
      %v889 = vadd.f32 0.0, %v888
      %v890 = vpop.f32.mrb[0].mxu0
      %891 = vdwg.mxu0
      %v892 = vadd.f32 %v742, %v854
      %v893 = vadd.f32 %v743, %v859
      %v894 = vadd.f32 %v744, %v864
      %v895 = vadd.f32 %v745, %v869
      %v896 = vadd.f32 %v746, %v874
      %v897 = vadd.f32 %v747, %v879
      %v898 = vadd.f32 %v748, %v884
      %v899 = vadd.f32 %v749, %v889
      %v900 = vld [vmem:[%s307 + $0x1] sm:$0xff]
      %v901 = vld [vmem:[%s307 + $0x11] sm:$0xff]
      %v902 = vld [vmem:[%s307 + $0x21] sm:$0xff]
      %v903 = vld [vmem:[%s307 + $0x31] sm:$0xff]
      %v904 = vld [vmem:[%s307 + $0x41] sm:$0xff]
      %v905 = vld [vmem:[%s307 + $0x51] sm:$0xff]
      %v906 = vld [vmem:[%s307 + $0x61] sm:$0xff]
      %v907 = vld [vmem:[%s307 + $0x71] sm:$0xff]
      %s908 = scalar_lea.vmem %s1, 16
      %v909 = vld [vmem:[%s908] sm:$0xf]
      %v911 = vsel %vm277, %v900, 0
      %v914 = vsel %vm277, %v901, 0
      %v917 = vsel %vm277, %v902, 0
      %v920 = vsel %vm277, %v903, 0
      %v923 = vsel %vm277, %v904, 0
      %v926 = vsel %vm277, %v905, 0
      %v929 = vsel %vm277, %v906, 0
      %v932 = vsel %vm277, %v907, 0
      %v935 = vsel %vm359, %v909, 0
      %937 = vmatprep.subr.mxu0 0.0
      %938 = vmatpush1.msra.mxu0 %v935
      %939 = vmatprep.subr.mxu0 0.0
      %940 = vmatpush1.msra.mxu0 0.0
      %941 = vmatprep.subr.mxu0 0.0
      %942 = vmatpush1.msra.mxu0 0.0
      %943 = vmatprep.subr.mxu0 0.0
      %944 = vmatpush1.msra.mxu0 0.0
      %945 = vmatprep.subr.mxu0 0.0
      %946 = vmatpush1.msra.mxu0 0.0
      %947 = vmatprep.subr.mxu0 0.0
      %948 = vmatpush1.msra.mxu0 0.0
      %949 = vmatprep.subr.mxu0 0.0
      %950 = vmatpush1.msra.mxu0 0.0
      %951 = vmatprep.subr.mxu0 0.0
      %952 = vmatpush1.msra.mxu0 0.0
      %953 = vmatprep.subr.mxu0 0.0
      %954 = vmatpush1.msra.mxu0 0.0
      %955 = vmatprep.subr.mxu0 0.0
      %956 = vmatpush1.msra.mxu0 0.0
      %957 = vmatprep.subr.mxu0 0.0
      %958 = vmatpush1.msra.mxu0 0.0
      %959 = vmatprep.subr.mxu0 0.0
      %960 = vmatpush1.msra.mxu0 0.0
      %961 = vmatprep.subr.mxu0 0.0
      %962 = vmatpush1.msra.mxu0 0.0
      %963 = vmatprep.subr.mxu0 0.0
      %964 = vmatpush1.msra.mxu0 0.0
      %965 = vmatprep.subr.mxu0 0.0
      %966 = vmatpush1.msra.mxu0 0.0
      %967 = vmatprep.subr.mxu0 0.0
      %968 = vmatpush1.msra.mxu0 0.0
      %969 = vmatprep.subr.mxu0 0.0
      %970 = vmatpush1.msra.mxu0 0.0
      %971 = vmatprep.subr.mxu0 0.0
      %972 = vmatpush1.msra.mxu0 0.0
      %973 = vmatprep.subr.mxu0 0.0
      %974 = vmatpush1.msra.mxu0 0.0
      %975 = vmatprep.subr.mxu0 0.0
      %976 = vmatpush1.msra.mxu0 0.0
      %977 = vmatprep.subr.mxu0 0.0
      %978 = vmatpush1.msra.mxu0 0.0
      %979 = vmatprep.subr.mxu0 0.0
      %980 = vmatpush1.msra.mxu0 0.0
      %981 = vmatprep.subr.mxu0 0.0
      %982 = vmatpush1.msra.mxu0 0.0
      %983 = vmatprep.subr.mxu0 0.0
      %984 = vmatpush1.msra.mxu0 0.0
      %985 = vmatprep.subr.mxu0 0.0
      %986 = vmatpush1.msra.mxu0 0.0
      %987 = vmatprep.subr.mxu0 0.0
      %988 = vmatpush1.msra.mxu0 0.0
      %989 = vmatprep.subr.mxu0 0.0
      %990 = vmatpush1.msra.mxu0 0.0
      %991 = vmatprep.subr.mxu0 0.0
      %992 = vmatpush1.msra.mxu0 0.0
      %993 = vmatprep.subr.mxu0 0.0
      %994 = vmatpush1.msra.mxu0 0.0
      %995 = vmatprep.subr.mxu0 0.0
      %996 = vmatpush1.msra.mxu0 0.0
      %997 = vmatprep.subr.mxu0 0.0
      %998 = vmatpush1.msra.mxu0 0.0
      %999 = vmatprep.subr.mxu0 0.0
      %1000 = vmatpush1.msra.mxu0 0.0
      %1001 = vmatprep.mubr.f32.mxu0 0.0
      %1002 = vmatmul.mubr.f32.gmra.mrb[0].mxu0 %v911
      %v1003 = vpop.f32.mrb[0].mxu0
      %v1004 = vadd.f32 0.0, %v1003
      %v1005 = vpop.f32.mrb[0].mxu0
      %1006 = vmatprep.mubr.f32.mxu0 0.0
      %1007 = vmatmul.mubr.f32.gmra.mrb[0].mxu0 %v914
      %v1008 = vpop.f32.mrb[0].mxu0
      %v1009 = vadd.f32 0.0, %v1008
      %v1010 = vpop.f32.mrb[0].mxu0
      %1011 = vmatprep.mubr.f32.mxu0 0.0
      %1012 = vmatmul.mubr.f32.gmra.mrb[0].mxu0 %v917
      %v1013 = vpop.f32.mrb[0].mxu0
      %v1014 = vadd.f32 0.0, %v1013
      %v1015 = vpop.f32.mrb[0].mxu0
      %1016 = vmatprep.mubr.f32.mxu0 0.0
      %1017 = vmatmul.mubr.f32.gmra.mrb[0].mxu0 %v920
      %v1018 = vpop.f32.mrb[0].mxu0
      %v1019 = vadd.f32 0.0, %v1018
      %v1020 = vpop.f32.mrb[0].mxu0
      %1021 = vmatprep.mubr.f32.mxu0 0.0
      %1022 = vmatmul.mubr.f32.gmra.mrb[0].mxu0 %v923
      %v1023 = vpop.f32.mrb[0].mxu0
      %v1024 = vadd.f32 0.0, %v1023
      %v1025 = vpop.f32.mrb[0].mxu0
      %1026 = vmatprep.mubr.f32.mxu0 0.0
      %1027 = vmatmul.mubr.f32.gmra.mrb[0].mxu0 %v926
      %v1028 = vpop.f32.mrb[0].mxu0
      %v1029 = vadd.f32 0.0, %v1028
      %v1030 = vpop.f32.mrb[0].mxu0
      %1031 = vmatprep.mubr.f32.mxu0 0.0
      %1032 = vmatmul.mubr.f32.gmra.mrb[0].mxu0 %v929
      %v1033 = vpop.f32.mrb[0].mxu0
      %v1034 = vadd.f32 0.0, %v1033
      %v1035 = vpop.f32.mrb[0].mxu0
      %1036 = vmatprep.mubr.f32.mxu0 0.0
      %1037 = vmatmul.mubr.f32.gmra.mrb[0].mxu0 %v932
      %v1038 = vpop.f32.mrb[0].mxu0
      %v1039 = vadd.f32 0.0, %v1038
      %v1040 = vpop.f32.mrb[0].mxu0
      %1041 = vdwg.mxu0
      %v1042 = vadd.f32 %v892, %v1004
      %v1043 = vadd.f32 %v893, %v1009
      %v1044 = vadd.f32 %v894, %v1014
      %v1045 = vadd.f32 %v895, %v1019
      %v1046 = vadd.f32 %v896, %v1024
      %v1047 = vadd.f32 %v897, %v1029
      %v1048 = vadd.f32 %v898, %v1034
      %v1049 = vadd.f32 %v899, %v1039
      %v1050 = vld [vmem:[%s307 + $0x2] sm:$0xff]
      %v1051 = vld [vmem:[%s307 + $0x12] sm:$0xff]
      %v1052 = vld [vmem:[%s307 + $0x22] sm:$0xff]
      %v1053 = vld [vmem:[%s307 + $0x32] sm:$0xff]
      %v1054 = vld [vmem:[%s307 + $0x42] sm:$0xff]
      %v1055 = vld [vmem:[%s307 + $0x52] sm:$0xff]
      %v1056 = vld [vmem:[%s307 + $0x62] sm:$0xff]
      %v1057 = vld [vmem:[%s307 + $0x72] sm:$0xff]
      %s1058 = scalar_lea.vmem %s1, 20
      %v1059 = vld [vmem:[%s1058] sm:$0xf]
      %v1061 = vsel %vm277, %v1050, 0
      %v1064 = vsel %vm277, %v1051, 0
      %v1067 = vsel %vm277, %v1052, 0
      %v1070 = vsel %vm277, %v1053, 0
      %v1073 = vsel %vm277, %v1054, 0
      %v1076 = vsel %vm277, %v1055, 0
      %v1079 = vsel %vm277, %v1056, 0
      %v1082 = vsel %vm277, %v1057, 0
      %v1085 = vsel %vm359, %v1059, 0
      %1087 = vmatprep.subr.mxu0 0.0
      %1088 = vmatpush1.msra.mxu0 %v1085
      %1089 = vmatprep.subr.mxu0 0.0
      %1090 = vmatpush1.msra.mxu0 0.0
      %1091 = vmatprep.subr.mxu0 0.0
      %1092 = vmatpush1.msra.mxu0 0.0
      %1093 = vmatprep.subr.mxu0 0.0
      %1094 = vmatpush1.msra.mxu0 0.0
      %1095 = vmatprep.subr.mxu0 0.0
      %1096 = vmatpush1.msra.mxu0 0.0
      %1097 = vmatprep.subr.mxu0 0.0
      %1098 = vmatpush1.msra.mxu0 0.0
      %1099 = vmatprep.subr.mxu0 0.0
      %1100 = vmatpush1.msra.mxu0 0.0
      %1101 = vmatprep.subr.mxu0 0.0
      %1102 = vmatpush1.msra.mxu0 0.0
      %1103 = vmatprep.subr.mxu0 0.0
      %1104 = vmatpush1.msra.mxu0 0.0
      %1105 = vmatprep.subr.mxu0 0.0
      %1106 = vmatpush1.msra.mxu0 0.0
      %1107 = vmatprep.subr.mxu0 0.0
      %1108 = vmatpush1.msra.mxu0 0.0
      %1109 = vmatprep.subr.mxu0 0.0
      %1110 = vmatpush1.msra.mxu0 0.0
      %1111 = vmatprep.subr.mxu0 0.0
      %1112 = vmatpush1.msra.mxu0 0.0
      %1113 = vmatprep.subr.mxu0 0.0
      %1114 = vmatpush1.msra.mxu0 0.0
      %1115 = vmatprep.subr.mxu0 0.0
      %1116 = vmatpush1.msra.mxu0 0.0
      %1117 = vmatprep.subr.mxu0 0.0
      %1118 = vmatpush1.msra.mxu0 0.0
      %1119 = vmatprep.subr.mxu0 0.0
      %1120 = vmatpush1.msra.mxu0 0.0
      %1121 = vmatprep.subr.mxu0 0.0
      %1122 = vmatpush1.msra.mxu0 0.0
      %1123 = vmatprep.subr.mxu0 0.0
      %1124 = vmatpush1.msra.mxu0 0.0
      %1125 = vmatprep.subr.mxu0 0.0
      %1126 = vmatpush1.msra.mxu0 0.0
      %1127 = vmatprep.subr.mxu0 0.0
      %1128 = vmatpush1.msra.mxu0 0.0
      %1129 = vmatprep.subr.mxu0 0.0
      %1130 = vmatpush1.msra.mxu0 0.0
      %1131 = vmatprep.subr.mxu0 0.0
      %1132 = vmatpush1.msra.mxu0 0.0
      %1133 = vmatprep.subr.mxu0 0.0
      %1134 = vmatpush1.msra.mxu0 0.0
      %1135 = vmatprep.subr.mxu0 0.0
      %1136 = vmatpush1.msra.mxu0 0.0
      %1137 = vmatprep.subr.mxu0 0.0
      %1138 = vmatpush1.msra.mxu0 0.0
      %1139 = vmatprep.subr.mxu0 0.0
      %1140 = vmatpush1.msra.mxu0 0.0
      %1141 = vmatprep.subr.mxu0 0.0
      %1142 = vmatpush1.msra.mxu0 0.0
      %1143 = vmatprep.subr.mxu0 0.0
      %1144 = vmatpush1.msra.mxu0 0.0
      %1145 = vmatprep.subr.mxu0 0.0
      %1146 = vmatpush1.msra.mxu0 0.0
      %1147 = vmatprep.subr.mxu0 0.0
      %1148 = vmatpush1.msra.mxu0 0.0
      %1149 = vmatprep.subr.mxu0 0.0
      %1150 = vmatpush1.msra.mxu0 0.0
      %1151 = vmatprep.mubr.f32.mxu0 0.0
      %1152 = vmatmul.mubr.f32.gmra.mrb[0].mxu0 %v1061
      %v1153 = vpop.f32.mrb[0].mxu0
      %v1154 = vadd.f32 0.0, %v1153
      %v1155 = vpop.f32.mrb[0].mxu0
      %1156 = vmatprep.mubr.f32.mxu0 0.0
      %1157 = vmatmul.mubr.f32.gmra.mrb[0].mxu0 %v1064
      %v1158 = vpop.f32.mrb[0].mxu0
      %v1159 = vadd.f32 0.0, %v1158
      %v1160 = vpop.f32.mrb[0].mxu0
      %1161 = vmatprep.mubr.f32.mxu0 0.0
      %1162 = vmatmul.mubr.f32.gmra.mrb[0].mxu0 %v1067
      %v1163 = vpop.f32.mrb[0].mxu0
      %v1164 = vadd.f32 0.0, %v1163
      %v1165 = vpop.f32.mrb[0].mxu0
      %1166 = vmatprep.mubr.f32.mxu0 0.0
      %1167 = vmatmul.mubr.f32.gmra.mrb[0].mxu0 %v1070
      %v1168 = vpop.f32.mrb[0].mxu0
      %v1169 = vadd.f32 0.0, %v1168
      %v1170 = vpop.f32.mrb[0].mxu0
      %1171 = vmatprep.mubr.f32.mxu0 0.0
      %1172 = vmatmul.mubr.f32.gmra.mrb[0].mxu0 %v1073
      %v1173 = vpop.f32.mrb[0].mxu0
      %v1174 = vadd.f32 0.0, %v1173
      %v1175 = vpop.f32.mrb[0].mxu0
      %1176 = vmatprep.mubr.f32.mxu0 0.0
      %1177 = vmatmul.mubr.f32.gmra.mrb[0].mxu0 %v1076
      %v1178 = vpop.f32.mrb[0].mxu0
      %v1179 = vadd.f32 0.0, %v1178
      %v1180 = vpop.f32.mrb[0].mxu0
      %1181 = vmatprep.mubr.f32.mxu0 0.0
      %1182 = vmatmul.mubr.f32.gmra.mrb[0].mxu0 %v1079
      %v1183 = vpop.f32.mrb[0].mxu0
      %v1184 = vadd.f32 0.0, %v1183
      %v1185 = vpop.f32.mrb[0].mxu0
      %1186 = vmatprep.mubr.f32.mxu0 0.0
      %1187 = vmatmul.mubr.f32.gmra.mrb[0].mxu0 %v1082
      %v1188 = vpop.f32.mrb[0].mxu0
      %v1189 = vadd.f32 0.0, %v1188
      %v1190 = vpop.f32.mrb[0].mxu0
      %1191 = vdwg.mxu0
      %v1192 = vadd.f32 %v1042, %v1154
      %v1193 = vadd.f32 %v1043, %v1159
      %v1194 = vadd.f32 %v1044, %v1164
      %v1195 = vadd.f32 %v1045, %v1169
      %v1196 = vadd.f32 %v1046, %v1174
      %v1197 = vadd.f32 %v1047, %v1179
      %v1198 = vadd.f32 %v1048, %v1184
      %v1199 = vadd.f32 %v1049, %v1189
      %s1200 = scalar_lea.vmem [#allocation2], 32
      %v1201 = vld [vmem:[%s1200] sm:$0xff]
      %v1202 = vld [vmem:[%s1200 + $0x10] sm:$0xff]
      %v1203 = vld [vmem:[%s1200 + $0x20] sm:$0xff]
      %v1204 = vld [vmem:[%s1200 + $0x30] sm:$0xff]
      %v1205 = vld [vmem:[%s1200 + $0x40] sm:$0xff]
      %v1206 = vld [vmem:[%s1200 + $0x50] sm:$0xff]
      %v1207 = vld [vmem:[%s1200 + $0x60] sm:$0xff]
      %v1208 = vld [vmem:[%s1200 + $0x70] sm:$0xff]
      %s1209 = scalar_lea.vmem %s1, 24
      %v1210 = vld [vmem:[%s1209] sm:$0xf]
      %v1212 = vsel %vm277, %v1201, 0
      %v1215 = vsel %vm277, %v1202, 0
      %v1218 = vsel %vm277, %v1203, 0
      %v1221 = vsel %vm277, %v1204, 0
      %v1224 = vsel %vm277, %v1205, 0
      %v1227 = vsel %vm277, %v1206, 0
      %v1230 = vsel %vm277, %v1207, 0
      %v1233 = vsel %vm277, %v1208, 0
      %v1236 = vsel %vm359, %v1210, 0
      %1238 = vmatprep.subr.mxu0 0.0
      %1239 = vmatpush1.msra.mxu0 %v1236
      %1240 = vmatprep.subr.mxu0 0.0
      %1241 = vmatpush1.msra.mxu0 0.0
      %1242 = vmatprep.subr.mxu0 0.0
      %1243 = vmatpush1.msra.mxu0 0.0
      %1244 = vmatprep.subr.mxu0 0.0
      %1245 = vmatpush1.msra.mxu0 0.0
      %1246 = vmatprep.subr.mxu0 0.0
      %1247 = vmatpush1.msra.mxu0 0.0
      %1248 = vmatprep.subr.mxu0 0.0
      %1249 = vmatpush1.msra.mxu0 0.0
      %1250 = vmatprep.subr.mxu0 0.0
      %1251 = vmatpush1.msra.mxu0 0.0
      %1252 = vmatprep.subr.mxu0 0.0
      %1253 = vmatpush1.msra.mxu0 0.0
      %1254 = vmatprep.subr.mxu0 0.0
      %1255 = vmatpush1.msra.mxu0 0.0
      %1256 = vmatprep.subr.mxu0 0.0
      %1257 = vmatpush1.msra.mxu0 0.0
      %1258 = vmatprep.subr.mxu0 0.0
      %1259 = vmatpush1.msra.mxu0 0.0
      %1260 = vmatprep.subr.mxu0 0.0
      %1261 = vmatpush1.msra.mxu0 0.0
      %1262 = vmatprep.subr.mxu0 0.0
      %1263 = vmatpush1.msra.mxu0 0.0
      %1264 = vmatprep.subr.mxu0 0.0
      %1265 = vmatpush1.msra.mxu0 0.0
      %1266 = vmatprep.subr.mxu0 0.0
      %1267 = vmatpush1.msra.mxu0 0.0
      %1268 = vmatprep.subr.mxu0 0.0
      %1269 = vmatpush1.msra.mxu0 0.0
      %1270 = vmatprep.subr.mxu0 0.0
      %1271 = vmatpush1.msra.mxu0 0.0
      %1272 = vmatprep.subr.mxu0 0.0
      %1273 = vmatpush1.msra.mxu0 0.0
      %1274 = vmatprep.subr.mxu0 0.0
      %1275 = vmatpush1.msra.mxu0 0.0
      %1276 = vmatprep.subr.mxu0 0.0
      %1277 = vmatpush1.msra.mxu0 0.0
      %1278 = vmatprep.subr.mxu0 0.0
      %1279 = vmatpush1.msra.mxu0 0.0
      %1280 = vmatprep.subr.mxu0 0.0
      %1281 = vmatpush1.msra.mxu0 0.0
      %1282 = vmatprep.subr.mxu0 0.0
      %1283 = vmatpush1.msra.mxu0 0.0
      %1284 = vmatprep.subr.mxu0 0.0
      %1285 = vmatpush1.msra.mxu0 0.0
      %1286 = vmatprep.subr.mxu0 0.0
      %1287 = vmatpush1.msra.mxu0 0.0
      %1288 = vmatprep.subr.mxu0 0.0
      %1289 = vmatpush1.msra.mxu0 0.0
      %1290 = vmatprep.subr.mxu0 0.0
      %1291 = vmatpush1.msra.mxu0 0.0
      %1292 = vmatprep.subr.mxu0 0.0
      %1293 = vmatpush1.msra.mxu0 0.0
      %1294 = vmatprep.subr.mxu0 0.0
      %1295 = vmatpush1.msra.mxu0 0.0
      %1296 = vmatprep.subr.mxu0 0.0
      %1297 = vmatpush1.msra.mxu0 0.0
      %1298 = vmatprep.subr.mxu0 0.0
      %1299 = vmatpush1.msra.mxu0 0.0
      %1300 = vmatprep.subr.mxu0 0.0
      %1301 = vmatpush1.msra.mxu0 0.0
      %1302 = vmatprep.mubr.f32.mxu0 0.0
      %1303 = vmatmul.mubr.f32.gmra.mrb[0].mxu0 %v1212
      %v1304 = vpop.f32.mrb[0].mxu0
      %v1305 = vadd.f32 0.0, %v1304
      %v1306 = vpop.f32.mrb[0].mxu0
      %1307 = vmatprep.mubr.f32.mxu0 0.0
      %1308 = vmatmul.mubr.f32.gmra.mrb[0].mxu0 %v1215
      %v1309 = vpop.f32.mrb[0].mxu0
      %v1310 = vadd.f32 0.0, %v1309
      %v1311 = vpop.f32.mrb[0].mxu0
      %1312 = vmatprep.mubr.f32.mxu0 0.0
      %1313 = vmatmul.mubr.f32.gmra.mrb[0].mxu0 %v1218
      %v1314 = vpop.f32.mrb[0].mxu0
      %v1315 = vadd.f32 0.0, %v1314
      %v1316 = vpop.f32.mrb[0].mxu0
      %1317 = vmatprep.mubr.f32.mxu0 0.0
      %1318 = vmatmul.mubr.f32.gmra.mrb[0].mxu0 %v1221
      %v1319 = vpop.f32.mrb[0].mxu0
      %v1320 = vadd.f32 0.0, %v1319
      %v1321 = vpop.f32.mrb[0].mxu0
      %1322 = vmatprep.mubr.f32.mxu0 0.0
      %1323 = vmatmul.mubr.f32.gmra.mrb[0].mxu0 %v1224
      %v1324 = vpop.f32.mrb[0].mxu0
      %v1325 = vadd.f32 0.0, %v1324
      %v1326 = vpop.f32.mrb[0].mxu0
      %1327 = vmatprep.mubr.f32.mxu0 0.0
      %1328 = vmatmul.mubr.f32.gmra.mrb[0].mxu0 %v1227
      %v1329 = vpop.f32.mrb[0].mxu0
      %v1330 = vadd.f32 0.0, %v1329
      %v1331 = vpop.f32.mrb[0].mxu0
      %1332 = vmatprep.mubr.f32.mxu0 0.0
      %1333 = vmatmul.mubr.f32.gmra.mrb[0].mxu0 %v1230
      %v1334 = vpop.f32.mrb[0].mxu0
      %v1335 = vadd.f32 0.0, %v1334
      %v1336 = vpop.f32.mrb[0].mxu0
      %1337 = vmatprep.mubr.f32.mxu0 0.0
      %1338 = vmatmul.mubr.f32.gmra.mrb[0].mxu0 %v1233
      %v1339 = vpop.f32.mrb[0].mxu0
      %v1340 = vadd.f32 0.0, %v1339
      %v1341 = vpop.f32.mrb[0].mxu0
      %1342 = vdwg.mxu0
      %v1343 = vadd.f32 %v1192, %v1305
      %v1344 = vadd.f32 %v1193, %v1310
      %v1345 = vadd.f32 %v1194, %v1315
      %v1346 = vadd.f32 %v1195, %v1320
      %v1347 = vadd.f32 %v1196, %v1325
      %v1348 = vadd.f32 %v1197, %v1330
      %v1349 = vadd.f32 %v1198, %v1335
      %v1350 = vadd.f32 %v1199, %v1340
      %v1351 = vld [vmem:[%s1200 + $0x1] sm:$0xff]
      %v1352 = vld [vmem:[%s1200 + $0x11] sm:$0xff]
      %v1353 = vld [vmem:[%s1200 + $0x21] sm:$0xff]
      %v1354 = vld [vmem:[%s1200 + $0x31] sm:$0xff]
      %v1355 = vld [vmem:[%s1200 + $0x41] sm:$0xff]
      %v1356 = vld [vmem:[%s1200 + $0x51] sm:$0xff]
      %v1357 = vld [vmem:[%s1200 + $0x61] sm:$0xff]
      %v1358 = vld [vmem:[%s1200 + $0x71] sm:$0xff]
      %s1359 = scalar_lea.vmem %s1, 28
      %v1360 = vld [vmem:[%s1359] sm:$0xf]
      %v1362 = vsel %vm277, %v1351, 0
      %v1365 = vsel %vm277, %v1352, 0
      %v1368 = vsel %vm277, %v1353, 0
      %v1371 = vsel %vm277, %v1354, 0
      %v1374 = vsel %vm277, %v1355, 0
      %v1377 = vsel %vm277, %v1356, 0
      %v1380 = vsel %vm277, %v1357, 0
      %v1383 = vsel %vm277, %v1358, 0
      %v1386 = vsel %vm359, %v1360, 0
      %1388 = vmatprep.subr.mxu0 0.0
      %1389 = vmatpush1.msra.mxu0 %v1386
      %1390 = vmatprep.subr.mxu0 0.0
      %1391 = vmatpush1.msra.mxu0 0.0
      %1392 = vmatprep.subr.mxu0 0.0
      %1393 = vmatpush1.msra.mxu0 0.0
      %1394 = vmatprep.subr.mxu0 0.0
      %1395 = vmatpush1.msra.mxu0 0.0
      %1396 = vmatprep.subr.mxu0 0.0
      %1397 = vmatpush1.msra.mxu0 0.0
      %1398 = vmatprep.subr.mxu0 0.0
      %1399 = vmatpush1.msra.mxu0 0.0
      %1400 = vmatprep.subr.mxu0 0.0
      %1401 = vmatpush1.msra.mxu0 0.0
      %1402 = vmatprep.subr.mxu0 0.0
      %1403 = vmatpush1.msra.mxu0 0.0
      %1404 = vmatprep.subr.mxu0 0.0
      %1405 = vmatpush1.msra.mxu0 0.0
      %1406 = vmatprep.subr.mxu0 0.0
      %1407 = vmatpush1.msra.mxu0 0.0
      %1408 = vmatprep.subr.mxu0 0.0
      %1409 = vmatpush1.msra.mxu0 0.0
      %1410 = vmatprep.subr.mxu0 0.0
      %1411 = vmatpush1.msra.mxu0 0.0
      %1412 = vmatprep.subr.mxu0 0.0
      %1413 = vmatpush1.msra.mxu0 0.0
      %1414 = vmatprep.subr.mxu0 0.0
      %1415 = vmatpush1.msra.mxu0 0.0
      %1416 = vmatprep.subr.mxu0 0.0
      %1417 = vmatpush1.msra.mxu0 0.0
      %1418 = vmatprep.subr.mxu0 0.0
      %1419 = vmatpush1.msra.mxu0 0.0
      %1420 = vmatprep.subr.mxu0 0.0
      %1421 = vmatpush1.msra.mxu0 0.0
      %1422 = vmatprep.subr.mxu0 0.0
      %1423 = vmatpush1.msra.mxu0 0.0
      %1424 = vmatprep.subr.mxu0 0.0
      %1425 = vmatpush1.msra.mxu0 0.0
      %1426 = vmatprep.subr.mxu0 0.0
      %1427 = vmatpush1.msra.mxu0 0.0
      %1428 = vmatprep.subr.mxu0 0.0
      %1429 = vmatpush1.msra.mxu0 0.0
      %1430 = vmatprep.subr.mxu0 0.0
      %1431 = vmatpush1.msra.mxu0 0.0
      %1432 = vmatprep.subr.mxu0 0.0
      %1433 = vmatpush1.msra.mxu0 0.0
      %1434 = vmatprep.subr.mxu0 0.0
      %1435 = vmatpush1.msra.mxu0 0.0
      %1436 = vmatprep.subr.mxu0 0.0
      %1437 = vmatpush1.msra.mxu0 0.0
      %1438 = vmatprep.subr.mxu0 0.0
      %1439 = vmatpush1.msra.mxu0 0.0
      %1440 = vmatprep.subr.mxu0 0.0
      %1441 = vmatpush1.msra.mxu0 0.0
      %1442 = vmatprep.subr.mxu0 0.0
      %1443 = vmatpush1.msra.mxu0 0.0
      %1444 = vmatprep.subr.mxu0 0.0
      %1445 = vmatpush1.msra.mxu0 0.0
      %1446 = vmatprep.subr.mxu0 0.0
      %1447 = vmatpush1.msra.mxu0 0.0
      %1448 = vmatprep.subr.mxu0 0.0
      %1449 = vmatpush1.msra.mxu0 0.0
      %1450 = vmatprep.subr.mxu0 0.0
      %1451 = vmatpush1.msra.mxu0 0.0
      %1452 = vmatprep.mubr.f32.mxu0 0.0
      %1453 = vmatmul.mubr.f32.gmra.mrb[0].mxu0 %v1362
      %v1454 = vpop.f32.mrb[0].mxu0
      %v1455 = vadd.f32 0.0, %v1454
      %v1456 = vpop.f32.mrb[0].mxu0
      %1457 = vmatprep.mubr.f32.mxu0 0.0
      %1458 = vmatmul.mubr.f32.gmra.mrb[0].mxu0 %v1365
      %v1459 = vpop.f32.mrb[0].mxu0
      %v1460 = vadd.f32 0.0, %v1459
      %v1461 = vpop.f32.mrb[0].mxu0
      %1462 = vmatprep.mubr.f32.mxu0 0.0
      %1463 = vmatmul.mubr.f32.gmra.mrb[0].mxu0 %v1368
      %v1464 = vpop.f32.mrb[0].mxu0
      %v1465 = vadd.f32 0.0, %v1464
      %v1466 = vpop.f32.mrb[0].mxu0
      %1467 = vmatprep.mubr.f32.mxu0 0.0
      %1468 = vmatmul.mubr.f32.gmra.mrb[0].mxu0 %v1371
      %v1469 = vpop.f32.mrb[0].mxu0
      %v1470 = vadd.f32 0.0, %v1469
      %v1471 = vpop.f32.mrb[0].mxu0
      %1472 = vmatprep.mubr.f32.mxu0 0.0
      %1473 = vmatmul.mubr.f32.gmra.mrb[0].mxu0 %v1374
      %v1474 = vpop.f32.mrb[0].mxu0
      %v1475 = vadd.f32 0.0, %v1474
      %v1476 = vpop.f32.mrb[0].mxu0
      %1477 = vmatprep.mubr.f32.mxu0 0.0
      %1478 = vmatmul.mubr.f32.gmra.mrb[0].mxu0 %v1377
      %v1479 = vpop.f32.mrb[0].mxu0
      %v1480 = vadd.f32 0.0, %v1479
      %v1481 = vpop.f32.mrb[0].mxu0
      %1482 = vmatprep.mubr.f32.mxu0 0.0
      %1483 = vmatmul.mubr.f32.gmra.mrb[0].mxu0 %v1380
      %v1484 = vpop.f32.mrb[0].mxu0
      %v1485 = vadd.f32 0.0, %v1484
      %v1486 = vpop.f32.mrb[0].mxu0
      %1487 = vmatprep.mubr.f32.mxu0 0.0
      %1488 = vmatmul.mubr.f32.gmra.mrb[0].mxu0 %v1383
      %v1489 = vpop.f32.mrb[0].mxu0
      %v1490 = vadd.f32 0.0, %v1489
      %v1491 = vpop.f32.mrb[0].mxu0
      %1492 = vdwg.mxu0
      %v1493 = vadd.f32 %v1343, %v1455
      %v1494 = vadd.f32 %v1344, %v1460
      %v1495 = vadd.f32 %v1345, %v1465
      %v1496 = vadd.f32 %v1346, %v1470
      %v1497 = vadd.f32 %v1347, %v1475
      %v1498 = vadd.f32 %v1348, %v1480
      %v1499 = vadd.f32 %v1349, %v1485
      %v1500 = vadd.f32 %v1350, %v1490
      %v1501 = vld [vmem:[%s1200 + $0x2] sm:$0xff]
      %v1502 = vld [vmem:[%s1200 + $0x12] sm:$0xff]
      %v1503 = vld [vmem:[%s1200 + $0x22] sm:$0xff]
      %v1504 = vld [vmem:[%s1200 + $0x32] sm:$0xff]
      %v1505 = vld [vmem:[%s1200 + $0x42] sm:$0xff]
      %v1506 = vld [vmem:[%s1200 + $0x52] sm:$0xff]
      %v1507 = vld [vmem:[%s1200 + $0x62] sm:$0xff]
      %v1508 = vld [vmem:[%s1200 + $0x72] sm:$0xff]
      %s1509 = scalar_lea.vmem %s1, 32
      %v1510 = vld [vmem:[%s1509] sm:$0xf]
      %v1512 = vsel %vm277, %v1501, 0
      %v1515 = vsel %vm277, %v1502, 0
      %v1518 = vsel %vm277, %v1503, 0
      %v1521 = vsel %vm277, %v1504, 0
      %v1524 = vsel %vm277, %v1505, 0
      %v1527 = vsel %vm277, %v1506, 0
      %v1530 = vsel %vm277, %v1507, 0
      %v1533 = vsel %vm277, %v1508, 0
      %v1536 = vsel %vm359, %v1510, 0
      %1538 = vmatprep.subr.mxu0 0.0
      %1539 = vmatpush1.msra.mxu0 %v1536
      %1540 = vmatprep.subr.mxu0 0.0
      %1541 = vmatpush1.msra.mxu0 0.0
      %1542 = vmatprep.subr.mxu0 0.0
      %1543 = vmatpush1.msra.mxu0 0.0
      %1544 = vmatprep.subr.mxu0 0.0
      %1545 = vmatpush1.msra.mxu0 0.0
      %1546 = vmatprep.subr.mxu0 0.0
      %1547 = vmatpush1.msra.mxu0 0.0
      %1548 = vmatprep.subr.mxu0 0.0
      %1549 = vmatpush1.msra.mxu0 0.0
      %1550 = vmatprep.subr.mxu0 0.0
      %1551 = vmatpush1.msra.mxu0 0.0
      %1552 = vmatprep.subr.mxu0 0.0
      %1553 = vmatpush1.msra.mxu0 0.0
      %1554 = vmatprep.subr.mxu0 0.0
      %1555 = vmatpush1.msra.mxu0 0.0
      %1556 = vmatprep.subr.mxu0 0.0
      %1557 = vmatpush1.msra.mxu0 0.0
      %1558 = vmatprep.subr.mxu0 0.0
      %1559 = vmatpush1.msra.mxu0 0.0
      %1560 = vmatprep.subr.mxu0 0.0
      %1561 = vmatpush1.msra.mxu0 0.0
      %1562 = vmatprep.subr.mxu0 0.0
      %1563 = vmatpush1.msra.mxu0 0.0
      %1564 = vmatprep.subr.mxu0 0.0
      %1565 = vmatpush1.msra.mxu0 0.0
      %1566 = vmatprep.subr.mxu0 0.0
      %1567 = vmatpush1.msra.mxu0 0.0
      %1568 = vmatprep.subr.mxu0 0.0
      %1569 = vmatpush1.msra.mxu0 0.0
      %1570 = vmatprep.subr.mxu0 0.0
      %1571 = vmatpush1.msra.mxu0 0.0
      %1572 = vmatprep.subr.mxu0 0.0
      %1573 = vmatpush1.msra.mxu0 0.0
      %1574 = vmatprep.subr.mxu0 0.0
      %1575 = vmatpush1.msra.mxu0 0.0
      %1576 = vmatprep.subr.mxu0 0.0
      %1577 = vmatpush1.msra.mxu0 0.0
      %1578 = vmatprep.subr.mxu0 0.0
      %1579 = vmatpush1.msra.mxu0 0.0
      %1580 = vmatprep.subr.mxu0 0.0
      %1581 = vmatpush1.msra.mxu0 0.0
      %1582 = vmatprep.subr.mxu0 0.0
      %1583 = vmatpush1.msra.mxu0 0.0
      %1584 = vmatprep.subr.mxu0 0.0
      %1585 = vmatpush1.msra.mxu0 0.0
      %1586 = vmatprep.subr.mxu0 0.0
      %1587 = vmatpush1.msra.mxu0 0.0
      %1588 = vmatprep.subr.mxu0 0.0
      %1589 = vmatpush1.msra.mxu0 0.0
      %1590 = vmatprep.subr.mxu0 0.0
      %1591 = vmatpush1.msra.mxu0 0.0
      %1592 = vmatprep.subr.mxu0 0.0
      %1593 = vmatpush1.msra.mxu0 0.0
      %1594 = vmatprep.subr.mxu0 0.0
      %1595 = vmatpush1.msra.mxu0 0.0
      %1596 = vmatprep.subr.mxu0 0.0
      %1597 = vmatpush1.msra.mxu0 0.0
      %1598 = vmatprep.subr.mxu0 0.0
      %1599 = vmatpush1.msra.mxu0 0.0
      %1600 = vmatprep.subr.mxu0 0.0
      %1601 = vmatpush1.msra.mxu0 0.0
      %1602 = vmatprep.mubr.f32.mxu0 0.0
      %1603 = vmatmul.mubr.f32.gmra.mrb[0].mxu0 %v1512
      %v1604 = vpop.f32.mrb[0].mxu0
      %v1605 = vadd.f32 0.0, %v1604
      %v1606 = vpop.f32.mrb[0].mxu0
      %1607 = vmatprep.mubr.f32.mxu0 0.0
      %1608 = vmatmul.mubr.f32.gmra.mrb[0].mxu0 %v1515
      %v1609 = vpop.f32.mrb[0].mxu0
      %v1610 = vadd.f32 0.0, %v1609
      %v1611 = vpop.f32.mrb[0].mxu0
      %1612 = vmatprep.mubr.f32.mxu0 0.0
      %1613 = vmatmul.mubr.f32.gmra.mrb[0].mxu0 %v1518
      %v1614 = vpop.f32.mrb[0].mxu0
      %v1615 = vadd.f32 0.0, %v1614
      %v1616 = vpop.f32.mrb[0].mxu0
      %1617 = vmatprep.mubr.f32.mxu0 0.0
      %1618 = vmatmul.mubr.f32.gmra.mrb[0].mxu0 %v1521
      %v1619 = vpop.f32.mrb[0].mxu0
      %v1620 = vadd.f32 0.0, %v1619
      %v1621 = vpop.f32.mrb[0].mxu0
      %1622 = vmatprep.mubr.f32.mxu0 0.0
      %1623 = vmatmul.mubr.f32.gmra.mrb[0].mxu0 %v1524
      %v1624 = vpop.f32.mrb[0].mxu0
      %v1625 = vadd.f32 0.0, %v1624
      %v1626 = vpop.f32.mrb[0].mxu0
      %1627 = vmatprep.mubr.f32.mxu0 0.0
      %1628 = vmatmul.mubr.f32.gmra.mrb[0].mxu0 %v1527
      %v1629 = vpop.f32.mrb[0].mxu0
      %v1630 = vadd.f32 0.0, %v1629
      %v1631 = vpop.f32.mrb[0].mxu0
      %1632 = vmatprep.mubr.f32.mxu0 0.0
      %1633 = vmatmul.mubr.f32.gmra.mrb[0].mxu0 %v1530
      %v1634 = vpop.f32.mrb[0].mxu0
      %v1635 = vadd.f32 0.0, %v1634
      %v1636 = vpop.f32.mrb[0].mxu0
      %1637 = vmatprep.mubr.f32.mxu0 0.0
      %1638 = vmatmul.mubr.f32.gmra.mrb[0].mxu0 %v1533
      %v1639 = vpop.f32.mrb[0].mxu0
      %v1640 = vadd.f32 0.0, %v1639
      %v1641 = vpop.f32.mrb[0].mxu0
      %1642 = vdwg.mxu0
      %v1643 = vadd.f32 %v1493, %v1605
      %v1644 = vadd.f32 %v1494, %v1610
      %v1645 = vadd.f32 %v1495, %v1615
      %v1646 = vadd.f32 %v1496, %v1620
      %v1647 = vadd.f32 %v1497, %v1625
      %v1648 = vadd.f32 %v1498, %v1630
      %v1649 = vadd.f32 %v1499, %v1635
      %v1650 = vadd.f32 %v1500, %v1640
      %vm1651 = vcmask 64512
      %v1652 = vsel %vm1651, %v1643, 0.0
      %v1653 = vsel %vm1651, %v1644, 0.0
      %v1654 = vadd.f32 %v1652, %v1653
      %v1655 = vsel %vm1651, %v1645, 0.0
      %v1656 = vadd.f32 %v1654, %v1655
      %v1657 = vsel %vm1651, %v1646, 0.0
      %v1658 = vadd.f32 %v1656, %v1657
      %v1659 = vsel %vm1651, %v1647, 0.0
      %v1660 = vadd.f32 %v1658, %v1659
      %v1661 = vsel %vm1651, %v1648, 0.0
      %v1662 = vadd.f32 %v1660, %v1661
      %v1663 = vsel %vm1651, %v1649, 0.0
      %v1664 = vadd.f32 %v1662, %v1663
      %v1665 = vsel %vm1651, %v1650, 0.0
      %v1666 = vadd.f32 %v1664, %v1665
      %v1667 = vrot.slane %v1666, 4
      %v1668 = vadd.f32 %v1666, %v1667
      %v1669 = vrot.slane %v1668, 2
      %v1670 = vadd.f32 %v1668, %v1669
      %v1671 = vrot.slane %v1670, 1
      %v1672 = vadd.f32 %v1670, %v1671
      %v1673 = vrcp.pop 64.0
      %v1674 = vmul.f32 %v1672, %v1673
      %v1675 = vsub.f32 %v1643, %v1674
      %v1676 = vsub.f32 %v1644, %v1674
      %v1677 = vsub.f32 %v1645, %v1674
      %v1678 = vsub.f32 %v1646, %v1674
      %v1679 = vsub.f32 %v1647, %v1674
      %v1680 = vsub.f32 %v1648, %v1674
      %v1681 = vsub.f32 %v1649, %v1674
      %v1682 = vsub.f32 %v1650, %v1674
      %v1683 = vmul.f32 %v1675, %v1675
      %v1684 = vmul.f32 %v1676, %v1676
      %v1685 = vmul.f32 %v1677, %v1677
      %v1686 = vmul.f32 %v1678, %v1678
      %v1687 = vmul.f32 %v1679, %v1679
      %v1688 = vmul.f32 %v1680, %v1680
      %v1689 = vmul.f32 %v1681, %v1681
      %v1690 = vmul.f32 %v1682, %v1682
      %v1691 = vsel %vm1651, %v1683, 0.0
      %v1692 = vsel %vm1651, %v1684, 0.0
      %v1693 = vadd.f32 %v1691, %v1692
      %v1694 = vsel %vm1651, %v1685, 0.0
      %v1695 = vadd.f32 %v1693, %v1694
      %v1696 = vsel %vm1651, %v1686, 0.0
      %v1697 = vadd.f32 %v1695, %v1696
      %v1698 = vsel %vm1651, %v1687, 0.0
      %v1699 = vadd.f32 %v1697, %v1698
      %v1700 = vsel %vm1651, %v1688, 0.0
      %v1701 = vadd.f32 %v1699, %v1700
      %v1702 = vsel %vm1651, %v1689, 0.0
      %v1703 = vadd.f32 %v1701, %v1702
      %v1704 = vsel %vm1651, %v1690, 0.0
      %v1705 = vadd.f32 %v1703, %v1704
      %v1706 = vrot.slane %v1705, 4
      %v1707 = vadd.f32 %v1705, %v1706
      %v1708 = vrot.slane %v1707, 2
      %v1709 = vadd.f32 %v1707, %v1708
      %v1710 = vrot.slane %v1709, 1
      %v1711 = vadd.f32 %v1709, %v1710
      %v1712 = vmul.f32 %v1711, %v1673
      %v1713 = vadd.f32 %v1712, 1e-05
      %v1714 = vrsqrt.pop %v1713
      %v1715 = vmul.f32 %v1675, %v1714
      %v1716 = vmul.f32 %v1676, %v1714
      %v1717 = vmul.f32 %v1677, %v1714
      %v1718 = vmul.f32 %v1678, %v1714
      %v1719 = vmul.f32 %v1679, %v1714
      %v1720 = vmul.f32 %v1680, %v1714
      %v1721 = vmul.f32 %v1681, %v1714
      %v1722 = vmul.f32 %v1682, %v1714
      %v1723 = vld [vmem:[%s3] sm:$0x1]
      %v1725 = vlaneseq
      %v1726 = vshrl.u32 %v1725, 7
      %v1727 = vsub.s32 0, %v1726
      %v1728 = vrot.slane %v1723, %v1727
      %v1730 = vmul.f32 %v1715, %v1728
      %v1731 = vmul.f32 %v1716, %v1728
      %v1732 = vmul.f32 %v1717, %v1728
      %v1733 = vmul.f32 %v1718, %v1728
      %v1734 = vmul.f32 %v1719, %v1728
      %v1735 = vmul.f32 %v1720, %v1728
      %v1736 = vmul.f32 %v1721, %v1728
      %v1737 = vmul.f32 %v1722, %v1728
      %v1738 = vld [vmem:[%s4] sm:$0x1]
      %v1740 = vlaneseq
      %v1741 = vshrl.u32 %v1740, 7
      %v1742 = vsub.s32 0, %v1741
      %v1743 = vrot.slane %v1738, %v1742
      %v1745 = vadd.f32 %v1730, %v1743
      %v1746 = vadd.f32 %v1731, %v1743
      %v1747 = vadd.f32 %v1732, %v1743
      %v1748 = vadd.f32 %v1733, %v1743
      %v1749 = vadd.f32 %v1734, %v1743
      %v1750 = vadd.f32 %v1735, %v1743
      %v1751 = vadd.f32 %v1736, %v1743
      %v1752 = vadd.f32 %v1737, %v1743
      %v1753 = vmax.f32 %v1745, 0.0
      %v1754 = vmax.f32 %v1746, 0.0
      %v1755 = vmax.f32 %v1747, 0.0
      %v1756 = vmax.f32 %v1748, 0.0
      %v1757 = vmax.f32 %v1749, 0.0
      %v1758 = vmax.f32 %v1750, 0.0
      %v1759 = vmax.f32 %v1751, 0.0
      %v1760 = vmax.f32 %v1752, 0.0
      %1761 = vst.msk [vmem:[#allocation3] sm:$0xff] %vm1651, 0.0
      %vm1762 = vcmask 58368
      %1763 = vst.msk [vmem:[#allocation3 + $0x8] sm:$0x3] %vm1762, 0.0
      %1764 = vst.msk [vmem:[#allocation3 + $0x10] sm:$0xff] %vm1651, 0.0
      %1765 = vst.msk [vmem:[#allocation3 + $0x18] sm:$0x3] %vm1762, 0.0
      %1766 = vst.msk [vmem:[#allocation3 + $0x20] sm:$0xff] %vm1651, 0.0
      %1767 = vst.msk [vmem:[#allocation3 + $0x28] sm:$0x3] %vm1762, 0.0
      %1768 = vst.msk [vmem:[#allocation3 + $0x30] sm:$0xff] %vm1651, 0.0
      %1769 = vst.msk [vmem:[#allocation3 + $0x38] sm:$0x3] %vm1762, 0.0
      %1770 = vst.msk [vmem:[#allocation3 + $0x40] sm:$0xff] %vm1651, 0.0
      %1771 = vst.msk [vmem:[#allocation3 + $0x48] sm:$0x3] %vm1762, 0.0
      %1772 = vst.msk [vmem:[#allocation3 + $0x50] sm:$0xff] %vm1651, 0.0
      %1773 = vst.msk [vmem:[#allocation3 + $0x58] sm:$0x3] %vm1762, 0.0
      %1774 = vst.msk [vmem:[#allocation3 + $0x60] sm:$0xff] %vm1651, 0.0
      %1775 = vst.msk [vmem:[#allocation3 + $0x68] sm:$0x3] %vm1762, 0.0
      %1776 = vst.msk [vmem:[#allocation3 + $0x70] sm:$0xff] %vm1651, 0.0
      %1777 = vst.msk [vmem:[#allocation3 + $0x78] sm:$0x3] %vm1762, 0.0
      %1778 = vst.msk [vmem:[#allocation3 + $0x80] sm:$0xff] %vm1651, 0.0
      %1779 = vst.msk [vmem:[#allocation3 + $0x88] sm:$0x3] %vm1762, 0.0
      %1780 = vst.msk [vmem:[#allocation3 + $0x90] sm:$0xff] %vm1651, 0.0
      %1781 = vst.msk [vmem:[#allocation3 + $0x98] sm:$0x3] %vm1762, 0.0
      %s1782 = scalar_lea.vmem [#allocation3], 16
      %1783 = vst.msk [vmem:[%s1782 + $0x1] sm:$0xff] %vm1651, %v1753
      %1784 = vst.msk [vmem:[%s1782 + $0x11] sm:$0xff] %vm1651, %v1754
      %1785 = vst.msk [vmem:[%s1782 + $0x21] sm:$0xff] %vm1651, %v1755
      %1786 = vst.msk [vmem:[%s1782 + $0x31] sm:$0xff] %vm1651, %v1756
      %1787 = vst.msk [vmem:[%s1782 + $0x41] sm:$0xff] %vm1651, %v1757
      %1788 = vst.msk [vmem:[%s1782 + $0x51] sm:$0xff] %vm1651, %v1758
      %1789 = vst.msk [vmem:[%s1782 + $0x61] sm:$0xff] %vm1651, %v1759
      %1790 = vst.msk [vmem:[%s1782 + $0x71] sm:$0xff] %vm1651, %v1760
      %v1791 = vld [vmem:[#allocation3] sm:$0xff]
      %v1792 = vld [vmem:[#allocation3 + $0x10] sm:$0xff]
      %v1793 = vld [vmem:[#allocation3 + $0x20] sm:$0xff]
      %v1794 = vld [vmem:[#allocation3 + $0x30] sm:$0xff]
      %v1795 = vld [vmem:[#allocation3 + $0x40] sm:$0xff]
      %v1796 = vld [vmem:[#allocation3 + $0x50] sm:$0xff]
      %v1797 = vld [vmem:[#allocation3 + $0x60] sm:$0xff]
      %v1798 = vld [vmem:[#allocation3 + $0x70] sm:$0xff]
      %v1799 = vld [vmem:[%s2] sm:$0xff]
      %v1800 = vld [vmem:[#allocation3 + $0x1] sm:$0xff]
      %v1801 = vld [vmem:[#allocation3 + $0x11] sm:$0xff]
      %v1802 = vld [vmem:[#allocation3 + $0x21] sm:$0xff]
      %v1803 = vld [vmem:[#allocation3 + $0x31] sm:$0xff]
      %v1804 = vld [vmem:[#allocation3 + $0x41] sm:$0xff]
      %v1805 = vld [vmem:[#allocation3 + $0x51] sm:$0xff]
      %v1806 = vld [vmem:[#allocation3 + $0x61] sm:$0xff]
      %v1807 = vld [vmem:[#allocation3 + $0x71] sm:$0xff]
      %s1808 = scalar_lea.vmem %s2, 8
      %v1809 = vld [vmem:[%s1808] sm:$0xff]
      %v1811 = vsel %vm1651, %v1800, 0
      %v1814 = vsel %vm1651, %v1801, 0
      %v1817 = vsel %vm1651, %v1802, 0
      %v1820 = vsel %vm1651, %v1803, 0
      %v1823 = vsel %vm1651, %v1804, 0
      %v1826 = vsel %vm1651, %v1805, 0
      %v1829 = vsel %vm1651, %v1806, 0
      %v1832 = vsel %vm1651, %v1807, 0
      %1834 = vmatprep.subr.mxu0 0.0
      %1835 = vmatpush1.msra.mxu0 %v1809
      %1836 = vmatprep.subr.mxu0 0.0
      %1837 = vmatpush1.msra.mxu0 0.0
      %1838 = vmatprep.subr.mxu0 0.0
      %1839 = vmatpush1.msra.mxu0 0.0
      %1840 = vmatprep.subr.mxu0 0.0
      %1841 = vmatpush1.msra.mxu0 0.0
      %1842 = vmatprep.subr.mxu0 0.0
      %1843 = vmatpush1.msra.mxu0 0.0
      %1844 = vmatprep.subr.mxu0 0.0
      %1845 = vmatpush1.msra.mxu0 0.0
      %1846 = vmatprep.subr.mxu0 0.0
      %1847 = vmatpush1.msra.mxu0 0.0
      %1848 = vmatprep.subr.mxu0 0.0
      %1849 = vmatpush1.msra.mxu0 0.0
      %1850 = vmatprep.subr.mxu0 0.0
      %1851 = vmatpush1.msra.mxu0 0.0
      %1852 = vmatprep.subr.mxu0 0.0
      %1853 = vmatpush1.msra.mxu0 0.0
      %1854 = vmatprep.subr.mxu0 0.0
      %1855 = vmatpush1.msra.mxu0 0.0
      %1856 = vmatprep.subr.mxu0 0.0
      %1857 = vmatpush1.msra.mxu0 0.0
      %1858 = vmatprep.subr.mxu0 0.0
      %1859 = vmatpush1.msra.mxu0 0.0
      %1860 = vmatprep.subr.mxu0 0.0
      %1861 = vmatpush1.msra.mxu0 0.0
      %1862 = vmatprep.subr.mxu0 0.0
      %1863 = vmatpush1.msra.mxu0 0.0
      %1864 = vmatprep.subr.mxu0 0.0
      %1865 = vmatpush1.msra.mxu0 0.0
      %1866 = vmatprep.subr.mxu0 0.0
      %1867 = vmatpush1.msra.mxu0 0.0
      %1868 = vmatprep.subr.mxu0 0.0
      %1869 = vmatpush1.msra.mxu0 0.0
      %1870 = vmatprep.subr.mxu0 0.0
      %1871 = vmatpush1.msra.mxu0 0.0
      %1872 = vmatprep.subr.mxu0 0.0
      %1873 = vmatpush1.msra.mxu0 0.0
      %1874 = vmatprep.subr.mxu0 0.0
      %1875 = vmatpush1.msra.mxu0 0.0
      %1876 = vmatprep.subr.mxu0 0.0
      %1877 = vmatpush1.msra.mxu0 0.0
      %1878 = vmatprep.subr.mxu0 0.0
      %1879 = vmatpush1.msra.mxu0 0.0
      %1880 = vmatprep.subr.mxu0 0.0
      %1881 = vmatpush1.msra.mxu0 0.0
      %1882 = vmatprep.subr.mxu0 0.0
      %1883 = vmatpush1.msra.mxu0 0.0
      %1884 = vmatprep.subr.mxu0 0.0
      %1885 = vmatpush1.msra.mxu0 0.0
      %1886 = vmatprep.subr.mxu0 0.0
      %1887 = vmatpush1.msra.mxu0 0.0
      %1888 = vmatprep.subr.mxu0 0.0
      %1889 = vmatpush1.msra.mxu0 0.0
      %1890 = vmatprep.subr.mxu0 0.0
      %1891 = vmatpush1.msra.mxu0 0.0
      %1892 = vmatprep.subr.mxu0 0.0
      %1893 = vmatpush1.msra.mxu0 0.0
      %1894 = vmatprep.subr.mxu0 0.0
      %1895 = vmatpush1.msra.mxu0 0.0
      %1896 = vmatprep.subr.mxu0 0.0
      %1897 = vmatpush1.msra.mxu0 0.0
      %1898 = vmatprep.mubr.f32.mxu0 0.0
      %1899 = vmatmul.mubr.f32.gmra.mrb[0].mxu0 %v1811
      %v1900 = vpop.f32.mrb[0].mxu0
      %v1901 = vadd.f32 0.0, %v1900
      %v1902 = vpop.f32.mrb[0].mxu0
      %1903 = vmatprep.mubr.f32.mxu0 0.0
      %1904 = vmatmul.mubr.f32.gmra.mrb[0].mxu0 %v1814
      %v1905 = vpop.f32.mrb[0].mxu0
      %v1906 = vadd.f32 0.0, %v1905
      %v1907 = vpop.f32.mrb[0].mxu0
      %1908 = vmatprep.mubr.f32.mxu0 0.0
      %1909 = vmatmul.mubr.f32.gmra.mrb[0].mxu0 %v1817
      %v1910 = vpop.f32.mrb[0].mxu0
      %v1911 = vadd.f32 0.0, %v1910
      %v1912 = vpop.f32.mrb[0].mxu0
      %1913 = vmatprep.mubr.f32.mxu0 0.0
      %1914 = vmatmul.mubr.f32.gmra.mrb[0].mxu0 %v1820
      %v1915 = vpop.f32.mrb[0].mxu0
      %v1916 = vadd.f32 0.0, %v1915
      %v1917 = vpop.f32.mrb[0].mxu0
      %1918 = vmatprep.mubr.f32.mxu0 0.0
      %1919 = vmatmul.mubr.f32.gmra.mrb[0].mxu0 %v1823
      %v1920 = vpop.f32.mrb[0].mxu0
      %v1921 = vadd.f32 0.0, %v1920
      %v1922 = vpop.f32.mrb[0].mxu0
      %1923 = vmatprep.mubr.f32.mxu0 0.0
      %1924 = vmatmul.mubr.f32.gmra.mrb[0].mxu0 %v1826
      %v1925 = vpop.f32.mrb[0].mxu0
      %v1926 = vadd.f32 0.0, %v1925
      %v1927 = vpop.f32.mrb[0].mxu0
      %1928 = vmatprep.mubr.f32.mxu0 0.0
      %1929 = vmatmul.mubr.f32.gmra.mrb[0].mxu0 %v1829
      %v1930 = vpop.f32.mrb[0].mxu0
      %v1931 = vadd.f32 0.0, %v1930
      %v1932 = vpop.f32.mrb[0].mxu0
      %1933 = vmatprep.mubr.f32.mxu0 0.0
      %1934 = vmatmul.mubr.f32.gmra.mrb[0].mxu0 %v1832
      %v1935 = vpop.f32.mrb[0].mxu0
      %v1936 = vadd.f32 0.0, %v1935
      %v1937 = vpop.f32.mrb[0].mxu0
      %1938 = vdwg.mxu0
      %v1940 = vsel %vm1651, %v1791, 0
      %v1943 = vsel %vm1651, %v1792, 0
      %v1946 = vsel %vm1651, %v1793, 0
      %v1949 = vsel %vm1651, %v1794, 0
      %v1952 = vsel %vm1651, %v1795, 0
      %v1955 = vsel %vm1651, %v1796, 0
      %v1958 = vsel %vm1651, %v1797, 0
      %v1961 = vsel %vm1651, %v1798, 0
      %1963 = vmatprep.subr.mxu0 0.0
      %1964 = vmatpush1.msra.mxu0 %v1799
      %1965 = vmatprep.subr.mxu0 0.0
      %1966 = vmatpush1.msra.mxu0 0.0
      %1967 = vmatprep.subr.mxu0 0.0
      %1968 = vmatpush1.msra.mxu0 0.0
      %1969 = vmatprep.subr.mxu0 0.0
      %1970 = vmatpush1.msra.mxu0 0.0
      %1971 = vmatprep.subr.mxu0 0.0
      %1972 = vmatpush1.msra.mxu0 0.0
      %1973 = vmatprep.subr.mxu0 0.0
      %1974 = vmatpush1.msra.mxu0 0.0
      %1975 = vmatprep.subr.mxu0 0.0
      %1976 = vmatpush1.msra.mxu0 0.0
      %1977 = vmatprep.subr.mxu0 0.0
      %1978 = vmatpush1.msra.mxu0 0.0
      %1979 = vmatprep.subr.mxu0 0.0
      %1980 = vmatpush1.msra.mxu0 0.0
      %1981 = vmatprep.subr.mxu0 0.0
      %1982 = vmatpush1.msra.mxu0 0.0
      %1983 = vmatprep.subr.mxu0 0.0
      %1984 = vmatpush1.msra.mxu0 0.0
      %1985 = vmatprep.subr.mxu0 0.0
      %1986 = vmatpush1.msra.mxu0 0.0
      %1987 = vmatprep.subr.mxu0 0.0
      %1988 = vmatpush1.msra.mxu0 0.0
      %1989 = vmatprep.subr.mxu0 0.0
      %1990 = vmatpush1.msra.mxu0 0.0
      %1991 = vmatprep.subr.mxu0 0.0
      %1992 = vmatpush1.msra.mxu0 0.0
      %1993 = vmatprep.subr.mxu0 0.0
      %1994 = vmatpush1.msra.mxu0 0.0
      %1995 = vmatprep.subr.mxu0 0.0
      %1996 = vmatpush1.msra.mxu0 0.0
      %1997 = vmatprep.subr.mxu0 0.0
      %1998 = vmatpush1.msra.mxu0 0.0
      %1999 = vmatprep.subr.mxu0 0.0
      %2000 = vmatpush1.msra.mxu0 0.0
      %2001 = vmatprep.subr.mxu0 0.0
      %2002 = vmatpush1.msra.mxu0 0.0
      %2003 = vmatprep.subr.mxu0 0.0
      %2004 = vmatpush1.msra.mxu0 0.0
      %2005 = vmatprep.subr.mxu0 0.0
      %2006 = vmatpush1.msra.mxu0 0.0
      %2007 = vmatprep.subr.mxu0 0.0
      %2008 = vmatpush1.msra.mxu0 0.0
      %2009 = vmatprep.subr.mxu0 0.0
      %2010 = vmatpush1.msra.mxu0 0.0
      %2011 = vmatprep.subr.mxu0 0.0
      %2012 = vmatpush1.msra.mxu0 0.0
      %2013 = vmatprep.subr.mxu0 0.0
      %2014 = vmatpush1.msra.mxu0 0.0
      %2015 = vmatprep.subr.mxu0 0.0
      %2016 = vmatpush1.msra.mxu0 0.0
      %2017 = vmatprep.subr.mxu0 0.0
      %2018 = vmatpush1.msra.mxu0 0.0
      %2019 = vmatprep.subr.mxu0 0.0
      %2020 = vmatpush1.msra.mxu0 0.0
      %2021 = vmatprep.subr.mxu0 0.0
      %2022 = vmatpush1.msra.mxu0 0.0
      %2023 = vmatprep.subr.mxu0 0.0
      %2024 = vmatpush1.msra.mxu0 0.0
      %2025 = vmatprep.subr.mxu0 0.0
      %2026 = vmatpush1.msra.mxu0 0.0
      %2027 = vmatprep.mubr.f32.mxu0 0.0
      %2028 = vmatmul.mubr.f32.gmra.mrb[0].mxu0 %v1940
      %v2029 = vpop.f32.mrb[0].mxu0
      %v2030 = vadd.f32 %v1901, %v2029
      %v2031 = vpop.f32.mrb[0].mxu0
      %2032 = vmatprep.mubr.f32.mxu0 0.0
      %2033 = vmatmul.mubr.f32.gmra.mrb[0].mxu0 %v1943
      %v2034 = vpop.f32.mrb[0].mxu0
      %v2035 = vadd.f32 %v1906, %v2034
      %v2036 = vpop.f32.mrb[0].mxu0
      %2037 = vmatprep.mubr.f32.mxu0 0.0
      %2038 = vmatmul.mubr.f32.gmra.mrb[0].mxu0 %v1946
      %v2039 = vpop.f32.mrb[0].mxu0
      %v2040 = vadd.f32 %v1911, %v2039
      %v2041 = vpop.f32.mrb[0].mxu0
      %2042 = vmatprep.mubr.f32.mxu0 0.0
      %2043 = vmatmul.mubr.f32.gmra.mrb[0].mxu0 %v1949
      %v2044 = vpop.f32.mrb[0].mxu0
      %v2045 = vadd.f32 %v1916, %v2044
      %v2046 = vpop.f32.mrb[0].mxu0
      %2047 = vmatprep.mubr.f32.mxu0 0.0
      %2048 = vmatmul.mubr.f32.gmra.mrb[0].mxu0 %v1952
      %v2049 = vpop.f32.mrb[0].mxu0
      %v2050 = vadd.f32 %v1921, %v2049
      %v2051 = vpop.f32.mrb[0].mxu0
      %2052 = vmatprep.mubr.f32.mxu0 0.0
      %2053 = vmatmul.mubr.f32.gmra.mrb[0].mxu0 %v1955
      %v2054 = vpop.f32.mrb[0].mxu0
      %v2055 = vadd.f32 %v1926, %v2054
      %v2056 = vpop.f32.mrb[0].mxu0
      %2057 = vmatprep.mubr.f32.mxu0 0.0
      %2058 = vmatmul.mubr.f32.gmra.mrb[0].mxu0 %v1958
      %v2059 = vpop.f32.mrb[0].mxu0
      %v2060 = vadd.f32 %v1931, %v2059
      %v2061 = vpop.f32.mrb[0].mxu0
      %2062 = vmatprep.mubr.f32.mxu0 0.0
      %2063 = vmatmul.mubr.f32.gmra.mrb[0].mxu0 %v1961
      %v2064 = vpop.f32.mrb[0].mxu0
      %v2065 = vadd.f32 %v1936, %v2064
      %v2066 = vpop.f32.mrb[0].mxu0
      %2067 = vdwg.mxu0
      %v2068 = vld [vmem:[#allocation3 + $0x2] sm:$0xff]
      %v2069 = vld [vmem:[#allocation3 + $0x12] sm:$0xff]
      %v2070 = vld [vmem:[#allocation3 + $0x22] sm:$0xff]
      %v2071 = vld [vmem:[#allocation3 + $0x32] sm:$0xff]
      %v2072 = vld [vmem:[#allocation3 + $0x42] sm:$0xff]
      %v2073 = vld [vmem:[#allocation3 + $0x52] sm:$0xff]
      %v2074 = vld [vmem:[#allocation3 + $0x62] sm:$0xff]
      %v2075 = vld [vmem:[#allocation3 + $0x72] sm:$0xff]
      %s2076 = scalar_lea.vmem %s2, 16
      %v2077 = vld [vmem:[%s2076] sm:$0xff]
      %v2079 = vsel %vm1651, %v2068, 0
      %v2082 = vsel %vm1651, %v2069, 0
      %v2085 = vsel %vm1651, %v2070, 0
      %v2088 = vsel %vm1651, %v2071, 0
      %v2091 = vsel %vm1651, %v2072, 0
      %v2094 = vsel %vm1651, %v2073, 0
      %v2097 = vsel %vm1651, %v2074, 0
      %v2100 = vsel %vm1651, %v2075, 0
      %2102 = vmatprep.subr.mxu0 0.0
      %2103 = vmatpush1.msra.mxu0 %v2077
      %2104 = vmatprep.subr.mxu0 0.0
      %2105 = vmatpush1.msra.mxu0 0.0
      %2106 = vmatprep.subr.mxu0 0.0
      %2107 = vmatpush1.msra.mxu0 0.0
      %2108 = vmatprep.subr.mxu0 0.0
      %2109 = vmatpush1.msra.mxu0 0.0
      %2110 = vmatprep.subr.mxu0 0.0
      %2111 = vmatpush1.msra.mxu0 0.0
      %2112 = vmatprep.subr.mxu0 0.0
      %2113 = vmatpush1.msra.mxu0 0.0
      %2114 = vmatprep.subr.mxu0 0.0
      %2115 = vmatpush1.msra.mxu0 0.0
      %2116 = vmatprep.subr.mxu0 0.0
      %2117 = vmatpush1.msra.mxu0 0.0
      %2118 = vmatprep.subr.mxu0 0.0
      %2119 = vmatpush1.msra.mxu0 0.0
      %2120 = vmatprep.subr.mxu0 0.0
      %2121 = vmatpush1.msra.mxu0 0.0
      %2122 = vmatprep.subr.mxu0 0.0
      %2123 = vmatpush1.msra.mxu0 0.0
      %2124 = vmatprep.subr.mxu0 0.0
      %2125 = vmatpush1.msra.mxu0 0.0
      %2126 = vmatprep.subr.mxu0 0.0
      %2127 = vmatpush1.msra.mxu0 0.0
      %2128 = vmatprep.subr.mxu0 0.0
      %2129 = vmatpush1.msra.mxu0 0.0
      %2130 = vmatprep.subr.mxu0 0.0
      %2131 = vmatpush1.msra.mxu0 0.0
      %2132 = vmatprep.subr.mxu0 0.0
      %2133 = vmatpush1.msra.mxu0 0.0
      %2134 = vmatprep.subr.mxu0 0.0
      %2135 = vmatpush1.msra.mxu0 0.0
      %2136 = vmatprep.subr.mxu0 0.0
      %2137 = vmatpush1.msra.mxu0 0.0
      %2138 = vmatprep.subr.mxu0 0.0
      %2139 = vmatpush1.msra.mxu0 0.0
      %2140 = vmatprep.subr.mxu0 0.0
      %2141 = vmatpush1.msra.mxu0 0.0
      %2142 = vmatprep.subr.mxu0 0.0
      %2143 = vmatpush1.msra.mxu0 0.0
      %2144 = vmatprep.subr.mxu0 0.0
      %2145 = vmatpush1.msra.mxu0 0.0
      %2146 = vmatprep.subr.mxu0 0.0
      %2147 = vmatpush1.msra.mxu0 0.0
      %2148 = vmatprep.subr.mxu0 0.0
      %2149 = vmatpush1.msra.mxu0 0.0
      %2150 = vmatprep.subr.mxu0 0.0
      %2151 = vmatpush1.msra.mxu0 0.0
      %2152 = vmatprep.subr.mxu0 0.0
      %2153 = vmatpush1.msra.mxu0 0.0
      %2154 = vmatprep.subr.mxu0 0.0
      %2155 = vmatpush1.msra.mxu0 0.0
      %2156 = vmatprep.subr.mxu0 0.0
      %2157 = vmatpush1.msra.mxu0 0.0
      %2158 = vmatprep.subr.mxu0 0.0
      %2159 = vmatpush1.msra.mxu0 0.0
      %2160 = vmatprep.subr.mxu0 0.0
      %2161 = vmatpush1.msra.mxu0 0.0
      %2162 = vmatprep.subr.mxu0 0.0
      %2163 = vmatpush1.msra.mxu0 0.0
      %2164 = vmatprep.subr.mxu0 0.0
      %2165 = vmatpush1.msra.mxu0 0.0
      %2166 = vmatprep.mubr.f32.mxu0 0.0
      %2167 = vmatmul.mubr.f32.gmra.mrb[0].mxu0 %v2079
      %v2168 = vpop.f32.mrb[0].mxu0
      %v2169 = vadd.f32 0.0, %v2168
      %v2170 = vpop.f32.mrb[0].mxu0
      %2171 = vmatprep.mubr.f32.mxu0 0.0
      %2172 = vmatmul.mubr.f32.gmra.mrb[0].mxu0 %v2082
      %v2173 = vpop.f32.mrb[0].mxu0
      %v2174 = vadd.f32 0.0, %v2173
      %v2175 = vpop.f32.mrb[0].mxu0
      %2176 = vmatprep.mubr.f32.mxu0 0.0
      %2177 = vmatmul.mubr.f32.gmra.mrb[0].mxu0 %v2085
      %v2178 = vpop.f32.mrb[0].mxu0
      %v2179 = vadd.f32 0.0, %v2178
      %v2180 = vpop.f32.mrb[0].mxu0
      %2181 = vmatprep.mubr.f32.mxu0 0.0
      %2182 = vmatmul.mubr.f32.gmra.mrb[0].mxu0 %v2088
      %v2183 = vpop.f32.mrb[0].mxu0
      %v2184 = vadd.f32 0.0, %v2183
      %v2185 = vpop.f32.mrb[0].mxu0
      %2186 = vmatprep.mubr.f32.mxu0 0.0
      %2187 = vmatmul.mubr.f32.gmra.mrb[0].mxu0 %v2091
      %v2188 = vpop.f32.mrb[0].mxu0
      %v2189 = vadd.f32 0.0, %v2188
      %v2190 = vpop.f32.mrb[0].mxu0
      %2191 = vmatprep.mubr.f32.mxu0 0.0
      %2192 = vmatmul.mubr.f32.gmra.mrb[0].mxu0 %v2094
      %v2193 = vpop.f32.mrb[0].mxu0
      %v2194 = vadd.f32 0.0, %v2193
      %v2195 = vpop.f32.mrb[0].mxu0
      %2196 = vmatprep.mubr.f32.mxu0 0.0
      %2197 = vmatmul.mubr.f32.gmra.mrb[0].mxu0 %v2097
      %v2198 = vpop.f32.mrb[0].mxu0
      %v2199 = vadd.f32 0.0, %v2198
      %v2200 = vpop.f32.mrb[0].mxu0
      %2201 = vmatprep.mubr.f32.mxu0 0.0
      %2202 = vmatmul.mubr.f32.gmra.mrb[0].mxu0 %v2100
      %v2203 = vpop.f32.mrb[0].mxu0
      %v2204 = vadd.f32 0.0, %v2203
      %v2205 = vpop.f32.mrb[0].mxu0
      %2206 = vdwg.mxu0
      %v2207 = vadd.f32 %v2030, %v2169
      %v2208 = vadd.f32 %v2035, %v2174
      %v2209 = vadd.f32 %v2040, %v2179
      %v2210 = vadd.f32 %v2045, %v2184
      %v2211 = vadd.f32 %v2050, %v2189
      %v2212 = vadd.f32 %v2055, %v2194
      %v2213 = vadd.f32 %v2060, %v2199
      %v2214 = vadd.f32 %v2065, %v2204
      %v2215 = vld [vmem:[%s1782] sm:$0xff]
      %v2216 = vld [vmem:[%s1782 + $0x10] sm:$0xff]
      %v2217 = vld [vmem:[%s1782 + $0x20] sm:$0xff]
      %v2218 = vld [vmem:[%s1782 + $0x30] sm:$0xff]
      %v2219 = vld [vmem:[%s1782 + $0x40] sm:$0xff]
      %v2220 = vld [vmem:[%s1782 + $0x50] sm:$0xff]
      %v2221 = vld [vmem:[%s1782 + $0x60] sm:$0xff]
      %v2222 = vld [vmem:[%s1782 + $0x70] sm:$0xff]
      %s2223 = scalar_lea.vmem %s2, 24
      %v2224 = vld [vmem:[%s2223] sm:$0xff]
      %v2226 = vsel %vm1651, %v2215, 0
      %v2229 = vsel %vm1651, %v2216, 0
      %v2232 = vsel %vm1651, %v2217, 0
      %v2235 = vsel %vm1651, %v2218, 0
      %v2238 = vsel %vm1651, %v2219, 0
      %v2241 = vsel %vm1651, %v2220, 0
      %v2244 = vsel %vm1651, %v2221, 0
      %v2247 = vsel %vm1651, %v2222, 0
      %2249 = vmatprep.subr.mxu0 0.0
      %2250 = vmatpush1.msra.mxu0 %v2224
      %2251 = vmatprep.subr.mxu0 0.0
      %2252 = vmatpush1.msra.mxu0 0.0
      %2253 = vmatprep.subr.mxu0 0.0
      %2254 = vmatpush1.msra.mxu0 0.0
      %2255 = vmatprep.subr.mxu0 0.0
      %2256 = vmatpush1.msra.mxu0 0.0
      %2257 = vmatprep.subr.mxu0 0.0
      %2258 = vmatpush1.msra.mxu0 0.0
      %2259 = vmatprep.subr.mxu0 0.0
      %2260 = vmatpush1.msra.mxu0 0.0
      %2261 = vmatprep.subr.mxu0 0.0
      %2262 = vmatpush1.msra.mxu0 0.0
      %2263 = vmatprep.subr.mxu0 0.0
      %2264 = vmatpush1.msra.mxu0 0.0
      %2265 = vmatprep.subr.mxu0 0.0
      %2266 = vmatpush1.msra.mxu0 0.0
      %2267 = vmatprep.subr.mxu0 0.0
      %2268 = vmatpush1.msra.mxu0 0.0
      %2269 = vmatprep.subr.mxu0 0.0
      %2270 = vmatpush1.msra.mxu0 0.0
      %2271 = vmatprep.subr.mxu0 0.0
      %2272 = vmatpush1.msra.mxu0 0.0
      %2273 = vmatprep.subr.mxu0 0.0
      %2274 = vmatpush1.msra.mxu0 0.0
      %2275 = vmatprep.subr.mxu0 0.0
      %2276 = vmatpush1.msra.mxu0 0.0
      %2277 = vmatprep.subr.mxu0 0.0
      %2278 = vmatpush1.msra.mxu0 0.0
      %2279 = vmatprep.subr.mxu0 0.0
      %2280 = vmatpush1.msra.mxu0 0.0
      %2281 = vmatprep.subr.mxu0 0.0
      %2282 = vmatpush1.msra.mxu0 0.0
      %2283 = vmatprep.subr.mxu0 0.0
      %2284 = vmatpush1.msra.mxu0 0.0
      %2285 = vmatprep.subr.mxu0 0.0
      %2286 = vmatpush1.msra.mxu0 0.0
      %2287 = vmatprep.subr.mxu0 0.0
      %2288 = vmatpush1.msra.mxu0 0.0
      %2289 = vmatprep.subr.mxu0 0.0
      %2290 = vmatpush1.msra.mxu0 0.0
      %2291 = vmatprep.subr.mxu0 0.0
      %2292 = vmatpush1.msra.mxu0 0.0
      %2293 = vmatprep.subr.mxu0 0.0
      %2294 = vmatpush1.msra.mxu0 0.0
      %2295 = vmatprep.subr.mxu0 0.0
      %2296 = vmatpush1.msra.mxu0 0.0
      %2297 = vmatprep.subr.mxu0 0.0
      %2298 = vmatpush1.msra.mxu0 0.0
      %2299 = vmatprep.subr.mxu0 0.0
      %2300 = vmatpush1.msra.mxu0 0.0
      %2301 = vmatprep.subr.mxu0 0.0
      %2302 = vmatpush1.msra.mxu0 0.0
      %2303 = vmatprep.subr.mxu0 0.0
      %2304 = vmatpush1.msra.mxu0 0.0
      %2305 = vmatprep.subr.mxu0 0.0
      %2306 = vmatpush1.msra.mxu0 0.0
      %2307 = vmatprep.subr.mxu0 0.0
      %2308 = vmatpush1.msra.mxu0 0.0
      %2309 = vmatprep.subr.mxu0 0.0
      %2310 = vmatpush1.msra.mxu0 0.0
      %2311 = vmatprep.subr.mxu0 0.0
      %2312 = vmatpush1.msra.mxu0 0.0
      %2313 = vmatprep.mubr.f32.mxu0 0.0
      %2314 = vmatmul.mubr.f32.gmra.mrb[0].mxu0 %v2226
      %v2315 = vpop.f32.mrb[0].mxu0
      %v2316 = vadd.f32 0.0, %v2315
      %v2317 = vpop.f32.mrb[0].mxu0
      %2318 = vmatprep.mubr.f32.mxu0 0.0
      %2319 = vmatmul.mubr.f32.gmra.mrb[0].mxu0 %v2229
      %v2320 = vpop.f32.mrb[0].mxu0
      %v2321 = vadd.f32 0.0, %v2320
      %v2322 = vpop.f32.mrb[0].mxu0
      %2323 = vmatprep.mubr.f32.mxu0 0.0
      %2324 = vmatmul.mubr.f32.gmra.mrb[0].mxu0 %v2232
      %v2325 = vpop.f32.mrb[0].mxu0
      %v2326 = vadd.f32 0.0, %v2325
      %v2327 = vpop.f32.mrb[0].mxu0
      %2328 = vmatprep.mubr.f32.mxu0 0.0
      %2329 = vmatmul.mubr.f32.gmra.mrb[0].mxu0 %v2235
      %v2330 = vpop.f32.mrb[0].mxu0
      %v2331 = vadd.f32 0.0, %v2330
      %v2332 = vpop.f32.mrb[0].mxu0
      %2333 = vmatprep.mubr.f32.mxu0 0.0
      %2334 = vmatmul.mubr.f32.gmra.mrb[0].mxu0 %v2238
      %v2335 = vpop.f32.mrb[0].mxu0
      %v2336 = vadd.f32 0.0, %v2335
      %v2337 = vpop.f32.mrb[0].mxu0
      %2338 = vmatprep.mubr.f32.mxu0 0.0
      %2339 = vmatmul.mubr.f32.gmra.mrb[0].mxu0 %v2241
      %v2340 = vpop.f32.mrb[0].mxu0
      %v2341 = vadd.f32 0.0, %v2340
      %v2342 = vpop.f32.mrb[0].mxu0
      %2343 = vmatprep.mubr.f32.mxu0 0.0
      %2344 = vmatmul.mubr.f32.gmra.mrb[0].mxu0 %v2244
      %v2345 = vpop.f32.mrb[0].mxu0
      %v2346 = vadd.f32 0.0, %v2345
      %v2347 = vpop.f32.mrb[0].mxu0
      %2348 = vmatprep.mubr.f32.mxu0 0.0
      %2349 = vmatmul.mubr.f32.gmra.mrb[0].mxu0 %v2247
      %v2350 = vpop.f32.mrb[0].mxu0
      %v2351 = vadd.f32 0.0, %v2350
      %v2352 = vpop.f32.mrb[0].mxu0
      %2353 = vdwg.mxu0
      %v2354 = vadd.f32 %v2207, %v2316
      %v2355 = vadd.f32 %v2208, %v2321
      %v2356 = vadd.f32 %v2209, %v2326
      %v2357 = vadd.f32 %v2210, %v2331
      %v2358 = vadd.f32 %v2211, %v2336
      %v2359 = vadd.f32 %v2212, %v2341
      %v2360 = vadd.f32 %v2213, %v2346
      %v2361 = vadd.f32 %v2214, %v2351
      %v2362 = vld [vmem:[%s1782 + $0x1] sm:$0xff]
      %v2363 = vld [vmem:[%s1782 + $0x11] sm:$0xff]
      %v2364 = vld [vmem:[%s1782 + $0x21] sm:$0xff]
      %v2365 = vld [vmem:[%s1782 + $0x31] sm:$0xff]
      %v2366 = vld [vmem:[%s1782 + $0x41] sm:$0xff]
      %v2367 = vld [vmem:[%s1782 + $0x51] sm:$0xff]
      %v2368 = vld [vmem:[%s1782 + $0x61] sm:$0xff]
      %v2369 = vld [vmem:[%s1782 + $0x71] sm:$0xff]
      %s2370 = scalar_lea.vmem %s2, 32
      %v2371 = vld [vmem:[%s2370] sm:$0xff]
      %v2373 = vsel %vm1651, %v2362, 0
      %v2376 = vsel %vm1651, %v2363, 0
      %v2379 = vsel %vm1651, %v2364, 0
      %v2382 = vsel %vm1651, %v2365, 0
      %v2385 = vsel %vm1651, %v2366, 0
      %v2388 = vsel %vm1651, %v2367, 0
      %v2391 = vsel %vm1651, %v2368, 0
      %v2394 = vsel %vm1651, %v2369, 0
      %2396 = vmatprep.subr.mxu0 0.0
      %2397 = vmatpush1.msra.mxu0 %v2371
      %2398 = vmatprep.subr.mxu0 0.0
      %2399 = vmatpush1.msra.mxu0 0.0
      %2400 = vmatprep.subr.mxu0 0.0
      %2401 = vmatpush1.msra.mxu0 0.0
      %2402 = vmatprep.subr.mxu0 0.0
      %2403 = vmatpush1.msra.mxu0 0.0
      %2404 = vmatprep.subr.mxu0 0.0
      %2405 = vmatpush1.msra.mxu0 0.0
      %2406 = vmatprep.subr.mxu0 0.0
      %2407 = vmatpush1.msra.mxu0 0.0
      %2408 = vmatprep.subr.mxu0 0.0
      %2409 = vmatpush1.msra.mxu0 0.0
      %2410 = vmatprep.subr.mxu0 0.0
      %2411 = vmatpush1.msra.mxu0 0.0
      %2412 = vmatprep.subr.mxu0 0.0
      %2413 = vmatpush1.msra.mxu0 0.0
      %2414 = vmatprep.subr.mxu0 0.0
      %2415 = vmatpush1.msra.mxu0 0.0
      %2416 = vmatprep.subr.mxu0 0.0
      %2417 = vmatpush1.msra.mxu0 0.0
      %2418 = vmatprep.subr.mxu0 0.0
      %2419 = vmatpush1.msra.mxu0 0.0
      %2420 = vmatprep.subr.mxu0 0.0
      %2421 = vmatpush1.msra.mxu0 0.0
      %2422 = vmatprep.subr.mxu0 0.0
      %2423 = vmatpush1.msra.mxu0 0.0
      %2424 = vmatprep.subr.mxu0 0.0
      %2425 = vmatpush1.msra.mxu0 0.0
      %2426 = vmatprep.subr.mxu0 0.0
      %2427 = vmatpush1.msra.mxu0 0.0
      %2428 = vmatprep.subr.mxu0 0.0
      %2429 = vmatpush1.msra.mxu0 0.0
      %2430 = vmatprep.subr.mxu0 0.0
      %2431 = vmatpush1.msra.mxu0 0.0
      %2432 = vmatprep.subr.mxu0 0.0
      %2433 = vmatpush1.msra.mxu0 0.0
      %2434 = vmatprep.subr.mxu0 0.0
      %2435 = vmatpush1.msra.mxu0 0.0
      %2436 = vmatprep.subr.mxu0 0.0
      %2437 = vmatpush1.msra.mxu0 0.0
      %2438 = vmatprep.subr.mxu0 0.0
      %2439 = vmatpush1.msra.mxu0 0.0
      %2440 = vmatprep.subr.mxu0 0.0
      %2441 = vmatpush1.msra.mxu0 0.0
      %2442 = vmatprep.subr.mxu0 0.0
      %2443 = vmatpush1.msra.mxu0 0.0
      %2444 = vmatprep.subr.mxu0 0.0
      %2445 = vmatpush1.msra.mxu0 0.0
      %2446 = vmatprep.subr.mxu0 0.0
      %2447 = vmatpush1.msra.mxu0 0.0
      %2448 = vmatprep.subr.mxu0 0.0
      %2449 = vmatpush1.msra.mxu0 0.0
      %2450 = vmatprep.subr.mxu0 0.0
      %2451 = vmatpush1.msra.mxu0 0.0
      %2452 = vmatprep.subr.mxu0 0.0
      %2453 = vmatpush1.msra.mxu0 0.0
      %2454 = vmatprep.subr.mxu0 0.0
      %2455 = vmatpush1.msra.mxu0 0.0
      %2456 = vmatprep.subr.mxu0 0.0
      %2457 = vmatpush1.msra.mxu0 0.0
      %2458 = vmatprep.subr.mxu0 0.0
      %2459 = vmatpush1.msra.mxu0 0.0
      %2460 = vmatprep.mubr.f32.mxu0 0.0
      %2461 = vmatmul.mubr.f32.gmra.mrb[0].mxu0 %v2373
      %v2462 = vpop.f32.mrb[0].mxu0
      %v2463 = vadd.f32 0.0, %v2462
      %v2464 = vpop.f32.mrb[0].mxu0
      %2465 = vmatprep.mubr.f32.mxu0 0.0
      %2466 = vmatmul.mubr.f32.gmra.mrb[0].mxu0 %v2376
      %v2467 = vpop.f32.mrb[0].mxu0
      %v2468 = vadd.f32 0.0, %v2467
      %v2469 = vpop.f32.mrb[0].mxu0
      %2470 = vmatprep.mubr.f32.mxu0 0.0
      %2471 = vmatmul.mubr.f32.gmra.mrb[0].mxu0 %v2379
      %v2472 = vpop.f32.mrb[0].mxu0
      %v2473 = vadd.f32 0.0, %v2472
      %v2474 = vpop.f32.mrb[0].mxu0
      %2475 = vmatprep.mubr.f32.mxu0 0.0
      %2476 = vmatmul.mubr.f32.gmra.mrb[0].mxu0 %v2382
      %v2477 = vpop.f32.mrb[0].mxu0
      %v2478 = vadd.f32 0.0, %v2477
      %v2479 = vpop.f32.mrb[0].mxu0
      %2480 = vmatprep.mubr.f32.mxu0 0.0
      %2481 = vmatmul.mubr.f32.gmra.mrb[0].mxu0 %v2385
      %v2482 = vpop.f32.mrb[0].mxu0
      %v2483 = vadd.f32 0.0, %v2482
      %v2484 = vpop.f32.mrb[0].mxu0
      %2485 = vmatprep.mubr.f32.mxu0 0.0
      %2486 = vmatmul.mubr.f32.gmra.mrb[0].mxu0 %v2388
      %v2487 = vpop.f32.mrb[0].mxu0
      %v2488 = vadd.f32 0.0, %v2487
      %v2489 = vpop.f32.mrb[0].mxu0
      %2490 = vmatprep.mubr.f32.mxu0 0.0
      %2491 = vmatmul.mubr.f32.gmra.mrb[0].mxu0 %v2391
      %v2492 = vpop.f32.mrb[0].mxu0
      %v2493 = vadd.f32 0.0, %v2492
      %v2494 = vpop.f32.mrb[0].mxu0
      %2495 = vmatprep.mubr.f32.mxu0 0.0
      %2496 = vmatmul.mubr.f32.gmra.mrb[0].mxu0 %v2394
      %v2497 = vpop.f32.mrb[0].mxu0
      %v2498 = vadd.f32 0.0, %v2497
      %v2499 = vpop.f32.mrb[0].mxu0
      %2500 = vdwg.mxu0
      %v2501 = vadd.f32 %v2354, %v2463
      %v2502 = vadd.f32 %v2355, %v2468
      %v2503 = vadd.f32 %v2356, %v2473
      %v2504 = vadd.f32 %v2357, %v2478
      %v2505 = vadd.f32 %v2358, %v2483
      %v2506 = vadd.f32 %v2359, %v2488
      %v2507 = vadd.f32 %v2360, %v2493
      %v2508 = vadd.f32 %v2361, %v2498
      %v2509 = vld [vmem:[%s1782 + $0x2] sm:$0xff]
      %v2510 = vld [vmem:[%s1782 + $0x12] sm:$0xff]
      %v2511 = vld [vmem:[%s1782 + $0x22] sm:$0xff]
      %v2512 = vld [vmem:[%s1782 + $0x32] sm:$0xff]
      %v2513 = vld [vmem:[%s1782 + $0x42] sm:$0xff]
      %v2514 = vld [vmem:[%s1782 + $0x52] sm:$0xff]
      %v2515 = vld [vmem:[%s1782 + $0x62] sm:$0xff]
      %v2516 = vld [vmem:[%s1782 + $0x72] sm:$0xff]
      %s2517 = scalar_lea.vmem %s2, 40
      %v2518 = vld [vmem:[%s2517] sm:$0xff]
      %v2520 = vsel %vm1651, %v2509, 0
      %v2523 = vsel %vm1651, %v2510, 0
      %v2526 = vsel %vm1651, %v2511, 0
      %v2529 = vsel %vm1651, %v2512, 0
      %v2532 = vsel %vm1651, %v2513, 0
      %v2535 = vsel %vm1651, %v2514, 0
      %v2538 = vsel %vm1651, %v2515, 0
      %v2541 = vsel %vm1651, %v2516, 0
      %2543 = vmatprep.subr.mxu0 0.0
      %2544 = vmatpush1.msra.mxu0 %v2518
      %2545 = vmatprep.subr.mxu0 0.0
      %2546 = vmatpush1.msra.mxu0 0.0
      %2547 = vmatprep.subr.mxu0 0.0
      %2548 = vmatpush1.msra.mxu0 0.0
      %2549 = vmatprep.subr.mxu0 0.0
      %2550 = vmatpush1.msra.mxu0 0.0
      %2551 = vmatprep.subr.mxu0 0.0
      %2552 = vmatpush1.msra.mxu0 0.0
      %2553 = vmatprep.subr.mxu0 0.0
      %2554 = vmatpush1.msra.mxu0 0.0
      %2555 = vmatprep.subr.mxu0 0.0
      %2556 = vmatpush1.msra.mxu0 0.0
      %2557 = vmatprep.subr.mxu0 0.0
      %2558 = vmatpush1.msra.mxu0 0.0
      %2559 = vmatprep.subr.mxu0 0.0
      %2560 = vmatpush1.msra.mxu0 0.0
      %2561 = vmatprep.subr.mxu0 0.0
      %2562 = vmatpush1.msra.mxu0 0.0
      %2563 = vmatprep.subr.mxu0 0.0
      %2564 = vmatpush1.msra.mxu0 0.0
      %2565 = vmatprep.subr.mxu0 0.0
      %2566 = vmatpush1.msra.mxu0 0.0
      %2567 = vmatprep.subr.mxu0 0.0
      %2568 = vmatpush1.msra.mxu0 0.0
      %2569 = vmatprep.subr.mxu0 0.0
      %2570 = vmatpush1.msra.mxu0 0.0
      %2571 = vmatprep.subr.mxu0 0.0
      %2572 = vmatpush1.msra.mxu0 0.0
      %2573 = vmatprep.subr.mxu0 0.0
      %2574 = vmatpush1.msra.mxu0 0.0
      %2575 = vmatprep.subr.mxu0 0.0
      %2576 = vmatpush1.msra.mxu0 0.0
      %2577 = vmatprep.subr.mxu0 0.0
      %2578 = vmatpush1.msra.mxu0 0.0
      %2579 = vmatprep.subr.mxu0 0.0
      %2580 = vmatpush1.msra.mxu0 0.0
      %2581 = vmatprep.subr.mxu0 0.0
      %2582 = vmatpush1.msra.mxu0 0.0
      %2583 = vmatprep.subr.mxu0 0.0
      %2584 = vmatpush1.msra.mxu0 0.0
      %2585 = vmatprep.subr.mxu0 0.0
      %2586 = vmatpush1.msra.mxu0 0.0
      %2587 = vmatprep.subr.mxu0 0.0
      %2588 = vmatpush1.msra.mxu0 0.0
      %2589 = vmatprep.subr.mxu0 0.0
      %2590 = vmatpush1.msra.mxu0 0.0
      %2591 = vmatprep.subr.mxu0 0.0
      %2592 = vmatpush1.msra.mxu0 0.0
      %2593 = vmatprep.subr.mxu0 0.0
      %2594 = vmatpush1.msra.mxu0 0.0
      %2595 = vmatprep.subr.mxu0 0.0
      %2596 = vmatpush1.msra.mxu0 0.0
      %2597 = vmatprep.subr.mxu0 0.0
      %2598 = vmatpush1.msra.mxu0 0.0
      %2599 = vmatprep.subr.mxu0 0.0
      %2600 = vmatpush1.msra.mxu0 0.0
      %2601 = vmatprep.subr.mxu0 0.0
      %2602 = vmatpush1.msra.mxu0 0.0
      %2603 = vmatprep.subr.mxu0 0.0
      %2604 = vmatpush1.msra.mxu0 0.0
      %2605 = vmatprep.subr.mxu0 0.0
      %2606 = vmatpush1.msra.mxu0 0.0
      %2607 = vmatprep.mubr.f32.mxu0 0.0
      %2608 = vmatmul.mubr.f32.gmra.mrb[0].mxu0 %v2520
      %v2609 = vpop.f32.mrb[0].mxu0
      %v2610 = vadd.f32 0.0, %v2609
      %v2611 = vpop.f32.mrb[0].mxu0
      %2612 = vmatprep.mubr.f32.mxu0 0.0
      %2613 = vmatmul.mubr.f32.gmra.mrb[0].mxu0 %v2523
      %v2614 = vpop.f32.mrb[0].mxu0
      %v2615 = vadd.f32 0.0, %v2614
      %v2616 = vpop.f32.mrb[0].mxu0
      %2617 = vmatprep.mubr.f32.mxu0 0.0
      %2618 = vmatmul.mubr.f32.gmra.mrb[0].mxu0 %v2526
      %v2619 = vpop.f32.mrb[0].mxu0
      %v2620 = vadd.f32 0.0, %v2619
      %v2621 = vpop.f32.mrb[0].mxu0
      %2622 = vmatprep.mubr.f32.mxu0 0.0
      %2623 = vmatmul.mubr.f32.gmra.mrb[0].mxu0 %v2529
      %v2624 = vpop.f32.mrb[0].mxu0
      %v2625 = vadd.f32 0.0, %v2624
      %v2626 = vpop.f32.mrb[0].mxu0
      %2627 = vmatprep.mubr.f32.mxu0 0.0
      %2628 = vmatmul.mubr.f32.gmra.mrb[0].mxu0 %v2532
      %v2629 = vpop.f32.mrb[0].mxu0
      %v2630 = vadd.f32 0.0, %v2629
      %v2631 = vpop.f32.mrb[0].mxu0
      %2632 = vmatprep.mubr.f32.mxu0 0.0
      %2633 = vmatmul.mubr.f32.gmra.mrb[0].mxu0 %v2535
      %v2634 = vpop.f32.mrb[0].mxu0
      %v2635 = vadd.f32 0.0, %v2634
      %v2636 = vpop.f32.mrb[0].mxu0
      %2637 = vmatprep.mubr.f32.mxu0 0.0
      %2638 = vmatmul.mubr.f32.gmra.mrb[0].mxu0 %v2538
      %v2639 = vpop.f32.mrb[0].mxu0
      %v2640 = vadd.f32 0.0, %v2639
      %v2641 = vpop.f32.mrb[0].mxu0
      %2642 = vmatprep.mubr.f32.mxu0 0.0
      %2643 = vmatmul.mubr.f32.gmra.mrb[0].mxu0 %v2541
      %v2644 = vpop.f32.mrb[0].mxu0
      %v2645 = vadd.f32 0.0, %v2644
      %v2646 = vpop.f32.mrb[0].mxu0
      %2647 = vdwg.mxu0
      %v2648 = vadd.f32 %v2501, %v2610
      %v2649 = vadd.f32 %v2502, %v2615
      %v2650 = vadd.f32 %v2503, %v2620
      %v2651 = vadd.f32 %v2504, %v2625
      %v2652 = vadd.f32 %v2505, %v2630
      %v2653 = vadd.f32 %v2506, %v2635
      %v2654 = vadd.f32 %v2507, %v2640
      %v2655 = vadd.f32 %v2508, %v2645
      %s2656 = scalar_lea.vmem [#allocation3], 32
      %v2657 = vld [vmem:[%s2656] sm:$0xff]
      %v2658 = vld [vmem:[%s2656 + $0x10] sm:$0xff]
      %v2659 = vld [vmem:[%s2656 + $0x20] sm:$0xff]
      %v2660 = vld [vmem:[%s2656 + $0x30] sm:$0xff]
      %v2661 = vld [vmem:[%s2656 + $0x40] sm:$0xff]
      %v2662 = vld [vmem:[%s2656 + $0x50] sm:$0xff]
      %v2663 = vld [vmem:[%s2656 + $0x60] sm:$0xff]
      %v2664 = vld [vmem:[%s2656 + $0x70] sm:$0xff]
      %s2665 = scalar_lea.vmem %s2, 48
      %v2666 = vld [vmem:[%s2665] sm:$0xff]
      %v2668 = vsel %vm1651, %v2657, 0
      %v2671 = vsel %vm1651, %v2658, 0
      %v2674 = vsel %vm1651, %v2659, 0
      %v2677 = vsel %vm1651, %v2660, 0
      %v2680 = vsel %vm1651, %v2661, 0
      %v2683 = vsel %vm1651, %v2662, 0
      %v2686 = vsel %vm1651, %v2663, 0
      %v2689 = vsel %vm1651, %v2664, 0
      %2691 = vmatprep.subr.mxu0 0.0
      %2692 = vmatpush1.msra.mxu0 %v2666
      %2693 = vmatprep.subr.mxu0 0.0
      %2694 = vmatpush1.msra.mxu0 0.0
      %2695 = vmatprep.subr.mxu0 0.0
      %2696 = vmatpush1.msra.mxu0 0.0
      %2697 = vmatprep.subr.mxu0 0.0
      %2698 = vmatpush1.msra.mxu0 0.0
      %2699 = vmatprep.subr.mxu0 0.0
      %2700 = vmatpush1.msra.mxu0 0.0
      %2701 = vmatprep.subr.mxu0 0.0
      %2702 = vmatpush1.msra.mxu0 0.0
      %2703 = vmatprep.subr.mxu0 0.0
      %2704 = vmatpush1.msra.mxu0 0.0
      %2705 = vmatprep.subr.mxu0 0.0
      %2706 = vmatpush1.msra.mxu0 0.0
      %2707 = vmatprep.subr.mxu0 0.0
      %2708 = vmatpush1.msra.mxu0 0.0
      %2709 = vmatprep.subr.mxu0 0.0
      %2710 = vmatpush1.msra.mxu0 0.0
      %2711 = vmatprep.subr.mxu0 0.0
      %2712 = vmatpush1.msra.mxu0 0.0
      %2713 = vmatprep.subr.mxu0 0.0
      %2714 = vmatpush1.msra.mxu0 0.0
      %2715 = vmatprep.subr.mxu0 0.0
      %2716 = vmatpush1.msra.mxu0 0.0
      %2717 = vmatprep.subr.mxu0 0.0
      %2718 = vmatpush1.msra.mxu0 0.0
      %2719 = vmatprep.subr.mxu0 0.0
      %2720 = vmatpush1.msra.mxu0 0.0
      %2721 = vmatprep.subr.mxu0 0.0
      %2722 = vmatpush1.msra.mxu0 0.0
      %2723 = vmatprep.subr.mxu0 0.0
      %2724 = vmatpush1.msra.mxu0 0.0
      %2725 = vmatprep.subr.mxu0 0.0
      %2726 = vmatpush1.msra.mxu0 0.0
      %2727 = vmatprep.subr.mxu0 0.0
      %2728 = vmatpush1.msra.mxu0 0.0
      %2729 = vmatprep.subr.mxu0 0.0
      %2730 = vmatpush1.msra.mxu0 0.0
      %2731 = vmatprep.subr.mxu0 0.0
      %2732 = vmatpush1.msra.mxu0 0.0
      %2733 = vmatprep.subr.mxu0 0.0
      %2734 = vmatpush1.msra.mxu0 0.0
      %2735 = vmatprep.subr.mxu0 0.0
      %2736 = vmatpush1.msra.mxu0 0.0
      %2737 = vmatprep.subr.mxu0 0.0
      %2738 = vmatpush1.msra.mxu0 0.0
      %2739 = vmatprep.subr.mxu0 0.0
      %2740 = vmatpush1.msra.mxu0 0.0
      %2741 = vmatprep.subr.mxu0 0.0
      %2742 = vmatpush1.msra.mxu0 0.0
      %2743 = vmatprep.subr.mxu0 0.0
      %2744 = vmatpush1.msra.mxu0 0.0
      %2745 = vmatprep.subr.mxu0 0.0
      %2746 = vmatpush1.msra.mxu0 0.0
      %2747 = vmatprep.subr.mxu0 0.0
      %2748 = vmatpush1.msra.mxu0 0.0
      %2749 = vmatprep.subr.mxu0 0.0
      %2750 = vmatpush1.msra.mxu0 0.0
      %2751 = vmatprep.subr.mxu0 0.0
      %2752 = vmatpush1.msra.mxu0 0.0
      %2753 = vmatprep.subr.mxu0 0.0
      %2754 = vmatpush1.msra.mxu0 0.0
      %2755 = vmatprep.mubr.f32.mxu0 0.0
      %2756 = vmatmul.mubr.f32.gmra.mrb[0].mxu0 %v2668
      %v2757 = vpop.f32.mrb[0].mxu0
      %v2758 = vadd.f32 0.0, %v2757
      %v2759 = vpop.f32.mrb[0].mxu0
      %2760 = vmatprep.mubr.f32.mxu0 0.0
      %2761 = vmatmul.mubr.f32.gmra.mrb[0].mxu0 %v2671
      %v2762 = vpop.f32.mrb[0].mxu0
      %v2763 = vadd.f32 0.0, %v2762
      %v2764 = vpop.f32.mrb[0].mxu0
      %2765 = vmatprep.mubr.f32.mxu0 0.0
      %2766 = vmatmul.mubr.f32.gmra.mrb[0].mxu0 %v2674
      %v2767 = vpop.f32.mrb[0].mxu0
      %v2768 = vadd.f32 0.0, %v2767
      %v2769 = vpop.f32.mrb[0].mxu0
      %2770 = vmatprep.mubr.f32.mxu0 0.0
      %2771 = vmatmul.mubr.f32.gmra.mrb[0].mxu0 %v2677
      %v2772 = vpop.f32.mrb[0].mxu0
      %v2773 = vadd.f32 0.0, %v2772
      %v2774 = vpop.f32.mrb[0].mxu0
      %2775 = vmatprep.mubr.f32.mxu0 0.0
      %2776 = vmatmul.mubr.f32.gmra.mrb[0].mxu0 %v2680
      %v2777 = vpop.f32.mrb[0].mxu0
      %v2778 = vadd.f32 0.0, %v2777
      %v2779 = vpop.f32.mrb[0].mxu0
      %2780 = vmatprep.mubr.f32.mxu0 0.0
      %2781 = vmatmul.mubr.f32.gmra.mrb[0].mxu0 %v2683
      %v2782 = vpop.f32.mrb[0].mxu0
      %v2783 = vadd.f32 0.0, %v2782
      %v2784 = vpop.f32.mrb[0].mxu0
      %2785 = vmatprep.mubr.f32.mxu0 0.0
      %2786 = vmatmul.mubr.f32.gmra.mrb[0].mxu0 %v2686
      %v2787 = vpop.f32.mrb[0].mxu0
      %v2788 = vadd.f32 0.0, %v2787
      %v2789 = vpop.f32.mrb[0].mxu0
      %2790 = vmatprep.mubr.f32.mxu0 0.0
      %2791 = vmatmul.mubr.f32.gmra.mrb[0].mxu0 %v2689
      %v2792 = vpop.f32.mrb[0].mxu0
      %v2793 = vadd.f32 0.0, %v2792
      %v2794 = vpop.f32.mrb[0].mxu0
      %2795 = vdwg.mxu0
      %v2796 = vadd.f32 %v2648, %v2758
      %v2797 = vadd.f32 %v2649, %v2763
      %v2798 = vadd.f32 %v2650, %v2768
      %v2799 = vadd.f32 %v2651, %v2773
      %v2800 = vadd.f32 %v2652, %v2778
      %v2801 = vadd.f32 %v2653, %v2783
      %v2802 = vadd.f32 %v2654, %v2788
      %v2803 = vadd.f32 %v2655, %v2793
      %v2804 = vld [vmem:[%s2656 + $0x1] sm:$0xff]
      %v2805 = vld [vmem:[%s2656 + $0x11] sm:$0xff]
      %v2806 = vld [vmem:[%s2656 + $0x21] sm:$0xff]
      %v2807 = vld [vmem:[%s2656 + $0x31] sm:$0xff]
      %v2808 = vld [vmem:[%s2656 + $0x41] sm:$0xff]
      %v2809 = vld [vmem:[%s2656 + $0x51] sm:$0xff]
      %v2810 = vld [vmem:[%s2656 + $0x61] sm:$0xff]
      %v2811 = vld [vmem:[%s2656 + $0x71] sm:$0xff]
      %s2812 = scalar_lea.vmem %s2, 56
      %v2813 = vld [vmem:[%s2812] sm:$0xff]
      %v2815 = vsel %vm1651, %v2804, 0
      %v2818 = vsel %vm1651, %v2805, 0
      %v2821 = vsel %vm1651, %v2806, 0
      %v2824 = vsel %vm1651, %v2807, 0
      %v2827 = vsel %vm1651, %v2808, 0
      %v2830 = vsel %vm1651, %v2809, 0
      %v2833 = vsel %vm1651, %v2810, 0
      %v2836 = vsel %vm1651, %v2811, 0
      %2838 = vmatprep.subr.mxu0 0.0
      %2839 = vmatpush1.msra.mxu0 %v2813
      %2840 = vmatprep.subr.mxu0 0.0
      %2841 = vmatpush1.msra.mxu0 0.0
      %2842 = vmatprep.subr.mxu0 0.0
      %2843 = vmatpush1.msra.mxu0 0.0
      %2844 = vmatprep.subr.mxu0 0.0
      %2845 = vmatpush1.msra.mxu0 0.0
      %2846 = vmatprep.subr.mxu0 0.0
      %2847 = vmatpush1.msra.mxu0 0.0
      %2848 = vmatprep.subr.mxu0 0.0
      %2849 = vmatpush1.msra.mxu0 0.0
      %2850 = vmatprep.subr.mxu0 0.0
      %2851 = vmatpush1.msra.mxu0 0.0
      %2852 = vmatprep.subr.mxu0 0.0
      %2853 = vmatpush1.msra.mxu0 0.0
      %2854 = vmatprep.subr.mxu0 0.0
      %2855 = vmatpush1.msra.mxu0 0.0
      %2856 = vmatprep.subr.mxu0 0.0
      %2857 = vmatpush1.msra.mxu0 0.0
      %2858 = vmatprep.subr.mxu0 0.0
      %2859 = vmatpush1.msra.mxu0 0.0
      %2860 = vmatprep.subr.mxu0 0.0
      %2861 = vmatpush1.msra.mxu0 0.0
      %2862 = vmatprep.subr.mxu0 0.0
      %2863 = vmatpush1.msra.mxu0 0.0
      %2864 = vmatprep.subr.mxu0 0.0
      %2865 = vmatpush1.msra.mxu0 0.0
      %2866 = vmatprep.subr.mxu0 0.0
      %2867 = vmatpush1.msra.mxu0 0.0
      %2868 = vmatprep.subr.mxu0 0.0
      %2869 = vmatpush1.msra.mxu0 0.0
      %2870 = vmatprep.subr.mxu0 0.0
      %2871 = vmatpush1.msra.mxu0 0.0
      %2872 = vmatprep.subr.mxu0 0.0
      %2873 = vmatpush1.msra.mxu0 0.0
      %2874 = vmatprep.subr.mxu0 0.0
      %2875 = vmatpush1.msra.mxu0 0.0
      %2876 = vmatprep.subr.mxu0 0.0
      %2877 = vmatpush1.msra.mxu0 0.0
      %2878 = vmatprep.subr.mxu0 0.0
      %2879 = vmatpush1.msra.mxu0 0.0
      %2880 = vmatprep.subr.mxu0 0.0
      %2881 = vmatpush1.msra.mxu0 0.0
      %2882 = vmatprep.subr.mxu0 0.0
      %2883 = vmatpush1.msra.mxu0 0.0
      %2884 = vmatprep.subr.mxu0 0.0
      %2885 = vmatpush1.msra.mxu0 0.0
      %2886 = vmatprep.subr.mxu0 0.0
      %2887 = vmatpush1.msra.mxu0 0.0
      %2888 = vmatprep.subr.mxu0 0.0
      %2889 = vmatpush1.msra.mxu0 0.0
      %2890 = vmatprep.subr.mxu0 0.0
      %2891 = vmatpush1.msra.mxu0 0.0
      %2892 = vmatprep.subr.mxu0 0.0
      %2893 = vmatpush1.msra.mxu0 0.0
      %2894 = vmatprep.subr.mxu0 0.0
      %2895 = vmatpush1.msra.mxu0 0.0
      %2896 = vmatprep.subr.mxu0 0.0
      %2897 = vmatpush1.msra.mxu0 0.0
      %2898 = vmatprep.subr.mxu0 0.0
      %2899 = vmatpush1.msra.mxu0 0.0
      %2900 = vmatprep.subr.mxu0 0.0
      %2901 = vmatpush1.msra.mxu0 0.0
      %2902 = vmatprep.mubr.f32.mxu0 0.0
      %2903 = vmatmul.mubr.f32.gmra.mrb[0].mxu0 %v2815
      %v2904 = vpop.f32.mrb[0].mxu0
      %v2905 = vadd.f32 0.0, %v2904
      %v2906 = vpop.f32.mrb[0].mxu0
      %2907 = vmatprep.mubr.f32.mxu0 0.0
      %2908 = vmatmul.mubr.f32.gmra.mrb[0].mxu0 %v2818
      %v2909 = vpop.f32.mrb[0].mxu0
      %v2910 = vadd.f32 0.0, %v2909
      %v2911 = vpop.f32.mrb[0].mxu0
      %2912 = vmatprep.mubr.f32.mxu0 0.0
      %2913 = vmatmul.mubr.f32.gmra.mrb[0].mxu0 %v2821
      %v2914 = vpop.f32.mrb[0].mxu0
      %v2915 = vadd.f32 0.0, %v2914
      %v2916 = vpop.f32.mrb[0].mxu0
      %2917 = vmatprep.mubr.f32.mxu0 0.0
      %2918 = vmatmul.mubr.f32.gmra.mrb[0].mxu0 %v2824
      %v2919 = vpop.f32.mrb[0].mxu0
      %v2920 = vadd.f32 0.0, %v2919
      %v2921 = vpop.f32.mrb[0].mxu0
      %2922 = vmatprep.mubr.f32.mxu0 0.0
      %2923 = vmatmul.mubr.f32.gmra.mrb[0].mxu0 %v2827
      %v2924 = vpop.f32.mrb[0].mxu0
      %v2925 = vadd.f32 0.0, %v2924
      %v2926 = vpop.f32.mrb[0].mxu0
      %2927 = vmatprep.mubr.f32.mxu0 0.0
      %2928 = vmatmul.mubr.f32.gmra.mrb[0].mxu0 %v2830
      %v2929 = vpop.f32.mrb[0].mxu0
      %v2930 = vadd.f32 0.0, %v2929
      %v2931 = vpop.f32.mrb[0].mxu0
      %2932 = vmatprep.mubr.f32.mxu0 0.0
      %2933 = vmatmul.mubr.f32.gmra.mrb[0].mxu0 %v2833
      %v2934 = vpop.f32.mrb[0].mxu0
      %v2935 = vadd.f32 0.0, %v2934
      %v2936 = vpop.f32.mrb[0].mxu0
      %2937 = vmatprep.mubr.f32.mxu0 0.0
      %2938 = vmatmul.mubr.f32.gmra.mrb[0].mxu0 %v2836
      %v2939 = vpop.f32.mrb[0].mxu0
      %v2940 = vadd.f32 0.0, %v2939
      %v2941 = vpop.f32.mrb[0].mxu0
      %2942 = vdwg.mxu0
      %v2943 = vadd.f32 %v2796, %v2905
      %v2944 = vadd.f32 %v2797, %v2910
      %v2945 = vadd.f32 %v2798, %v2915
      %v2946 = vadd.f32 %v2799, %v2920
      %v2947 = vadd.f32 %v2800, %v2925
      %v2948 = vadd.f32 %v2801, %v2930
      %v2949 = vadd.f32 %v2802, %v2935
      %v2950 = vadd.f32 %v2803, %v2940
      %v2951 = vld [vmem:[%s2656 + $0x2] sm:$0xff]
      %v2952 = vld [vmem:[%s2656 + $0x12] sm:$0xff]
      %v2953 = vld [vmem:[%s2656 + $0x22] sm:$0xff]
      %v2954 = vld [vmem:[%s2656 + $0x32] sm:$0xff]
      %v2955 = vld [vmem:[%s2656 + $0x42] sm:$0xff]
      %v2956 = vld [vmem:[%s2656 + $0x52] sm:$0xff]
      %v2957 = vld [vmem:[%s2656 + $0x62] sm:$0xff]
      %v2958 = vld [vmem:[%s2656 + $0x72] sm:$0xff]
      %s2959 = scalar_lea.vmem %s2, 64
      %v2960 = vld [vmem:[%s2959] sm:$0xff]
      %v2962 = vsel %vm1651, %v2951, 0
      %v2965 = vsel %vm1651, %v2952, 0
      %v2968 = vsel %vm1651, %v2953, 0
      %v2971 = vsel %vm1651, %v2954, 0
      %v2974 = vsel %vm1651, %v2955, 0
      %v2977 = vsel %vm1651, %v2956, 0
      %v2980 = vsel %vm1651, %v2957, 0
      %v2983 = vsel %vm1651, %v2958, 0
      %2985 = vmatprep.subr.mxu0 0.0
      %2986 = vmatpush1.msra.mxu0 %v2960
      %2987 = vmatprep.subr.mxu0 0.0
      %2988 = vmatpush1.msra.mxu0 0.0
      %2989 = vmatprep.subr.mxu0 0.0
      %2990 = vmatpush1.msra.mxu0 0.0
      %2991 = vmatprep.subr.mxu0 0.0
      %2992 = vmatpush1.msra.mxu0 0.0
      %2993 = vmatprep.subr.mxu0 0.0
      %2994 = vmatpush1.msra.mxu0 0.0
      %2995 = vmatprep.subr.mxu0 0.0
      %2996 = vmatpush1.msra.mxu0 0.0
      %2997 = vmatprep.subr.mxu0 0.0
      %2998 = vmatpush1.msra.mxu0 0.0
      %2999 = vmatprep.subr.mxu0 0.0
      %3000 = vmatpush1.msra.mxu0 0.0
      %3001 = vmatprep.subr.mxu0 0.0
      %3002 = vmatpush1.msra.mxu0 0.0
      %3003 = vmatprep.subr.mxu0 0.0
      %3004 = vmatpush1.msra.mxu0 0.0
      %3005 = vmatprep.subr.mxu0 0.0
      %3006 = vmatpush1.msra.mxu0 0.0
      %3007 = vmatprep.subr.mxu0 0.0
      %3008 = vmatpush1.msra.mxu0 0.0
      %3009 = vmatprep.subr.mxu0 0.0
      %3010 = vmatpush1.msra.mxu0 0.0
      %3011 = vmatprep.subr.mxu0 0.0
      %3012 = vmatpush1.msra.mxu0 0.0
      %3013 = vmatprep.subr.mxu0 0.0
      %3014 = vmatpush1.msra.mxu0 0.0
      %3015 = vmatprep.subr.mxu0 0.0
      %3016 = vmatpush1.msra.mxu0 0.0
      %3017 = vmatprep.subr.mxu0 0.0
      %3018 = vmatpush1.msra.mxu0 0.0
      %3019 = vmatprep.subr.mxu0 0.0
      %3020 = vmatpush1.msra.mxu0 0.0
      %3021 = vmatprep.subr.mxu0 0.0
      %3022 = vmatpush1.msra.mxu0 0.0
      %3023 = vmatprep.subr.mxu0 0.0
      %3024 = vmatpush1.msra.mxu0 0.0
      %3025 = vmatprep.subr.mxu0 0.0
      %3026 = vmatpush1.msra.mxu0 0.0
      %3027 = vmatprep.subr.mxu0 0.0
      %3028 = vmatpush1.msra.mxu0 0.0
      %3029 = vmatprep.subr.mxu0 0.0
      %3030 = vmatpush1.msra.mxu0 0.0
      %3031 = vmatprep.subr.mxu0 0.0
      %3032 = vmatpush1.msra.mxu0 0.0
      %3033 = vmatprep.subr.mxu0 0.0
      %3034 = vmatpush1.msra.mxu0 0.0
      %3035 = vmatprep.subr.mxu0 0.0
      %3036 = vmatpush1.msra.mxu0 0.0
      %3037 = vmatprep.subr.mxu0 0.0
      %3038 = vmatpush1.msra.mxu0 0.0
      %3039 = vmatprep.subr.mxu0 0.0
      %3040 = vmatpush1.msra.mxu0 0.0
      %3041 = vmatprep.subr.mxu0 0.0
      %3042 = vmatpush1.msra.mxu0 0.0
      %3043 = vmatprep.subr.mxu0 0.0
      %3044 = vmatpush1.msra.mxu0 0.0
      %3045 = vmatprep.subr.mxu0 0.0
      %3046 = vmatpush1.msra.mxu0 0.0
      %3047 = vmatprep.subr.mxu0 0.0
      %3048 = vmatpush1.msra.mxu0 0.0
      %3049 = vmatprep.mubr.f32.mxu0 0.0
      %3050 = vmatmul.mubr.f32.gmra.mrb[0].mxu0 %v2962
      %v3051 = vpop.f32.mrb[0].mxu0
      %v3052 = vadd.f32 0.0, %v3051
      %v3053 = vpop.f32.mrb[0].mxu0
      %3054 = vmatprep.mubr.f32.mxu0 0.0
      %3055 = vmatmul.mubr.f32.gmra.mrb[0].mxu0 %v2965
      %v3056 = vpop.f32.mrb[0].mxu0
      %v3057 = vadd.f32 0.0, %v3056
      %v3058 = vpop.f32.mrb[0].mxu0
      %3059 = vmatprep.mubr.f32.mxu0 0.0
      %3060 = vmatmul.mubr.f32.gmra.mrb[0].mxu0 %v2968
      %v3061 = vpop.f32.mrb[0].mxu0
      %v3062 = vadd.f32 0.0, %v3061
      %v3063 = vpop.f32.mrb[0].mxu0
      %3064 = vmatprep.mubr.f32.mxu0 0.0
      %3065 = vmatmul.mubr.f32.gmra.mrb[0].mxu0 %v2971
      %v3066 = vpop.f32.mrb[0].mxu0
      %v3067 = vadd.f32 0.0, %v3066
      %v3068 = vpop.f32.mrb[0].mxu0
      %3069 = vmatprep.mubr.f32.mxu0 0.0
      %3070 = vmatmul.mubr.f32.gmra.mrb[0].mxu0 %v2974
      %v3071 = vpop.f32.mrb[0].mxu0
      %v3072 = vadd.f32 0.0, %v3071
      %v3073 = vpop.f32.mrb[0].mxu0
      %3074 = vmatprep.mubr.f32.mxu0 0.0
      %3075 = vmatmul.mubr.f32.gmra.mrb[0].mxu0 %v2977
      %v3076 = vpop.f32.mrb[0].mxu0
      %v3077 = vadd.f32 0.0, %v3076
      %v3078 = vpop.f32.mrb[0].mxu0
      %3079 = vmatprep.mubr.f32.mxu0 0.0
      %3080 = vmatmul.mubr.f32.gmra.mrb[0].mxu0 %v2980
      %v3081 = vpop.f32.mrb[0].mxu0
      %v3082 = vadd.f32 0.0, %v3081
      %v3083 = vpop.f32.mrb[0].mxu0
      %3084 = vmatprep.mubr.f32.mxu0 0.0
      %3085 = vmatmul.mubr.f32.gmra.mrb[0].mxu0 %v2983
      %v3086 = vpop.f32.mrb[0].mxu0
      %v3087 = vadd.f32 0.0, %v3086
      %v3088 = vpop.f32.mrb[0].mxu0
      %3089 = vdwg.mxu0
      %v3090 = vadd.f32 %v2943, %v3052
      %v3091 = vadd.f32 %v2944, %v3057
      %v3092 = vadd.f32 %v2945, %v3062
      %v3093 = vadd.f32 %v2946, %v3067
      %v3094 = vadd.f32 %v2947, %v3072
      %v3095 = vadd.f32 %v2948, %v3077
      %v3096 = vadd.f32 %v2949, %v3082
      %v3097 = vadd.f32 %v2950, %v3087
      %v3098 = vsel %vm1651, %v3090, 0.0
      %v3099 = vsel %vm1651, %v3091, 0.0
      %v3100 = vadd.f32 %v3098, %v3099
      %v3101 = vsel %vm1651, %v3092, 0.0
      %v3102 = vadd.f32 %v3100, %v3101
      %v3103 = vsel %vm1651, %v3093, 0.0
      %v3104 = vadd.f32 %v3102, %v3103
      %v3105 = vsel %vm1651, %v3094, 0.0
      %v3106 = vadd.f32 %v3104, %v3105
      %v3107 = vsel %vm1651, %v3095, 0.0
      %v3108 = vadd.f32 %v3106, %v3107
      %v3109 = vsel %vm1651, %v3096, 0.0
      %v3110 = vadd.f32 %v3108, %v3109
      %v3111 = vsel %vm1651, %v3097, 0.0
      %v3112 = vadd.f32 %v3110, %v3111
      %v3113 = vrot.slane %v3112, 4
      %v3114 = vadd.f32 %v3112, %v3113
      %v3115 = vrot.slane %v3114, 2
      %v3116 = vadd.f32 %v3114, %v3115
      %v3117 = vrot.slane %v3116, 1
      %v3118 = vadd.f32 %v3116, %v3117
      %v3119 = vmul.f32 %v3118, %v1673
      %v3120 = vsub.f32 %v3090, %v3119
      %v3121 = vsub.f32 %v3091, %v3119
      %v3122 = vsub.f32 %v3092, %v3119
      %v3123 = vsub.f32 %v3093, %v3119
      %v3124 = vsub.f32 %v3094, %v3119
      %v3125 = vsub.f32 %v3095, %v3119
      %v3126 = vsub.f32 %v3096, %v3119
      %v3127 = vsub.f32 %v3097, %v3119
      %v3128 = vmul.f32 %v3120, %v3120
      %v3129 = vmul.f32 %v3121, %v3121
      %v3130 = vmul.f32 %v3122, %v3122
      %v3131 = vmul.f32 %v3123, %v3123
      %v3132 = vmul.f32 %v3124, %v3124
      %v3133 = vmul.f32 %v3125, %v3125
      %v3134 = vmul.f32 %v3126, %v3126
      %v3135 = vmul.f32 %v3127, %v3127
      %v3136 = vsel %vm1651, %v3128, 0.0
      %v3137 = vsel %vm1651, %v3129, 0.0
      %v3138 = vadd.f32 %v3136, %v3137
      %v3139 = vsel %vm1651, %v3130, 0.0
      %v3140 = vadd.f32 %v3138, %v3139
      %v3141 = vsel %vm1651, %v3131, 0.0
      %v3142 = vadd.f32 %v3140, %v3141
      %v3143 = vsel %vm1651, %v3132, 0.0
      %v3144 = vadd.f32 %v3142, %v3143
      %v3145 = vsel %vm1651, %v3133, 0.0
      %v3146 = vadd.f32 %v3144, %v3145
      %v3147 = vsel %vm1651, %v3134, 0.0
      %v3148 = vadd.f32 %v3146, %v3147
      %v3149 = vsel %vm1651, %v3135, 0.0
      %v3150 = vadd.f32 %v3148, %v3149
      %v3151 = vrot.slane %v3150, 4
      %v3152 = vadd.f32 %v3150, %v3151
      %v3153 = vrot.slane %v3152, 2
      %v3154 = vadd.f32 %v3152, %v3153
      %v3155 = vrot.slane %v3154, 1
      %v3156 = vadd.f32 %v3154, %v3155
      %v3157 = vmul.f32 %v3156, %v1673
      %v3158 = vadd.f32 %v3157, 1e-05
      %v3159 = vrsqrt.pop %v3158
      %v3160 = vmul.f32 %v3120, %v3159
      %v3161 = vmul.f32 %v3121, %v3159
      %v3162 = vmul.f32 %v3122, %v3159
      %v3163 = vmul.f32 %v3123, %v3159
      %v3164 = vmul.f32 %v3124, %v3159
      %v3165 = vmul.f32 %v3125, %v3159
      %v3166 = vmul.f32 %v3126, %v3159
      %v3167 = vmul.f32 %v3127, %v3159
      %v3168 = vld [vmem:[%s5] sm:$0x1]
      %v3170 = vlaneseq
      %v3171 = vshrl.u32 %v3170, 7
      %v3172 = vsub.s32 0, %v3171
      %v3173 = vrot.slane %v3168, %v3172
      %v3175 = vmul.f32 %v3160, %v3173
      %v3176 = vmul.f32 %v3161, %v3173
      %v3177 = vmul.f32 %v3162, %v3173
      %v3178 = vmul.f32 %v3163, %v3173
      %v3179 = vmul.f32 %v3164, %v3173
      %v3180 = vmul.f32 %v3165, %v3173
      %v3181 = vmul.f32 %v3166, %v3173
      %v3182 = vmul.f32 %v3167, %v3173
      %v3183 = vld [vmem:[%s6] sm:$0x1]
      %v3185 = vlaneseq
      %v3186 = vshrl.u32 %v3185, 7
      %v3187 = vsub.s32 0, %v3186
      %v3188 = vrot.slane %v3183, %v3187
      %v3190 = vadd.f32 %v3175, %v3188
      %v3191 = vadd.f32 %v3176, %v3188
      %v3192 = vadd.f32 %v3177, %v3188
      %v3193 = vadd.f32 %v3178, %v3188
      %v3194 = vadd.f32 %v3179, %v3188
      %v3195 = vadd.f32 %v3180, %v3188
      %v3196 = vadd.f32 %v3181, %v3188
      %v3197 = vadd.f32 %v3182, %v3188
      %v3198 = vmax.f32 %v3190, 0.0
      %v3199 = vmax.f32 %v3191, 0.0
      %v3200 = vmax.f32 %v3192, 0.0
      %v3201 = vmax.f32 %v3193, 0.0
      %v3202 = vmax.f32 %v3194, 0.0
      %v3203 = vmax.f32 %v3195, 0.0
      %v3204 = vmax.f32 %v3196, 0.0
      %v3205 = vmax.f32 %v3197, 0.0
      %3206 = vxpose.xlu0.b32.start [1/16] %v3198, 128
      %3207 = vxpose.xlu0.b32.cont [2/16] %v3199, 128
      %3208 = vxpose.xlu0.b32.cont [3/16] %v3200, 128
      %3209 = vxpose.xlu0.b32.cont [4/16] %v3201, 128
      %3210 = vxpose.xlu0.b32.cont [5/16] %v3202, 128
      %3211 = vxpose.xlu0.b32.cont [6/16] %v3203, 128
      %3212 = vxpose.xlu0.b32.cont [7/16] %v3204, 128
      %3213 = vxpose.xlu0.b32.cont [8/16] %v3205, 128
      %3214 = vxpose.xlu0.b32.cont [9/16] 0.0, 128
      %3215 = vxpose.xlu0.b32.cont [10/16] 0.0, 128
      %3216 = vxpose.xlu0.b32.cont [11/16] 0.0, 128
      %3217 = vxpose.xlu0.b32.cont [12/16] 0.0, 128
      %3218 = vxpose.xlu0.b32.cont [13/16] 0.0, 128
      %3219 = vxpose.xlu0.b32.cont [14/16] 0.0, 128
      %3220 = vxpose.xlu0.b32.cont [15/16] 0.0, 128
      %3221 = vxpose.xlu0.b32.end [16/16] 0.0, 128
      %v3222 = vpop.trf.xlu0
      %v3223 = vpop.trf.xlu0
      %v3224 = vpop.trf.xlu0
      %v3225 = vpop.trf.xlu0
      %v3226 = vpop.trf.xlu0
      %v3227 = vpop.trf.xlu0
      %v3228 = vpop.trf.xlu0
      %v3229 = vpop.trf.xlu0
      %v3230 = vpop.trf.xlu0
      %v3231 = vpop.trf.xlu0
      %v3232 = vpop.trf.xlu0
      %v3233 = vpop.trf.xlu0
      %v3234 = vpop.trf.xlu0
      %v3235 = vpop.trf.xlu0
      %v3236 = vpop.trf.xlu0
      %v3237 = vpop.trf.xlu0
      %vm3238 = vcmask 523264
      %3239 = vst.msk [vmem:[%s276] sm:$0xff] %vm3238, %v3222
      %p3240 = scmp.lt.s32.totalorder %s18, 1
      %s3241 = scalar_select %p3240, %s18, 1
      %s3242 = smul.addr %s3241, 8
      %s3243 = scalar_lea.vmem %s7, %s3242
      // Predicated region
      $region49: #{down_in_forward.1} parent=47 // pred_check
        %p3244 = pneg %p188
      $region50: #{down_in_forward.1} parent=47 // pred_check_branch
        %3246 = sbr.rel (%p3244) target = $region52
      $region51: #{down_in_forward.1} parent=47 // pred_region
        _
      $region52: #{down_in_forward.1} parent=47 // pred_fallthru
        _
    $region48: #{down_in_forward.1} parent=5 // pred_fallthru
      _
    %p3247 = scmp.le.s32.totalorder 2, %s13
    // Predicated region
    $region53: #{down_in_forward.1} parent=5 // pred_check
      %p3248 = pneg %p3247
    $region54: #{down_in_forward.1} parent=5 // pred_check_branch
      %3250 = sbr.rel (%p3248) target = $region56
    $region55: #{down_in_forward.1} parent=5 // pred_region
      %s3251 = ssub.s32 %s13, 2
      // Predicated region
      $region57: #{down_in_forward.1} parent=55 // pred_check
        %p3252 = pneg %p194
      $region58: #{down_in_forward.1} parent=55 // pred_check_branch
        %3254 = sbr.rel (%p3252) target = $region60
      $region59: #{down_in_forward.1} parent=55 // pred_region
        %p3255 = scmp.lt.s32.totalorder %s19, 1
        %s3256 = scalar_select %p3255, %s19, 1
        %s3257 = smul.addr %s3256, 8
        %s3258 = scalar_lea.vmem %s7, %s3257
      $region60: #{down_in_forward.1} parent=55 // pred_fallthru
        _
    $region56: #{down_in_forward.1} parent=5 // pred_fallthru
      _
  $region6: #{down_in_forward.1} parent=0 // loop_footer
    %s17 = sadd.s32 1, %s13
  $region7: #{down_in_forward.1} parent=0 // loop_footer_branch
    %12 = sbr.rel target = $region3
  $region8: #{down_in_forward.1} parent=0 // loop_exit
    _

</llo_original>
